<compile_context>
chip_gen: v7x
topology: tpu7x:2x2x1
jax: 0.10.0
libtpu: 0.0.40
codegen_flags: <defaults>
</compile_context>

<pallas_src>
import math
from functools import partial

import numpy as np
import jax
import jax.numpy as jnp
from jax.experimental import pallas as pl
from jax.experimental.pallas import tpu as pltpu


# ----------------------------------------------------------------------------
# In-kernel helpers (traced inside the Pallas kernel)
# ----------------------------------------------------------------------------
def _ln_lrelu(a, g, b, eps, neg_slope):
    """Per-sample LayerNorm + LeakyReLU.

    a : (OH, Bt, OW*C) f32 conv output (spatial row leading, batch on sublanes).
    g, b : (OH, 1, OW*C) f32 affine (CHW -> HWC permuted at init).
    Statistics reduce over (OH, OW*C) per sample == nn.LayerNorm([C, OH, OW])
    (permutation invariant).  Centered two-pass variance in f32.
    """
    count = a.shape[0] * a.shape[2]
    s = jnp.sum(jnp.sum(a, axis=2, keepdims=True), axis=0, keepdims=True)
    mean = s * (1.0 / count)                                   # (1, Bt, 1)
    xc = a - mean
    v = jnp.sum(jnp.sum(xc * xc, axis=2, keepdims=True), axis=0, keepdims=True)
    var = v * (1.0 / count)
    y = xc * jax.lax.rsqrt(var + eps) * g + b
    return jnp.where(y >= 0.0, y, neg_slope * y)


def _row_conv(y_ref, w_ref, cbias_ref):
    """Stride-2, k=3, pad=1 conv of a VMEM-resident activation.

    y_ref : (IH, Bt, IW*Cin) bf16 scratch -- previous block activation.
    w_ref : (3, IW*Cin, OW*Cout) bf16 -- per-kernel-row width-conv matrices
            (stride/pad along W folded in at init).
    cbias_ref : (1, OW*Cout) f32.
    Returns (OH, Bt, OW*Cout) f32 pre-LayerNorm conv output, OH = IH // 2.
    """
    ih = y_ref.shape[0]
    oh = ih // 2
    bias = cbias_ref[...]
    rows = []
    for o in range(oh):
        acc = None
        for ki in range(3):
            r = 2 * o + ki - 1                      # unpadded input row
            if 0 <= r < ih:                         # row -1 == zero padding
                p = jnp.dot(y_ref[r], w_ref[ki],
                            preferred_element_type=jnp.float32)
                acc = p if acc is None else acc + p
        rows.append(acc + bias)
    return jnp.stack(rows, axis=0)


# ----------------------------------------------------------------------------
# The fused encoder kernel (one grid step == one batch tile)
# ----------------------------------------------------------------------------
def _encoder_kernel(x_ref, w0_ref, g0_ref, b0_ref,
                    w1_ref, c1_ref, g1_ref, b1_ref,
                    w2_ref, c2_ref, g2_ref, b2_ref,
                    wh_ref, bh_ref,
                    out_ref, y0_ref, y1_ref,
                    *, a_dim, eps=1e-5, neg_slope=0.01):
    f32 = jnp.float32

    # ---- Block 0: conv(Cin->32) as one K-concat tap-group matmul per output
    #      spatial row (bias folded via ones column), then LN + LeakyReLU.
    w0 = w0_ref[...]
    rows = []
    for r in range(x_ref.shape[0]):                 # OH0 output rows
        rows.append(jnp.dot(x_ref[r], w0, preferred_element_type=f32))
    a0 = jnp.stack(rows, axis=0)                    # (OH0, Bt, OW0*32) f32
    y0_ref[...] = _ln_lrelu(a0, g0_ref[...], b0_ref[...],
                            eps, neg_slope).astype(y0_ref.dtype)

    # ---- Block 1: conv(32->64) on the VMEM-resident activation.
    a1 = _row_conv(y0_ref, w1_ref, c1_ref)
    y1_ref[...] = _ln_lrelu(a1, g1_ref[...], b1_ref[...],
                            eps, neg_slope).astype(y1_ref.dtype)

    # ---- Block 2: conv(64->128).
    a2 = _row_conv(y1_ref, w2_ref, c2_ref)
    y2 = _ln_lrelu(a2, g2_ref[...], b2_ref[...],
                   eps, neg_slope).astype(jnp.bfloat16)   # (OH2, Bt, OW2*128)

    # ---- Fused heads: [fc_mean | fc_std] matmul + softplus on the std half.
    #      Output is lane-dense (2*a_dim padded to 128 lanes, sliced outside).
    f2 = y2.shape[2]
    wh = wh_ref[...]
    acc = jnp.dot(y2[0], wh[0:f2, :], preferred_element_type=f32)
    for r in range(1, y2.shape[0]):
        acc = acc + jnp.dot(y2[r], wh[r * f2:(r + 1) * f2, :],
                            preferred_element_type=f32)
    acc = acc + bh_ref[...]
    col = jax.lax.broadcasted_iota(jnp.int32, acc.shape, 1)
    out_ref[...] = jnp.where(col < a_dim, acc, jnp.logaddexp(acc, 0.0))


# ----------------------------------------------------------------------------
# Wrapper (thin XLA glue on the tiny network input only)
# ----------------------------------------------------------------------------
def _pick_batch_tile(n, target=128):
    """Batch tile: <= target, divides n, and (multiple of 8 or == n)."""
    if n <= target:
        return n
    for bt in range(target, 0, -8):
        if n % bt == 0:
            return bt
    return n  # fallback: single (possibly large) tile


def _block0_tap_input(x_nhwc):
    """(N,H,W,Cin) bf16 -> (OH0, N, 6*(OW0+1)*Cin + 1) K-concat tap groups.

    Last column is ones so the block-0 conv bias folds into the weight."""
    n, h, w, c = x_nhwc.shape
    oh, ow = h // 2, w // 2
    xp = jnp.pad(x_nhwc, ((0, 0), (1, 1), (1, 1), (0, 0)))
    groups = []
    for ki in range(3):                 # kernel-row tap
        for cp in range(2):             # column parity (kj in {cp, cp+2})
            g = xp[:, ki:ki + 2 * oh:2, cp::2, :]       # (N, OH, OW+1, C)
            groups.append(g.reshape(n, oh, (ow + 1) * c))
    cat = jnp.concatenate(groups, axis=-1)              # (N, OH, 6*(OW+1)*C)
    cat = jnp.concatenate([cat, jnp.ones((n, oh, 1), cat.dtype)], axis=-1)
    return jnp.transpose(cat, (1, 0, 2))                # (OH, N, K0)


def _encoder_call(x_tap, kp, bt, a_dim):
    oh0, n, k0 = x_tap.shape
    w0, g0, b0 = kp["blk0"]
    w1, c1, g1, b1 = kp["blk1"]
    w2, c2, g2, b2 = kp["blk2"]
    wh, bh = kp["head"]
    n_pad = wh.shape[1]

    def full(arr):
        nd = arr.ndim
        return pl.BlockSpec(arr.shape, lambda i: (0,) * nd)

    grid = (n // bt,)   # v7x: >=2 (even) tiles lets both TensorCores work.
    return pl.pallas_call(
        partial(_encoder_kernel, a_dim=a_dim),
        out_shape=jax.ShapeDtypeStruct((n, n_pad), jnp.float32),
        grid_spec=pltpu.PrefetchScalarGridSpec(
            num_scalar_prefetch=0,
            grid=grid,
            in_specs=[pl.BlockSpec((oh0, bt, k0), lambda i: (0, i, 0)),
                      full(w0), full(g0), full(b0),
                      full(w1), full(c1), full(g1), full(b1),
                      full(w2), full(c2), full(g2), full(b2),
                      full(wh), full(bh)],
            out_specs=pl.BlockSpec((bt, n_pad), lambda i: (i, 0)),
            scratch_shapes=[
                pltpu.VMEM((g0.shape[0], bt, g0.shape[2]), jnp.bfloat16),  # y0
                pltpu.VMEM((g1.shape[0], bt, g1.shape[2]), jnp.bfloat16),  # y1
            ],
        ),
        compiler_params=pltpu.CompilerParams(
            dimension_semantics=("parallel",),
            vmem_limit_bytes=32 * 1024 * 1024,
        ),
    )(x_tap, w0, g0, b0, w1, c1, g1, b1, w2, c2, g2, b2, wh, bh)


@partial(jax.jit, static_argnames=("a_dim",))
def image_encoder_forward(kparams, x_nchw, *, a_dim):
    """Returns (mean, std) of the Normal distribution produced by ImageEncoder."""
    x = jnp.transpose(x_nchw, (0, 2, 3, 1)).astype(jnp.bfloat16)   # NCHW -> NHWC
    x_tap = _block0_tap_input(x)
    n = x.shape[0]
    bt = _pick_batch_tile(n)
    out = _encoder_call(x_tap, kparams, bt, a_dim)
    # TODO(synk): torch.distributions.Normal has no JAX-array equivalent;
    # (mean, std) fully parameterize it.
    return out[:, :a_dim], out[:, a_dim:2 * a_dim]


# ----------------------------------------------------------------------------
# Parameter init (PyTorch-faithful layouts) + one-time kernel repacking
# ----------------------------------------------------------------------------
def _kaiming_std_fan_out(fan_out):
    gain = math.sqrt(2.0 / (1.0 + 0.01 ** 2))   # leaky_relu gain
    return gain / math.sqrt(fan_out)


def init_params(key, image_size, image_channels, a_dim):
    h, w = image_size
    chans = [image_channels, 32, 64, 128]
    params = {}
    keys = jax.random.split(key, 16)
    ki = 0
    cur_h, cur_w = h, w
    for li in range(3):
        cin, cout = chans[li], chans[li + 1]
        cur_h = (cur_h + 2 - 3) // 2 + 1
        cur_w = (cur_w + 2 - 3) // 2 + 1
        std = _kaiming_std_fan_out(cout * 9)               # conv: mode='fan_out'
        params[f"conv{li}_w"] = std * jax.random.normal(
            keys[ki], (cout, cin, 3, 3), jnp.float32); ki += 1
        bound = 1.0 / math.sqrt(cin * 9)                   # default conv bias init
        params[f"conv{li}_b"] = jax.random.uniform(
            keys[ki], (cout,), jnp.float32, -bound, bound); ki += 1
        params[f"ln{li}_g"] = jnp.ones((cout, cur_h, cur_w), jnp.float32)
        params[f"ln{li}_b"] = jnp.zeros((cout, cur_h, cur_w), jnp.float32)
    flat = 128 * cur_h * cur_w
    for name in ("fc_mean", "fc_std"):
        std = _kaiming_std_fan_out(a_dim)                  # linear: mode='fan_out'
        params[f"{name}_w"] = std * jax.random.normal(
            keys[ki], (a_dim, flat), jnp.float32); ki += 1
        bound = 1.0 / math.sqrt(flat)
        params[f"{name}_b"] = jax.random.uniform(
            keys[ki], (a_dim,), jnp.float32, -bound, bound); ki += 1
    return params


def _ln_affine(params, li, oh, ow, cout):
    g = jnp.transpose(params[f"ln{li}_g"], (1, 2, 0)).reshape(oh, ow * cout)
    b = jnp.transpose(params[f"ln{li}_b"], (1, 2, 0)).reshape(oh, ow * cout)
    return (g[:, None, :].astype(jnp.float32), b[:, None, :].astype(jnp.float32))


def prepare_kernel_params(params, image_size, image_channels, a_dim):
    """One-time repack of the PyTorch-layout params into kernel operands."""
    h, w = image_size
    assert h % 8 == 0 and w % 8 == 0, "image_size must be divisible by 8"
    chans = [image_channels, 32, 64, 128]
    kp = {}
    cur_h, cur_w = h, w
    for li in range(3):
        cin, cout = chans[li], chans[li + 1]
        ih, iw = cur_h, cur_w
        oh, ow = ih // 2, iw // 2
        cur_h, cur_w = oh, ow
        wk = np.asarray(jnp.transpose(params[f"conv{li}_w"], (2, 3, 1, 0)))
        bias = np.asarray(params[f"conv{li}_b"])
        if li == 0:
            # K-concat tap-group weight (6 groups stacked along K) + bias row.
            kp_g = (ow + 1) * cin
            m = np.zeros((6 * kp_g + 1, ow * cout), np.float32)
            g = 0
            for ki in range(3):
                for cp in range(2):
                    base = g * kp_g
                    for o in range(ow):
                        for kj in range(cp, 3, 2):
                            p = o + kj // 2
                            m[base + p * cin: base + (p + 1) * cin,
                              o * cout:(o + 1) * cout] += wk[ki, kj]
                    g += 1
            m[6 * kp_g, :] = np.tile(bias, ow)
            kp["blk0"] = (jnp.asarray(m, jnp.bfloat16),) + \
                         _ln_affine(params, li, oh, ow, cout)
        else:
            # Per-kernel-row width-conv matrices (stride-2 / pad-1 along W).
            mats = np.zeros((3, iw * cin, ow * cout), np.float32)
            for ki in range(3):
                for o in range(ow):
                    for kj in range(3):
                        c = 2 * o + kj - 1
                        if 0 <= c < iw:
                            mats[ki, c * cin:(c + 1) * cin,
                                 o * cout:(o + 1) * cout] += wk[ki, kj]
            bias_row = jnp.asarray(np.tile(bias, ow), jnp.float32)[None, :]
            kp[f"blk{li}"] = (jnp.asarray(mats, jnp.bfloat16), bias_row) + \
                             _ln_affine(params, li, oh, ow, cout)

    # FC heads: (a_dim, C*H*W) CHW-flat -> (H*W*C, a_dim) HWC rows; concat
    # mean|std along columns; pad columns to 128 lanes (lane-dense output).
    c2, oh2, ow2 = chans[3], cur_h, cur_w

    def repack_fc(wt):
        w4 = wt.reshape(a_dim, c2, oh2, ow2)
        return jnp.transpose(w4, (2, 3, 1, 0)).reshape(oh2 * ow2 * c2, a_dim)

    w_cat = jnp.concatenate([repack_fc(params["fc_mean_w"]),
                             repack_fc(params["fc_std_w"])], axis=1)
    n_pad = max(128, ((2 * a_dim + 127) // 128) * 128)
    wh = jnp.pad(w_cat, ((0, 0), (0, n_pad - 2 * a_dim))).astype(jnp.bfloat16)
    bh = jnp.pad(jnp.concatenate([params["fc_mean_b"], params["fc_std_b"]]),
                 (0, n_pad - 2 * a_dim)).astype(jnp.float32)[None, :]
    kp["head"] = (wh, bh)
    return kp


# ----------------------------------------------------------------------------
# Pure-JAX f32 reference (mirrors the PyTorch module) for self-checking
# ----------------------------------------------------------------------------
def reference_forward(params, x_nchw):
    x = x_nchw
    for li in range(3):
        x = jax.lax.conv_general_dilated(
            x, params[f"conv{li}_w"], window_strides=(2, 2),
            padding=((1, 1), (1, 1)),
            dimension_numbers=("NCHW", "OIHW", "NCHW"))
        x = x + params[f"conv{li}_b"][None, :, None, None]
        mean = jnp.mean(x, axis=(1, 2, 3), keepdims=True)
        var = jnp.mean((x - mean) ** 2, axis=(1, 2, 3), keepdims=True)
        x = (x - mean) / jnp.sqrt(var + 1e-5)
        x = x * params[f"ln{li}_g"][None] + params[f"ln{li}_b"][None]
        x = jnp.where(x >= 0, x, 0.01 * x)
    flat = x.reshape(x.shape[0], -1)
    mean_out = flat @ params["fc_mean_w"].T + params["fc_mean_b"]
    std_out = jax.nn.softplus(flat @ params["fc_std_w"].T + params["fc_std_b"])
    return mean_out, std_out


if __name__ == "__main__":
    image_size = (16, 16)
    image_channels = 4
    a_dim = 8
    batch = 2

    key = jax.random.PRNGKey(0)
    k_params, k_x = jax.random.split(key)
    params = init_params(k_params, image_size, image_channels, a_dim)
    kparams = prepare_kernel_params(params, image_size, image_channels, a_dim)
    x = jax.random.normal(k_x, (batch, image_channels) + image_size, jnp.float32)

    mean, std = image_encoder_forward(kparams, x, a_dim=a_dim)
    mean = jax.block_until_ready(mean)
    std = jax.block_until_ready(std)

    assert mean.shape == (batch, a_dim) and std.shape == (batch, a_dim)
    assert bool(jnp.all(jnp.isfinite(mean))) and bool(jnp.all(std > 0.0))

    # Correctness vs. the f32 reference (bf16 operands -> ~1% drift budget 5%).
    ref_mean, ref_std = reference_forward(params, x)

    def rel_err(a, b):
        return float(jnp.max(jnp.abs(a - b)) / (jnp.max(jnp.abs(b)) + 1e-6))

    assert rel_err(mean, ref_mean) < 5e-2
    assert rel_err(std, ref_std) < 5e-2

    print("KERNEL_OK")
</pallas_src>

<mosaic_0001>
module attributes {stable_mosaic.version = 11 : i64} {
  func.func @_encoder_kernel(%arg0: i32, %arg1: memref<8x2x217xbf16, #tpu.memory_space<vmem>>, %arg2: memref<217x256xbf16, #tpu.memory_space<vmem>>, %arg3: memref<8x1x256xf32, #tpu.memory_space<vmem>>, %arg4: memref<8x1x256xf32, #tpu.memory_space<vmem>>, %arg5: memref<3x256x256xbf16, #tpu.memory_space<vmem>>, %arg6: memref<1x256xf32, #tpu.memory_space<vmem>>, %arg7: memref<4x1x256xf32, #tpu.memory_space<vmem>>, %arg8: memref<4x1x256xf32, #tpu.memory_space<vmem>>, %arg9: memref<3x256x256xbf16, #tpu.memory_space<vmem>>, %arg10: memref<1x256xf32, #tpu.memory_space<vmem>>, %arg11: memref<2x1x256xf32, #tpu.memory_space<vmem>>, %arg12: memref<2x1x256xf32, #tpu.memory_space<vmem>>, %arg13: memref<512x128xbf16, #tpu.memory_space<vmem>>, %arg14: memref<1x128xf32, #tpu.memory_space<vmem>>, %arg15: memref<2x128xf32, #tpu.memory_space<vmem>>, %arg16: memref<8x2x256xbf16, #tpu.memory_space<vmem>>, %arg17: memref<4x2x256xbf16, #tpu.memory_space<vmem>>) attributes {dimension_semantics = [#tpu.dimension_semantics<parallel>], iteration_bounds = array<i64: 1>, scalar_prefetch = 0 : i64, scratch_operands = 2 : i64, tpu.core_type = #tpu.core_type<tc>, window_params = [{transform_indices = @transform_0, window_bounds = array<i64: 8, 2, 217>}, {pipeline_mode = #tpu.pipeline_mode<synchronous>, transform_indices = @transform_1, window_bounds = array<i64: 217, 256>}, {pipeline_mode = #tpu.pipeline_mode<synchronous>, transform_indices = @transform_2, window_bounds = array<i64: 8, 1, 256>}, {pipeline_mode = #tpu.pipeline_mode<synchronous>, transform_indices = @transform_3, window_bounds = array<i64: 8, 1, 256>}, {pipeline_mode = #tpu.pipeline_mode<synchronous>, transform_indices = @transform_4, window_bounds = array<i64: 3, 256, 256>}, {pipeline_mode = #tpu.pipeline_mode<synchronous>, transform_indices = @transform_5, window_bounds = array<i64: 1, 256>}, {pipeline_mode = #tpu.pipeline_mode<synchronous>, transform_indices = @transform_6, window_bounds = array<i64: 4, 1, 256>}, {pipeline_mode = #tpu.pipeline_mode<synchronous>, transform_indices = @transform_7, window_bounds = array<i64: 4, 1, 256>}, {pipeline_mode = #tpu.pipeline_mode<synchronous>, transform_indices = @transform_8, window_bounds = array<i64: 3, 256, 256>}, {pipeline_mode = #tpu.pipeline_mode<synchronous>, transform_indices = @transform_9, window_bounds = array<i64: 1, 256>}, {pipeline_mode = #tpu.pipeline_mode<synchronous>, transform_indices = @transform_10, window_bounds = array<i64: 2, 1, 256>}, {pipeline_mode = #tpu.pipeline_mode<synchronous>, transform_indices = @transform_11, window_bounds = array<i64: 2, 1, 256>}, {pipeline_mode = #tpu.pipeline_mode<synchronous>, transform_indices = @transform_12, window_bounds = array<i64: 512, 128>}, {pipeline_mode = #tpu.pipeline_mode<synchronous>, transform_indices = @transform_13, window_bounds = array<i64: 1, 128>}, {transform_indices = @transform_14, window_bounds = array<i64: 2, 128>}]} {
    %c0 = arith.constant 0 : index
    %c0_0 = arith.constant 0 : index
    %0 = vector.load %arg2[%c0, %c0_0] : memref<217x256xbf16, #tpu.memory_space<vmem>>, vector<217x256xbf16>
    %c0_1 = arith.constant 0 : index
    %c0_2 = arith.constant 0 : index
    %c0_3 = arith.constant 0 : index
    %1 = vector.load %arg1[%c0_1, %c0_2, %c0_3] : memref<8x2x217xbf16, #tpu.memory_space<vmem>>, vector<1x2x217xbf16>
    %2 = vector.shape_cast %1 : vector<1x2x217xbf16> to vector<2x217xbf16>
    %cst = arith.constant dense<0.000000e+00> : vector<2x256xf32>
    %3 = tpu.matmul %2, %0, %cst {dimension_numbers = #tpu.dot_dimension_numbers<[1], [0], [0], [1], [0, 0, 1, 1], [], []>} : vector<2x217xbf16>, vector<217x256xbf16>, vector<2x256xf32> -> vector<2x256xf32>
    %c1 = arith.constant 1 : index
    %c0_4 = arith.constant 0 : index
    %c0_5 = arith.constant 0 : index
    %4 = vector.load %arg1[%c1, %c0_4, %c0_5] : memref<8x2x217xbf16, #tpu.memory_space<vmem>>, vector<1x2x217xbf16>
    %5 = vector.shape_cast %4 : vector<1x2x217xbf16> to vector<2x217xbf16>
    %cst_6 = arith.constant dense<0.000000e+00> : vector<2x256xf32>
    %6 = tpu.matmul %5, %0, %cst_6 {dimension_numbers = #tpu.dot_dimension_numbers<[1], [0], [0], [1], [0, 0, 1, 1], [], []>} : vector<2x217xbf16>, vector<217x256xbf16>, vector<2x256xf32> -> vector<2x256xf32>
    %c2 = arith.constant 2 : index
    %c0_7 = arith.constant 0 : index
    %c0_8 = arith.constant 0 : index
    %7 = vector.load %arg1[%c2, %c0_7, %c0_8] : memref<8x2x217xbf16, #tpu.memory_space<vmem>>, vector<1x2x217xbf16>
    %8 = vector.shape_cast %7 : vector<1x2x217xbf16> to vector<2x217xbf16>
    %cst_9 = arith.constant dense<0.000000e+00> : vector<2x256xf32>
    %9 = tpu.matmul %8, %0, %cst_9 {dimension_numbers = #tpu.dot_dimension_numbers<[1], [0], [0], [1], [0, 0, 1, 1], [], []>} : vector<2x217xbf16>, vector<217x256xbf16>, vector<2x256xf32> -> vector<2x256xf32>
    %c3 = arith.constant 3 : index
    %c0_10 = arith.constant 0 : index
    %c0_11 = arith.constant 0 : index
    %10 = vector.load %arg1[%c3, %c0_10, %c0_11] : memref<8x2x217xbf16, #tpu.memory_space<vmem>>, vector<1x2x217xbf16>
    %11 = vector.shape_cast %10 : vector<1x2x217xbf16> to vector<2x217xbf16>
    %cst_12 = arith.constant dense<0.000000e+00> : vector<2x256xf32>
    %12 = tpu.matmul %11, %0, %cst_12 {dimension_numbers = #tpu.dot_dimension_numbers<[1], [0], [0], [1], [0, 0, 1, 1], [], []>} : vector<2x217xbf16>, vector<217x256xbf16>, vector<2x256xf32> -> vector<2x256xf32>
    %c4 = arith.constant 4 : index
    %c0_13 = arith.constant 0 : index
    %c0_14 = arith.constant 0 : index
    %13 = vector.load %arg1[%c4, %c0_13, %c0_14] : memref<8x2x217xbf16, #tpu.memory_space<vmem>>, vector<1x2x217xbf16>
    %14 = vector.shape_cast %13 : vector<1x2x217xbf16> to vector<2x217xbf16>
    %cst_15 = arith.constant dense<0.000000e+00> : vector<2x256xf32>
    %15 = tpu.matmul %14, %0, %cst_15 {dimension_numbers = #tpu.dot_dimension_numbers<[1], [0], [0], [1], [0, 0, 1, 1], [], []>} : vector<2x217xbf16>, vector<217x256xbf16>, vector<2x256xf32> -> vector<2x256xf32>
    %c5 = arith.constant 5 : index
    %c0_16 = arith.constant 0 : index
    %c0_17 = arith.constant 0 : index
    %16 = vector.load %arg1[%c5, %c0_16, %c0_17] : memref<8x2x217xbf16, #tpu.memory_space<vmem>>, vector<1x2x217xbf16>
    %17 = vector.shape_cast %16 : vector<1x2x217xbf16> to vector<2x217xbf16>
    %cst_18 = arith.constant dense<0.000000e+00> : vector<2x256xf32>
    %18 = tpu.matmul %17, %0, %cst_18 {dimension_numbers = #tpu.dot_dimension_numbers<[1], [0], [0], [1], [0, 0, 1, 1], [], []>} : vector<2x217xbf16>, vector<217x256xbf16>, vector<2x256xf32> -> vector<2x256xf32>
    %c6 = arith.constant 6 : index
    %c0_19 = arith.constant 0 : index
    %c0_20 = arith.constant 0 : index
    %19 = vector.load %arg1[%c6, %c0_19, %c0_20] : memref<8x2x217xbf16, #tpu.memory_space<vmem>>, vector<1x2x217xbf16>
    %20 = vector.shape_cast %19 : vector<1x2x217xbf16> to vector<2x217xbf16>
    %cst_21 = arith.constant dense<0.000000e+00> : vector<2x256xf32>
    %21 = tpu.matmul %20, %0, %cst_21 {dimension_numbers = #tpu.dot_dimension_numbers<[1], [0], [0], [1], [0, 0, 1, 1], [], []>} : vector<2x217xbf16>, vector<217x256xbf16>, vector<2x256xf32> -> vector<2x256xf32>
    %c7 = arith.constant 7 : index
    %c0_22 = arith.constant 0 : index
    %c0_23 = arith.constant 0 : index
    %22 = vector.load %arg1[%c7, %c0_22, %c0_23] : memref<8x2x217xbf16, #tpu.memory_space<vmem>>, vector<1x2x217xbf16>
    %23 = vector.shape_cast %22 : vector<1x2x217xbf16> to vector<2x217xbf16>
    %cst_24 = arith.constant dense<0.000000e+00> : vector<2x256xf32>
    %24 = tpu.matmul %23, %0, %cst_24 {dimension_numbers = #tpu.dot_dimension_numbers<[1], [0], [0], [1], [0, 0, 1, 1], [], []>} : vector<2x217xbf16>, vector<217x256xbf16>, vector<2x256xf32> -> vector<2x256xf32>
    %25 = vector.shape_cast %3 : vector<2x256xf32> to vector<1x2x256xf32>
    %26 = vector.shape_cast %6 : vector<2x256xf32> to vector<1x2x256xf32>
    %27 = vector.shape_cast %9 : vector<2x256xf32> to vector<1x2x256xf32>
    %28 = vector.shape_cast %12 : vector<2x256xf32> to vector<1x2x256xf32>
    %29 = vector.shape_cast %15 : vector<2x256xf32> to vector<1x2x256xf32>
    %30 = vector.shape_cast %18 : vector<2x256xf32> to vector<1x2x256xf32>
    %31 = vector.shape_cast %21 : vector<2x256xf32> to vector<1x2x256xf32>
    %32 = vector.shape_cast %24 : vector<2x256xf32> to vector<1x2x256xf32>
    %33 = tpu.concatenate %25, %26, %27, %28, %29, %30, %31, %32 in 0 : vector<1x2x256xf32>, vector<1x2x256xf32>, vector<1x2x256xf32>, vector<1x2x256xf32>, vector<1x2x256xf32>, vector<1x2x256xf32>, vector<1x2x256xf32>, vector<1x2x256xf32> -> vector<8x2x256xf32>
    %c0_25 = arith.constant 0 : index
    %c0_26 = arith.constant 0 : index
    %c0_27 = arith.constant 0 : index
    %34 = vector.load %arg3[%c0_25, %c0_26, %c0_27] : memref<8x1x256xf32, #tpu.memory_space<vmem>>, vector<8x1x256xf32>
    %c0_28 = arith.constant 0 : index
    %c0_29 = arith.constant 0 : index
    %c0_30 = arith.constant 0 : index
    %35 = vector.load %arg4[%c0_28, %c0_29, %c0_30] : memref<8x1x256xf32, #tpu.memory_space<vmem>>, vector<8x1x256xf32>
    %cst_31 = arith.constant dense<0.000000e+00> : vector<8x2xf32>
    %36 = vector.multi_reduction <add>, %33, %cst_31 [2] : vector<8x2x256xf32> to vector<8x2xf32>
    %37 = vector.shape_cast %36 : vector<8x2xf32> to vector<8x2x1xf32>
    %cst_32 = arith.constant dense<0.000000e+00> : vector<2x1xf32>
    %38 = vector.multi_reduction <add>, %37, %cst_32 [0] : vector<8x2x1xf32> to vector<2x1xf32>
    %39 = vector.shape_cast %38 : vector<2x1xf32> to vector<1x2x1xf32>
    %cst_33 = arith.constant 4.8828125E-4 : f32
    %40 = vector.broadcast %cst_33 : f32 to vector<1x2x1xf32>
    %41 = arith.mulf %39, %40 : vector<1x2x1xf32>
    %42 = vector.broadcast %41 : vector<1x2x1xf32> to vector<8x2x256xf32>
    %43 = arith.subf %33, %42 : vector<8x2x256xf32>
    %44 = arith.mulf %43, %43 : vector<8x2x256xf32>
    %cst_34 = arith.constant dense<0.000000e+00> : vector<8x2xf32>
    %45 = vector.multi_reduction <add>, %44, %cst_34 [2] : vector<8x2x256xf32> to vector<8x2xf32>
    %46 = vector.shape_cast %45 : vector<8x2xf32> to vector<8x2x1xf32>
    %cst_35 = arith.constant dense<0.000000e+00> : vector<2x1xf32>
    %47 = vector.multi_reduction <add>, %46, %cst_35 [0] : vector<8x2x1xf32> to vector<2x1xf32>
    %48 = vector.shape_cast %47 : vector<2x1xf32> to vector<1x2x1xf32>
    %cst_36 = arith.constant 4.8828125E-4 : f32
    %49 = vector.broadcast %cst_36 : f32 to vector<1x2x1xf32>
    %50 = arith.mulf %48, %49 : vector<1x2x1xf32>
    %cst_37 = arith.constant 9.99999974E-6 : f32
    %51 = vector.broadcast %cst_37 : f32 to vector<1x2x1xf32>
    %52 = arith.addf %50, %51 : vector<1x2x1xf32>
    %53 = math.rsqrt %52 : vector<1x2x1xf32>
    %54 = vector.broadcast %53 : vector<1x2x1xf32> to vector<8x2x256xf32>
    %55 = arith.mulf %43, %54 : vector<8x2x256xf32>
    %56 = vector.broadcast %34 : vector<8x1x256xf32> to vector<8x2x256xf32>
    %57 = arith.mulf %55, %56 : vector<8x2x256xf32>
    %58 = vector.broadcast %35 : vector<8x1x256xf32> to vector<8x2x256xf32>
    %59 = arith.addf %57, %58 : vector<8x2x256xf32>
    %cst_38 = arith.constant 0.000000e+00 : f32
    %60 = vector.broadcast %cst_38 : f32 to vector<8x2x256xf32>
    %61 = arith.cmpf oge, %59, %60 : vector<8x2x256xf32>
    %cst_39 = arith.constant 0.00999999977 : f32
    %62 = vector.broadcast %cst_39 : f32 to vector<8x2x256xf32>
    %63 = arith.mulf %62, %59 : vector<8x2x256xf32>
    %64 = arith.select %61, %59, %63 : vector<8x2x256xi1>, vector<8x2x256xf32>
    %65 = arith.truncf %64 : vector<8x2x256xf32> to vector<8x2x256xbf16>
    %c0_40 = arith.constant 0 : index
    %c0_41 = arith.constant 0 : index
    %c0_42 = arith.constant 0 : index
    %66 = vector.load %arg16[%c0_40, %c0_41, %c0_42] : memref<8x2x256xbf16, #tpu.memory_space<vmem>>, vector<8x2x256xbf16>
    tpu.vector_store %arg16[%c0_40, %c0_41, %c0_42], %65 {strides = array<i32>} : memref<8x2x256xbf16, #tpu.memory_space<vmem>>, vector<8x2x256xbf16>,
    %c0_43 = arith.constant 0 : index
    %c0_44 = arith.constant 0 : index
    %67 = vector.load %arg6[%c0_43, %c0_44] : memref<1x256xf32, #tpu.memory_space<vmem>>, vector<1x256xf32>
    %c0_45 = arith.constant 0 : index
    %c0_46 = arith.constant 0 : index
    %c0_47 = arith.constant 0 : index
    %68 = vector.load %arg16[%c0_45, %c0_46, %c0_47] : memref<8x2x256xbf16, #tpu.memory_space<vmem>>, vector<1x2x256xbf16>
    %69 = vector.shape_cast %68 : vector<1x2x256xbf16> to vector<2x256xbf16>
    %c1_48 = arith.constant 1 : index
    %c0_49 = arith.constant 0 : index
    %c0_50 = arith.constant 0 : index
    %70 = vector.load %arg5[%c1_48, %c0_49, %c0_50] : memref<3x256x256xbf16, #tpu.memory_space<vmem>>, vector<1x256x256xbf16>
    %71 = vector.shape_cast %70 : vector<1x256x256xbf16> to vector<256x256xbf16>
    %cst_51 = arith.constant dense<0.000000e+00> : vector<2x256xf32>
    %72 = tpu.matmul %69, %71, %cst_51 {dimension_numbers = #tpu.dot_dimension_numbers<[1], [0], [0], [1], [0, 0, 1, 1], [], []>} : vector<2x256xbf16>, vector<256x256xbf16>, vector<2x256xf32> -> vector<2x256xf32>
    %c1_52 = arith.constant 1 : index
    %c0_53 = arith.constant 0 : index
    %c0_54 = arith.constant 0 : index
    %73 = vector.load %arg16[%c1_52, %c0_53, %c0_54] : memref<8x2x256xbf16, #tpu.memory_space<vmem>>, vector<1x2x256xbf16>
    %74 = vector.shape_cast %73 : vector<1x2x256xbf16> to vector<2x256xbf16>
    %c2_55 = arith.constant 2 : index
    %c0_56 = arith.constant 0 : index
    %c0_57 = arith.constant 0 : index
    %75 = vector.load %arg5[%c2_55, %c0_56, %c0_57] : memref<3x256x256xbf16, #tpu.memory_space<vmem>>, vector<1x256x256xbf16>
    %76 = vector.shape_cast %75 : vector<1x256x256xbf16> to vector<256x256xbf16>
    %cst_58 = arith.constant dense<0.000000e+00> : vector<2x256xf32>
    %77 = tpu.matmul %74, %76, %cst_58 {dimension_numbers = #tpu.dot_dimension_numbers<[1], [0], [0], [1], [0, 0, 1, 1], [], []>} : vector<2x256xbf16>, vector<256x256xbf16>, vector<2x256xf32> -> vector<2x256xf32>
    %78 = arith.addf %72, %77 : vector<2x256xf32>
    %79 = vector.broadcast %67 : vector<1x256xf32> to vector<2x256xf32>
    %80 = arith.addf %78, %79 : vector<2x256xf32>
    %c1_59 = arith.constant 1 : index
    %c0_60 = arith.constant 0 : index
    %c0_61 = arith.constant 0 : index
    %81 = vector.load %arg16[%c1_59, %c0_60, %c0_61] : memref<8x2x256xbf16, #tpu.memory_space<vmem>>, vector<1x2x256xbf16>
    %82 = vector.shape_cast %81 : vector<1x2x256xbf16> to vector<2x256xbf16>
    %c0_62 = arith.constant 0 : index
    %c0_63 = arith.constant 0 : index
    %c0_64 = arith.constant 0 : index
    %83 = vector.load %arg5[%c0_62, %c0_63, %c0_64] : memref<3x256x256xbf16, #tpu.memory_space<vmem>>, vector<1x256x256xbf16>
    %84 = vector.shape_cast %83 : vector<1x256x256xbf16> to vector<256x256xbf16>
    %cst_65 = arith.constant dense<0.000000e+00> : vector<2x256xf32>
    %85 = tpu.matmul %82, %84, %cst_65 {dimension_numbers = #tpu.dot_dimension_numbers<[1], [0], [0], [1], [0, 0, 1, 1], [], []>} : vector<2x256xbf16>, vector<256x256xbf16>, vector<2x256xf32> -> vector<2x256xf32>
    %c2_66 = arith.constant 2 : index
    %c0_67 = arith.constant 0 : index
    %c0_68 = arith.constant 0 : index
    %86 = vector.load %arg16[%c2_66, %c0_67, %c0_68] : memref<8x2x256xbf16, #tpu.memory_space<vmem>>, vector<1x2x256xbf16>
    %87 = vector.shape_cast %86 : vector<1x2x256xbf16> to vector<2x256xbf16>
    %c1_69 = arith.constant 1 : index
    %c0_70 = arith.constant 0 : index
    %c0_71 = arith.constant 0 : index
    %88 = vector.load %arg5[%c1_69, %c0_70, %c0_71] : memref<3x256x256xbf16, #tpu.memory_space<vmem>>, vector<1x256x256xbf16>
    %89 = vector.shape_cast %88 : vector<1x256x256xbf16> to vector<256x256xbf16>
    %cst_72 = arith.constant dense<0.000000e+00> : vector<2x256xf32>
    %90 = tpu.matmul %87, %89, %cst_72 {dimension_numbers = #tpu.dot_dimension_numbers<[1], [0], [0], [1], [0, 0, 1, 1], [], []>} : vector<2x256xbf16>, vector<256x256xbf16>, vector<2x256xf32> -> vector<2x256xf32>
    %91 = arith.addf %85, %90 : vector<2x256xf32>
    %c3_73 = arith.constant 3 : index
    %c0_74 = arith.constant 0 : index
    %c0_75 = arith.constant 0 : index
    %92 = vector.load %arg16[%c3_73, %c0_74, %c0_75] : memref<8x2x256xbf16, #tpu.memory_space<vmem>>, vector<1x2x256xbf16>
    %93 = vector.shape_cast %92 : vector<1x2x256xbf16> to vector<2x256xbf16>
    %c2_76 = arith.constant 2 : index
    %c0_77 = arith.constant 0 : index
    %c0_78 = arith.constant 0 : index
    %94 = vector.load %arg5[%c2_76, %c0_77, %c0_78] : memref<3x256x256xbf16, #tpu.memory_space<vmem>>, vector<1x256x256xbf16>
    %95 = vector.shape_cast %94 : vector<1x256x256xbf16> to vector<256x256xbf16>
    %cst_79 = arith.constant dense<0.000000e+00> : vector<2x256xf32>
    %96 = tpu.matmul %93, %95, %cst_79 {dimension_numbers = #tpu.dot_dimension_numbers<[1], [0], [0], [1], [0, 0, 1, 1], [], []>} : vector<2x256xbf16>, vector<256x256xbf16>, vector<2x256xf32> -> vector<2x256xf32>
    %97 = arith.addf %91, %96 : vector<2x256xf32>
    %98 = vector.broadcast %67 : vector<1x256xf32> to vector<2x256xf32>
    %99 = arith.addf %97, %98 : vector<2x256xf32>
    %c3_80 = arith.constant 3 : index
    %c0_81 = arith.constant 0 : index
    %c0_82 = arith.constant 0 : index
    %100 = vector.load %arg16[%c3_80, %c0_81, %c0_82] : memref<8x2x256xbf16, #tpu.memory_space<vmem>>, vector<1x2x256xbf16>
    %101 = vector.shape_cast %100 : vector<1x2x256xbf16> to vector<2x256xbf16>
    %c0_83 = arith.constant 0 : index
    %c0_84 = arith.constant 0 : index
    %c0_85 = arith.constant 0 : index
    %102 = vector.load %arg5[%c0_83, %c0_84, %c0_85] : memref<3x256x256xbf16, #tpu.memory_space<vmem>>, vector<1x256x256xbf16>
    %103 = vector.shape_cast %102 : vector<1x256x256xbf16> to vector<256x256xbf16>
    %cst_86 = arith.constant dense<0.000000e+00> : vector<2x256xf32>
    %104 = tpu.matmul %101, %103, %cst_86 {dimension_numbers = #tpu.dot_dimension_numbers<[1], [0], [0], [1], [0, 0, 1, 1], [], []>} : vector<2x256xbf16>, vector<256x256xbf16>, vector<2x256xf32> -> vector<2x256xf32>
    %c4_87 = arith.constant 4 : index
    %c0_88 = arith.constant 0 : index
    %c0_89 = arith.constant 0 : index
    %105 = vector.load %arg16[%c4_87, %c0_88, %c0_89] : memref<8x2x256xbf16, #tpu.memory_space<vmem>>, vector<1x2x256xbf16>
    %106 = vector.shape_cast %105 : vector<1x2x256xbf16> to vector<2x256xbf16>
    %c1_90 = arith.constant 1 : index
    %c0_91 = arith.constant 0 : index
    %c0_92 = arith.constant 0 : index
    %107 = vector.load %arg5[%c1_90, %c0_91, %c0_92] : memref<3x256x256xbf16, #tpu.memory_space<vmem>>, vector<1x256x256xbf16>
    %108 = vector.shape_cast %107 : vector<1x256x256xbf16> to vector<256x256xbf16>
    %cst_93 = arith.constant dense<0.000000e+00> : vector<2x256xf32>
    %109 = tpu.matmul %106, %108, %cst_93 {dimension_numbers = #tpu.dot_dimension_numbers<[1], [0], [0], [1], [0, 0, 1, 1], [], []>} : vector<2x256xbf16>, vector<256x256xbf16>, vector<2x256xf32> -> vector<2x256xf32>
    %110 = arith.addf %104, %109 : vector<2x256xf32>
    %c5_94 = arith.constant 5 : index
    %c0_95 = arith.constant 0 : index
    %c0_96 = arith.constant 0 : index
    %111 = vector.load %arg16[%c5_94, %c0_95, %c0_96] : memref<8x2x256xbf16, #tpu.memory_space<vmem>>, vector<1x2x256xbf16>
    %112 = vector.shape_cast %111 : vector<1x2x256xbf16> to vector<2x256xbf16>
    %c2_97 = arith.constant 2 : index
    %c0_98 = arith.constant 0 : index
    %c0_99 = arith.constant 0 : index
    %113 = vector.load %arg5[%c2_97, %c0_98, %c0_99] : memref<3x256x256xbf16, #tpu.memory_space<vmem>>, vector<1x256x256xbf16>
    %114 = vector.shape_cast %113 : vector<1x256x256xbf16> to vector<256x256xbf16>
    %cst_100 = arith.constant dense<0.000000e+00> : vector<2x256xf32>
    %115 = tpu.matmul %112, %114, %cst_100 {dimension_numbers = #tpu.dot_dimension_numbers<[1], [0], [0], [1], [0, 0, 1, 1], [], []>} : vector<2x256xbf16>, vector<256x256xbf16>, vector<2x256xf32> -> vector<2x256xf32>
    %116 = arith.addf %110, %115 : vector<2x256xf32>
    %117 = vector.broadcast %67 : vector<1x256xf32> to vector<2x256xf32>
    %118 = arith.addf %116, %117 : vector<2x256xf32>
    %c5_101 = arith.constant 5 : index
    %c0_102 = arith.constant 0 : index
    %c0_103 = arith.constant 0 : index
    %119 = vector.load %arg16[%c5_101, %c0_102, %c0_103] : memref<8x2x256xbf16, #tpu.memory_space<vmem>>, vector<1x2x256xbf16>
    %120 = vector.shape_cast %119 : vector<1x2x256xbf16> to vector<2x256xbf16>
    %c0_104 = arith.constant 0 : index
    %c0_105 = arith.constant 0 : index
    %c0_106 = arith.constant 0 : index
    %121 = vector.load %arg5[%c0_104, %c0_105, %c0_106] : memref<3x256x256xbf16, #tpu.memory_space<vmem>>, vector<1x256x256xbf16>
    %122 = vector.shape_cast %121 : vector<1x256x256xbf16> to vector<256x256xbf16>
    %cst_107 = arith.constant dense<0.000000e+00> : vector<2x256xf32>
    %123 = tpu.matmul %120, %122, %cst_107 {dimension_numbers = #tpu.dot_dimension_numbers<[1], [0], [0], [1], [0, 0, 1, 1], [], []>} : vector<2x256xbf16>, vector<256x256xbf16>, vector<2x256xf32> -> vector<2x256xf32>
    %c6_108 = arith.constant 6 : index
    %c0_109 = arith.constant 0 : index
    %c0_110 = arith.constant 0 : index
    %124 = vector.load %arg16[%c6_108, %c0_109, %c0_110] : memref<8x2x256xbf16, #tpu.memory_space<vmem>>, vector<1x2x256xbf16>
    %125 = vector.shape_cast %124 : vector<1x2x256xbf16> to vector<2x256xbf16>
    %c1_111 = arith.constant 1 : index
    %c0_112 = arith.constant 0 : index
    %c0_113 = arith.constant 0 : index
    %126 = vector.load %arg5[%c1_111, %c0_112, %c0_113] : memref<3x256x256xbf16, #tpu.memory_space<vmem>>, vector<1x256x256xbf16>
    %127 = vector.shape_cast %126 : vector<1x256x256xbf16> to vector<256x256xbf16>
    %cst_114 = arith.constant dense<0.000000e+00> : vector<2x256xf32>
    %128 = tpu.matmul %125, %127, %cst_114 {dimension_numbers = #tpu.dot_dimension_numbers<[1], [0], [0], [1], [0, 0, 1, 1], [], []>} : vector<2x256xbf16>, vector<256x256xbf16>, vector<2x256xf32> -> vector<2x256xf32>
    %129 = arith.addf %123, %128 : vector<2x256xf32>
    %c7_115 = arith.constant 7 : index
    %c0_116 = arith.constant 0 : index
    %c0_117 = arith.constant 0 : index
    %130 = vector.load %arg16[%c7_115, %c0_116, %c0_117] : memref<8x2x256xbf16, #tpu.memory_space<vmem>>, vector<1x2x256xbf16>
    %131 = vector.shape_cast %130 : vector<1x2x256xbf16> to vector<2x256xbf16>
    %c2_118 = arith.constant 2 : index
    %c0_119 = arith.constant 0 : index
    %c0_120 = arith.constant 0 : index
    %132 = vector.load %arg5[%c2_118, %c0_119, %c0_120] : memref<3x256x256xbf16, #tpu.memory_space<vmem>>, vector<1x256x256xbf16>
    %133 = vector.shape_cast %132 : vector<1x256x256xbf16> to vector<256x256xbf16>
    %cst_121 = arith.constant dense<0.000000e+00> : vector<2x256xf32>
    %134 = tpu.matmul %131, %133, %cst_121 {dimension_numbers = #tpu.dot_dimension_numbers<[1], [0], [0], [1], [0, 0, 1, 1], [], []>} : vector<2x256xbf16>, vector<256x256xbf16>, vector<2x256xf32> -> vector<2x256xf32>
    %135 = arith.addf %129, %134 : vector<2x256xf32>
    %136 = vector.broadcast %67 : vector<1x256xf32> to vector<2x256xf32>
    %137 = arith.addf %135, %136 : vector<2x256xf32>
    %138 = vector.shape_cast %80 : vector<2x256xf32> to vector<1x2x256xf32>
    %139 = vector.shape_cast %99 : vector<2x256xf32> to vector<1x2x256xf32>
    %140 = vector.shape_cast %118 : vector<2x256xf32> to vector<1x2x256xf32>
    %141 = vector.shape_cast %137 : vector<2x256xf32> to vector<1x2x256xf32>
    %142 = tpu.concatenate %138, %139, %140, %141 in 0 : vector<1x2x256xf32>, vector<1x2x256xf32>, vector<1x2x256xf32>, vector<1x2x256xf32> -> vector<4x2x256xf32>
    %c0_122 = arith.constant 0 : index
    %c0_123 = arith.constant 0 : index
    %c0_124 = arith.constant 0 : index
    %143 = vector.load %arg7[%c0_122, %c0_123, %c0_124] : memref<4x1x256xf32, #tpu.memory_space<vmem>>, vector<4x1x256xf32>
    %c0_125 = arith.constant 0 : index
    %c0_126 = arith.constant 0 : index
    %c0_127 = arith.constant 0 : index
    %144 = vector.load %arg8[%c0_125, %c0_126, %c0_127] : memref<4x1x256xf32, #tpu.memory_space<vmem>>, vector<4x1x256xf32>
    %cst_128 = arith.constant dense<0.000000e+00> : vector<4x2xf32>
    %145 = vector.multi_reduction <add>, %142, %cst_128 [2] : vector<4x2x256xf32> to vector<4x2xf32>
    %146 = vector.shape_cast %145 : vector<4x2xf32> to vector<4x2x1xf32>
    %cst_129 = arith.constant dense<0.000000e+00> : vector<2x1xf32>
    %147 = vector.multi_reduction <add>, %146, %cst_129 [0] : vector<4x2x1xf32> to vector<2x1xf32>
    %148 = vector.shape_cast %147 : vector<2x1xf32> to vector<1x2x1xf32>
    %cst_130 = arith.constant 9.765625E-4 : f32
    %149 = vector.broadcast %cst_130 : f32 to vector<1x2x1xf32>
    %150 = arith.mulf %148, %149 : vector<1x2x1xf32>
    %151 = vector.broadcast %150 : vector<1x2x1xf32> to vector<4x2x256xf32>
    %152 = arith.subf %142, %151 : vector<4x2x256xf32>
    %153 = arith.mulf %152, %152 : vector<4x2x256xf32>
    %cst_131 = arith.constant dense<0.000000e+00> : vector<4x2xf32>
    %154 = vector.multi_reduction <add>, %153, %cst_131 [2] : vector<4x2x256xf32> to vector<4x2xf32>
    %155 = vector.shape_cast %154 : vector<4x2xf32> to vector<4x2x1xf32>
    %cst_132 = arith.constant dense<0.000000e+00> : vector<2x1xf32>
    %156 = vector.multi_reduction <add>, %155, %cst_132 [0] : vector<4x2x1xf32> to vector<2x1xf32>
    %157 = vector.shape_cast %156 : vector<2x1xf32> to vector<1x2x1xf32>
    %cst_133 = arith.constant 9.765625E-4 : f32
    %158 = vector.broadcast %cst_133 : f32 to vector<1x2x1xf32>
    %159 = arith.mulf %157, %158 : vector<1x2x1xf32>
    %cst_134 = arith.constant 9.99999974E-6 : f32
    %160 = vector.broadcast %cst_134 : f32 to vector<1x2x1xf32>
    %161 = arith.addf %159, %160 : vector<1x2x1xf32>
    %162 = math.rsqrt %161 : vector<1x2x1xf32>
    %163 = vector.broadcast %162 : vector<1x2x1xf32> to vector<4x2x256xf32>
    %164 = arith.mulf %152, %163 : vector<4x2x256xf32>
    %165 = vector.broadcast %143 : vector<4x1x256xf32> to vector<4x2x256xf32>
    %166 = arith.mulf %164, %165 : vector<4x2x256xf32>
    %167 = vector.broadcast %144 : vector<4x1x256xf32> to vector<4x2x256xf32>
    %168 = arith.addf %166, %167 : vector<4x2x256xf32>
    %cst_135 = arith.constant 0.000000e+00 : f32
    %169 = vector.broadcast %cst_135 : f32 to vector<4x2x256xf32>
    %170 = arith.cmpf oge, %168, %169 : vector<4x2x256xf32>
    %cst_136 = arith.constant 0.00999999977 : f32
    %171 = vector.broadcast %cst_136 : f32 to vector<4x2x256xf32>
    %172 = arith.mulf %171, %168 : vector<4x2x256xf32>
    %173 = arith.select %170, %168, %172 : vector<4x2x256xi1>, vector<4x2x256xf32>
    %174 = arith.truncf %173 : vector<4x2x256xf32> to vector<4x2x256xbf16>
    %c0_137 = arith.constant 0 : index
    %c0_138 = arith.constant 0 : index
    %c0_139 = arith.constant 0 : index
    %175 = vector.load %arg17[%c0_137, %c0_138, %c0_139] : memref<4x2x256xbf16, #tpu.memory_space<vmem>>, vector<4x2x256xbf16>
    tpu.vector_store %arg17[%c0_137, %c0_138, %c0_139], %174 {strides = array<i32>} : memref<4x2x256xbf16, #tpu.memory_space<vmem>>, vector<4x2x256xbf16>,
    %c0_140 = arith.constant 0 : index
    %c0_141 = arith.constant 0 : index
    %176 = vector.load %arg10[%c0_140, %c0_141] : memref<1x256xf32, #tpu.memory_space<vmem>>, vector<1x256xf32>
    %c0_142 = arith.constant 0 : index
    %c0_143 = arith.constant 0 : index
    %c0_144 = arith.constant 0 : index
    %177 = vector.load %arg17[%c0_142, %c0_143, %c0_144] : memref<4x2x256xbf16, #tpu.memory_space<vmem>>, vector<1x2x256xbf16>
    %178 = vector.shape_cast %177 : vector<1x2x256xbf16> to vector<2x256xbf16>
    %c1_145 = arith.constant 1 : index
    %c0_146 = arith.constant 0 : index
    %c0_147 = arith.constant 0 : index
    %179 = vector.load %arg9[%c1_145, %c0_146, %c0_147] : memref<3x256x256xbf16, #tpu.memory_space<vmem>>, vector<1x256x256xbf16>
    %180 = vector.shape_cast %179 : vector<1x256x256xbf16> to vector<256x256xbf16>
    %cst_148 = arith.constant dense<0.000000e+00> : vector<2x256xf32>
    %181 = tpu.matmul %178, %180, %cst_148 {dimension_numbers = #tpu.dot_dimension_numbers<[1], [0], [0], [1], [0, 0, 1, 1], [], []>} : vector<2x256xbf16>, vector<256x256xbf16>, vector<2x256xf32> -> vector<2x256xf32>
    %c1_149 = arith.constant 1 : index
    %c0_150 = arith.constant 0 : index
    %c0_151 = arith.constant 0 : index
    %182 = vector.load %arg17[%c1_149, %c0_150, %c0_151] : memref<4x2x256xbf16, #tpu.memory_space<vmem>>, vector<1x2x256xbf16>
    %183 = vector.shape_cast %182 : vector<1x2x256xbf16> to vector<2x256xbf16>
    %c2_152 = arith.constant 2 : index
    %c0_153 = arith.constant 0 : index
    %c0_154 = arith.constant 0 : index
    %184 = vector.load %arg9[%c2_152, %c0_153, %c0_154] : memref<3x256x256xbf16, #tpu.memory_space<vmem>>, vector<1x256x256xbf16>
    %185 = vector.shape_cast %184 : vector<1x256x256xbf16> to vector<256x256xbf16>
    %cst_155 = arith.constant dense<0.000000e+00> : vector<2x256xf32>
    %186 = tpu.matmul %183, %185, %cst_155 {dimension_numbers = #tpu.dot_dimension_numbers<[1], [0], [0], [1], [0, 0, 1, 1], [], []>} : vector<2x256xbf16>, vector<256x256xbf16>, vector<2x256xf32> -> vector<2x256xf32>
    %187 = arith.addf %181, %186 : vector<2x256xf32>
    %188 = vector.broadcast %176 : vector<1x256xf32> to vector<2x256xf32>
    %189 = arith.addf %187, %188 : vector<2x256xf32>
    %c1_156 = arith.constant 1 : index
    %c0_157 = arith.constant 0 : index
    %c0_158 = arith.constant 0 : index
    %190 = vector.load %arg17[%c1_156, %c0_157, %c0_158] : memref<4x2x256xbf16, #tpu.memory_space<vmem>>, vector<1x2x256xbf16>
    %191 = vector.shape_cast %190 : vector<1x2x256xbf16> to vector<2x256xbf16>
    %c0_159 = arith.constant 0 : index
    %c0_160 = arith.constant 0 : index
    %c0_161 = arith.constant 0 : index
    %192 = vector.load %arg9[%c0_159, %c0_160, %c0_161] : memref<3x256x256xbf16, #tpu.memory_space<vmem>>, vector<1x256x256xbf16>
    %193 = vector.shape_cast %192 : vector<1x256x256xbf16> to vector<256x256xbf16>
    %cst_162 = arith.constant dense<0.000000e+00> : vector<2x256xf32>
    %194 = tpu.matmul %191, %193, %cst_162 {dimension_numbers = #tpu.dot_dimension_numbers<[1], [0], [0], [1], [0, 0, 1, 1], [], []>} : vector<2x256xbf16>, vector<256x256xbf16>, vector<2x256xf32> -> vector<2x256xf32>
    %c2_163 = arith.constant 2 : index
    %c0_164 = arith.constant 0 : index
    %c0_165 = arith.constant 0 : index
    %195 = vector.load %arg17[%c2_163, %c0_164, %c0_165] : memref<4x2x256xbf16, #tpu.memory_space<vmem>>, vector<1x2x256xbf16>
    %196 = vector.shape_cast %195 : vector<1x2x256xbf16> to vector<2x256xbf16>
    %c1_166 = arith.constant 1 : index
    %c0_167 = arith.constant 0 : index
    %c0_168 = arith.constant 0 : index
    %197 = vector.load %arg9[%c1_166, %c0_167, %c0_168] : memref<3x256x256xbf16, #tpu.memory_space<vmem>>, vector<1x256x256xbf16>
    %198 = vector.shape_cast %197 : vector<1x256x256xbf16> to vector<256x256xbf16>
    %cst_169 = arith.constant dense<0.000000e+00> : vector<2x256xf32>
    %199 = tpu.matmul %196, %198, %cst_169 {dimension_numbers = #tpu.dot_dimension_numbers<[1], [0], [0], [1], [0, 0, 1, 1], [], []>} : vector<2x256xbf16>, vector<256x256xbf16>, vector<2x256xf32> -> vector<2x256xf32>
    %200 = arith.addf %194, %199 : vector<2x256xf32>
    %c3_170 = arith.constant 3 : index
    %c0_171 = arith.constant 0 : index
    %c0_172 = arith.constant 0 : index
    %201 = vector.load %arg17[%c3_170, %c0_171, %c0_172] : memref<4x2x256xbf16, #tpu.memory_space<vmem>>, vector<1x2x256xbf16>
    %202 = vector.shape_cast %201 : vector<1x2x256xbf16> to vector<2x256xbf16>
    %c2_173 = arith.constant 2 : index
    %c0_174 = arith.constant 0 : index
    %c0_175 = arith.constant 0 : index
    %203 = vector.load %arg9[%c2_173, %c0_174, %c0_175] : memref<3x256x256xbf16, #tpu.memory_space<vmem>>, vector<1x256x256xbf16>
    %204 = vector.shape_cast %203 : vector<1x256x256xbf16> to vector<256x256xbf16>
    %cst_176 = arith.constant dense<0.000000e+00> : vector<2x256xf32>
    %205 = tpu.matmul %202, %204, %cst_176 {dimension_numbers = #tpu.dot_dimension_numbers<[1], [0], [0], [1], [0, 0, 1, 1], [], []>} : vector<2x256xbf16>, vector<256x256xbf16>, vector<2x256xf32> -> vector<2x256xf32>
    %206 = arith.addf %200, %205 : vector<2x256xf32>
    %207 = vector.broadcast %176 : vector<1x256xf32> to vector<2x256xf32>
    %208 = arith.addf %206, %207 : vector<2x256xf32>
    %209 = vector.shape_cast %189 : vector<2x256xf32> to vector<1x2x256xf32>
    %210 = vector.shape_cast %208 : vector<2x256xf32> to vector<1x2x256xf32>
    %211 = tpu.concatenate %209, %210 in 0 : vector<1x2x256xf32>, vector<1x2x256xf32> -> vector<2x2x256xf32>
    %c0_177 = arith.constant 0 : index
    %c0_178 = arith.constant 0 : index
    %c0_179 = arith.constant 0 : index
    %212 = vector.load %arg11[%c0_177, %c0_178, %c0_179] : memref<2x1x256xf32, #tpu.memory_space<vmem>>, vector<2x1x256xf32>
    %c0_180 = arith.constant 0 : index
    %c0_181 = arith.constant 0 : index
    %c0_182 = arith.constant 0 : index
    %213 = vector.load %arg12[%c0_180, %c0_181, %c0_182] : memref<2x1x256xf32, #tpu.memory_space<vmem>>, vector<2x1x256xf32>
    %cst_183 = arith.constant dense<0.000000e+00> : vector<2x2xf32>
    %214 = vector.multi_reduction <add>, %211, %cst_183 [2] : vector<2x2x256xf32> to vector<2x2xf32>
    %215 = vector.shape_cast %214 : vector<2x2xf32> to vector<2x2x1xf32>
    %cst_184 = arith.constant dense<0.000000e+00> : vector<2x1xf32>
    %216 = vector.multi_reduction <add>, %215, %cst_184 [0] : vector<2x2x1xf32> to vector<2x1xf32>
    %217 = vector.shape_cast %216 : vector<2x1xf32> to vector<1x2x1xf32>
    %cst_185 = arith.constant 0.001953125 : f32
    %218 = vector.broadcast %cst_185 : f32 to vector<1x2x1xf32>
    %219 = arith.mulf %217, %218 : vector<1x2x1xf32>
    %220 = vector.broadcast %219 : vector<1x2x1xf32> to vector<2x2x256xf32>
    %221 = arith.subf %211, %220 : vector<2x2x256xf32>
    %222 = arith.mulf %221, %221 : vector<2x2x256xf32>
    %cst_186 = arith.constant dense<0.000000e+00> : vector<2x2xf32>
    %223 = vector.multi_reduction <add>, %222, %cst_186 [2] : vector<2x2x256xf32> to vector<2x2xf32>
    %224 = vector.shape_cast %223 : vector<2x2xf32> to vector<2x2x1xf32>
    %cst_187 = arith.constant dense<0.000000e+00> : vector<2x1xf32>
    %225 = vector.multi_reduction <add>, %224, %cst_187 [0] : vector<2x2x1xf32> to vector<2x1xf32>
    %226 = vector.shape_cast %225 : vector<2x1xf32> to vector<1x2x1xf32>
    %cst_188 = arith.constant 0.001953125 : f32
    %227 = vector.broadcast %cst_188 : f32 to vector<1x2x1xf32>
    %228 = arith.mulf %226, %227 : vector<1x2x1xf32>
    %cst_189 = arith.constant 9.99999974E-6 : f32
    %229 = vector.broadcast %cst_189 : f32 to vector<1x2x1xf32>
    %230 = arith.addf %228, %229 : vector<1x2x1xf32>
    %231 = math.rsqrt %230 : vector<1x2x1xf32>
    %232 = vector.broadcast %231 : vector<1x2x1xf32> to vector<2x2x256xf32>
    %233 = arith.mulf %221, %232 : vector<2x2x256xf32>
    %234 = vector.broadcast %212 : vector<2x1x256xf32> to vector<2x2x256xf32>
    %235 = arith.mulf %233, %234 : vector<2x2x256xf32>
    %236 = vector.broadcast %213 : vector<2x1x256xf32> to vector<2x2x256xf32>
    %237 = arith.addf %235, %236 : vector<2x2x256xf32>
    %cst_190 = arith.constant 0.000000e+00 : f32
    %238 = vector.broadcast %cst_190 : f32 to vector<2x2x256xf32>
    %239 = arith.cmpf oge, %237, %238 : vector<2x2x256xf32>
    %cst_191 = arith.constant 0.00999999977 : f32
    %240 = vector.broadcast %cst_191 : f32 to vector<2x2x256xf32>
    %241 = arith.mulf %240, %237 : vector<2x2x256xf32>
    %242 = arith.select %239, %237, %241 : vector<2x2x256xi1>, vector<2x2x256xf32>
    %243 = arith.truncf %242 : vector<2x2x256xf32> to vector<2x2x256xbf16>
    %c0_192 = arith.constant 0 : index
    %c0_193 = arith.constant 0 : index
    %244 = vector.load %arg13[%c0_192, %c0_193] : memref<512x128xbf16, #tpu.memory_space<vmem>>, vector<512x128xbf16>
    %245 = vector.extract_strided_slice %243 {offsets = [0, 0, 0], sizes = [1, 2, 256], strides = [1, 1, 1]} : vector<2x2x256xbf16> to vector<1x2x256xbf16>
    %246 = vector.shape_cast %245 : vector<1x2x256xbf16> to vector<2x256xbf16>
    %247 = vector.extract_strided_slice %244 {offsets = [0, 0], sizes = [256, 128], strides = [1, 1]} : vector<512x128xbf16> to vector<256x128xbf16>
    %cst_194 = arith.constant dense<0.000000e+00> : vector<2x128xf32>
    %248 = tpu.matmul %246, %247, %cst_194 {dimension_numbers = #tpu.dot_dimension_numbers<[1], [0], [0], [1], [0, 0, 1, 1], [], []>} : vector<2x256xbf16>, vector<256x128xbf16>, vector<2x128xf32> -> vector<2x128xf32>
    %249 = vector.extract_strided_slice %243 {offsets = [1, 0, 0], sizes = [1, 2, 256], strides = [1, 1, 1]} : vector<2x2x256xbf16> to vector<1x2x256xbf16>
    %250 = vector.shape_cast %249 : vector<1x2x256xbf16> to vector<2x256xbf16>
    %251 = vector.extract_strided_slice %244 {offsets = [256, 0], sizes = [256, 128], strides = [1, 1]} : vector<512x128xbf16> to vector<256x128xbf16>
    %cst_195 = arith.constant dense<0.000000e+00> : vector<2x128xf32>
    %252 = tpu.matmul %250, %251, %cst_195 {dimension_numbers = #tpu.dot_dimension_numbers<[1], [0], [0], [1], [0, 0, 1, 1], [], []>} : vector<2x256xbf16>, vector<256x128xbf16>, vector<2x128xf32> -> vector<2x128xf32>
    %253 = arith.addf %248, %252 : vector<2x128xf32>
    %c0_196 = arith.constant 0 : index
    %c0_197 = arith.constant 0 : index
    %254 = vector.load %arg14[%c0_196, %c0_197] : memref<1x128xf32, #tpu.memory_space<vmem>>, vector<1x128xf32>
    %255 = vector.broadcast %254 : vector<1x128xf32> to vector<2x128xf32>
    %256 = arith.addf %253, %255 : vector<2x128xf32>
    %257 = tpu.iota {dimensions = array<i32: 1>} : vector<2x128xi32>
    %c8_i32 = arith.constant 8 : i32
    %258 = vector.broadcast %c8_i32 : i32 to vector<2x128xi32>
    %259 = arith.cmpi slt, %257, %258 : vector<2x128xi32>
    %cst_198 = arith.constant 0.000000e+00 : f32
    %260 = vector.broadcast %cst_198 : f32 to vector<2x128xf32>
    %261 = arith.maximumf %256, %260 : vector<2x128xf32>
    %262 = vector.broadcast %cst_198 : f32 to vector<2x128xf32>
    %263 = arith.subf %256, %262 : vector<2x128xf32>
    %264 = arith.cmpf one, %263, %263 : vector<2x128xf32>
    %265 = vector.broadcast %cst_198 : f32 to vector<2x128xf32>
    %266 = arith.addf %256, %265 : vector<2x128xf32>
    %267 = math.absf %263 : vector<2x128xf32>
    %cst_199 = arith.constant 0.000000e+00 : f32
    %268 = vector.broadcast %cst_199 : f32 to vector<2x128xf32>
    %269 = arith.subf %268, %267 : vector<2x128xf32>
    %270 = math.exp %269 : vector<2x128xf32>
    %271 = math.log1p %270 : vector<2x128xf32>
    %272 = arith.addf %261, %271 : vector<2x128xf32>
    %273 = arith.select %264, %266, %272 : vector<2x128xi1>, vector<2x128xf32>
    %274 = arith.select %259, %256, %273 : vector<2x128xi1>, vector<2x128xf32>
    %c0_200 = arith.constant 0 : index
    %c0_201 = arith.constant 0 : index
    %275 = vector.load %arg15[%c0_200, %c0_201] : memref<2x128xf32, #tpu.memory_space<vmem>>, vector<2x128xf32>
    tpu.vector_store %arg15[%c0_200, %c0_201], %274 {strides = array<i32>} : memref<2x128xf32, #tpu.memory_space<vmem>>, vector<2x128xf32>,
    return
  }
  func.func @transform_0(%arg0: i32) -> (i32, i32, i32) {
    %c0_i32 = arith.constant 0 : i32
    %c0_i32_0 = arith.constant 0 : i32
    %c0_i32_1 = arith.constant 0 : i32
    return %c0_i32, %arg0, %c0_i32_0 : i32, i32, i32
  }
  func.func @transform_1(%arg0: i32) -> (i32, i32) {
    %c0_i32 = arith.constant 0 : i32
    %c0_i32_0 = arith.constant 0 : i32
    %c0_i32_1 = arith.constant 0 : i32
    return %c0_i32, %c0_i32_0 : i32, i32
  }
  func.func @transform_2(%arg0: i32) -> (i32, i32, i32) {
    %c0_i32 = arith.constant 0 : i32
    %c0_i32_0 = arith.constant 0 : i32
    %c0_i32_1 = arith.constant 0 : i32
    %c0_i32_2 = arith.constant 0 : i32
    return %c0_i32, %c0_i32_0, %c0_i32_1 : i32, i32, i32
  }
  func.func @transform_3(%arg0: i32) -> (i32, i32, i32) {
    %c0_i32 = arith.constant 0 : i32
    %c0_i32_0 = arith.constant 0 : i32
    %c0_i32_1 = arith.constant 0 : i32
    %c0_i32_2 = arith.constant 0 : i32
    return %c0_i32, %c0_i32_0, %c0_i32_1 : i32, i32, i32
  }
  func.func @transform_4(%arg0: i32) -> (i32, i32, i32) {
    %c0_i32 = arith.constant 0 : i32
    %c0_i32_0 = arith.constant 0 : i32
    %c0_i32_1 = arith.constant 0 : i32
    %c0_i32_2 = arith.constant 0 : i32
    return %c0_i32, %c0_i32_0, %c0_i32_1 : i32, i32, i32
  }
  func.func @transform_5(%arg0: i32) -> (i32, i32) {
    %c0_i32 = arith.constant 0 : i32
    %c0_i32_0 = arith.constant 0 : i32
    %c0_i32_1 = arith.constant 0 : i32
    return %c0_i32, %c0_i32_0 : i32, i32
  }
  func.func @transform_6(%arg0: i32) -> (i32, i32, i32) {
    %c0_i32 = arith.constant 0 : i32
    %c0_i32_0 = arith.constant 0 : i32
    %c0_i32_1 = arith.constant 0 : i32
    %c0_i32_2 = arith.constant 0 : i32
    return %c0_i32, %c0_i32_0, %c0_i32_1 : i32, i32, i32
  }
  func.func @transform_7(%arg0: i32) -> (i32, i32, i32) {
    %c0_i32 = arith.constant 0 : i32
    %c0_i32_0 = arith.constant 0 : i32
    %c0_i32_1 = arith.constant 0 : i32
    %c0_i32_2 = arith.constant 0 : i32
    return %c0_i32, %c0_i32_0, %c0_i32_1 : i32, i32, i32
  }
  func.func @transform_8(%arg0: i32) -> (i32, i32, i32) {
    %c0_i32 = arith.constant 0 : i32
    %c0_i32_0 = arith.constant 0 : i32
    %c0_i32_1 = arith.constant 0 : i32
    %c0_i32_2 = arith.constant 0 : i32
    return %c0_i32, %c0_i32_0, %c0_i32_1 : i32, i32, i32
  }
  func.func @transform_9(%arg0: i32) -> (i32, i32) {
    %c0_i32 = arith.constant 0 : i32
    %c0_i32_0 = arith.constant 0 : i32
    %c0_i32_1 = arith.constant 0 : i32
    return %c0_i32, %c0_i32_0 : i32, i32
  }
  func.func @transform_10(%arg0: i32) -> (i32, i32, i32) {
    %c0_i32 = arith.constant 0 : i32
    %c0_i32_0 = arith.constant 0 : i32
    %c0_i32_1 = arith.constant 0 : i32
    %c0_i32_2 = arith.constant 0 : i32
    return %c0_i32, %c0_i32_0, %c0_i32_1 : i32, i32, i32
  }
  func.func @transform_11(%arg0: i32) -> (i32, i32, i32) {
    %c0_i32 = arith.constant 0 : i32
    %c0_i32_0 = arith.constant 0 : i32
    %c0_i32_1 = arith.constant 0 : i32
    %c0_i32_2 = arith.constant 0 : i32
    return %c0_i32, %c0_i32_0, %c0_i32_1 : i32, i32, i32
  }
  func.func @transform_12(%arg0: i32) -> (i32, i32) {
    %c0_i32 = arith.constant 0 : i32
    %c0_i32_0 = arith.constant 0 : i32
    %c0_i32_1 = arith.constant 0 : i32
    return %c0_i32, %c0_i32_0 : i32, i32
  }
  func.func @transform_13(%arg0: i32) -> (i32, i32) {
    %c0_i32 = arith.constant 0 : i32
    %c0_i32_0 = arith.constant 0 : i32
    %c0_i32_1 = arith.constant 0 : i32
    return %c0_i32, %c0_i32_0 : i32, i32
  }
  func.func @transform_14(%arg0: i32) -> (i32, i32) {
    %c0_i32 = arith.constant 0 : i32
    %c0_i32_0 = arith.constant 0 : i32
    return %arg0, %c0_i32 : i32, i32
  }
}

</mosaic_0001>

<llo_original>
// kernel: image_encoder_forward.1
$region0: #{image_encoder_forward.1}
  #allocation0 [shape = 'u32[]', space=smem, size = 0x4, offset = 0x4, fixed_abs, tag = 'smem constant byte address 0x4 - core index']
  #allocation1 [shape = 'u32[144,128]{1,0:T(1,128)}', space=vmem, size = 0x12000, scoped, tag = 'internal scratch']
  #allocation2 [shape = 'bf16[8,2,256]{2,1,0:T(2,128)(2,1)}', space=vmem, size = 0x2000, scoped, tag = 'scratch operand']
  #allocation3 [shape = 'bf16[4,2,256]{2,1,0:T(2,128)(2,1)}', space=vmem, size = 0x1000, scoped, tag = 'scratch operand']
  %s0 = inlined_call_operand.vmem [shape: bf16[8,2,217], index: 0, kind: input, shape index: {}]
  %s1 = inlined_call_operand.vmem [shape: bf16[217,256], index: 1, kind: input, shape index: {}]
  %s2 = inlined_call_operand.vmem [shape: f32[8,1,256], index: 2, kind: input, shape index: {}]
  %s3 = inlined_call_operand.vmem [shape: f32[8,1,256], index: 3, kind: input, shape index: {}]
  %s4 = inlined_call_operand.vmem [shape: bf16[3,256,256], index: 4, kind: input, shape index: {}]
  %s5 = inlined_call_operand.vmem [shape: f32[1,256], index: 5, kind: input, shape index: {}]
  %s6 = inlined_call_operand.vmem [shape: f32[4,1,256], index: 6, kind: input, shape index: {}]
  %s7 = inlined_call_operand.vmem [shape: f32[4,1,256], index: 7, kind: input, shape index: {}]
  %s8 = inlined_call_operand.hbm [shape: bf16[3,256,256], index: 8, kind: input, shape index: {}]
  %s9 = inlined_call_operand.vmem [shape: f32[1,256], index: 9, kind: input, shape index: {}]
  %s10 = inlined_call_operand.vmem [shape: f32[2,1,256], index: 10, kind: input, shape index: {}]
  %s11 = inlined_call_operand.vmem [shape: f32[2,1,256], index: 11, kind: input, shape index: {}]
  %s12 = inlined_call_operand.vmem [shape: bf16[512,128], index: 12, kind: input, shape index: {}]
  %s13 = inlined_call_operand.vmem [shape: f32[1,128], index: 13, kind: input, shape index: {}]
  %s14 = inlined_call_operand.vmem [shape: f32[2,128], index: 14, kind: output, shape index: {}]
  %s15 = sld [smem:[#allocation0]]
  $region70: #{image_encoder_forward.1} parent=0
    _
  %s17 = ssub.s32 1, %s15
  %s18 = scalar_select 0, %s17, %s15
  $region1: #{image_encoder_forward.1} parent=0
    #allocation4 [shape = 'u8[393216]{0}', space=vmem, size = 0x60000, scoped, tag = 'input window, operand 8, single buffered']
    #allocation5 [shape = 's32[1]{0}', space=sflag, size = 0x4, scoped, tag = 'scoped memory for image_encoder_forward.1']
    %19 = vsyncpa [#allocation5], 0
    // Predicated region
    $region2: #{image_encoder_forward.1} parent=1 // pred_check
      _
    $region3: #{image_encoder_forward.1} parent=1 // pred_check_branch
      %21 = sbr.rel (0) target = $region5
    $region4: #{image_encoder_forward.1} parent=1 // pred_region
      _
    $region5: #{image_encoder_forward.1} parent=1 // pred_fallthru
      _
    // Predicated region
    $region6: #{image_encoder_forward.1} parent=1 // pred_check
      _
    $region7: #{image_encoder_forward.1} parent=1 // pred_check_branch
      %23 = sbr.rel (0) target = $region9
    $region8: #{image_encoder_forward.1} parent=1 // pred_region
      _
    $region9: #{image_encoder_forward.1} parent=1 // pred_fallthru
      _
    // Predicated region
    $region10: #{image_encoder_forward.1} parent=1 // pred_check
      _
    $region11: #{image_encoder_forward.1} parent=1 // pred_check_branch
      %25 = sbr.rel (0) target = $region13
    $region12: #{image_encoder_forward.1} parent=1 // pred_region
      _
    $region13: #{image_encoder_forward.1} parent=1 // pred_fallthru
      _
    // Predicated region
    $region14: #{image_encoder_forward.1} parent=1 // pred_check
      _
    $region15: #{image_encoder_forward.1} parent=1 // pred_check_branch
      %27 = sbr.rel (0) target = $region17
    $region16: #{image_encoder_forward.1} parent=1 // pred_region
      _
    $region17: #{image_encoder_forward.1} parent=1 // pred_fallthru
      _
    // Predicated region
    $region18: #{image_encoder_forward.1} parent=1 // pred_check
      _
    $region19: #{image_encoder_forward.1} parent=1 // pred_check_branch
      %29 = sbr.rel (0) target = $region21
    $region20: #{image_encoder_forward.1} parent=1 // pred_region
      _
    $region21: #{image_encoder_forward.1} parent=1 // pred_fallthru
      _
    // Predicated region
    $region22: #{image_encoder_forward.1} parent=1 // pred_check
      _
    $region23: #{image_encoder_forward.1} parent=1 // pred_check_branch
      %31 = sbr.rel (0) target = $region25
    $region24: #{image_encoder_forward.1} parent=1 // pred_region
      _
    $region25: #{image_encoder_forward.1} parent=1 // pred_fallthru
      _
    // Predicated region
    $region26: #{image_encoder_forward.1} parent=1 // pred_check
      _
    $region27: #{image_encoder_forward.1} parent=1 // pred_check_branch
      %33 = sbr.rel (0) target = $region29
    $region28: #{image_encoder_forward.1} parent=1 // pred_region
      _
    $region29: #{image_encoder_forward.1} parent=1 // pred_fallthru
      _
    // Predicated region
    $region30: #{image_encoder_forward.1} parent=1 // pred_check
      _
    $region31: #{image_encoder_forward.1} parent=1 // pred_check_branch
      %35 = sbr.rel (0) target = $region33
    $region32: #{image_encoder_forward.1} parent=1 // pred_region
      _
    $region33: #{image_encoder_forward.1} parent=1 // pred_fallthru
      _
    // Predicated region
    $region34: #{image_encoder_forward.1} parent=1 // pred_check
      _
    $region35: #{image_encoder_forward.1} parent=1 // pred_check_branch
      %37 = sbr.rel (0) target = $region37
    $region36: #{image_encoder_forward.1} parent=1 // pred_region
      %s39 = ssub.s32 12288, 12288
      %40 = vsyncadd [#allocation5], %s39
      %s41 = sshll.u32 [#allocation4], 4
      %s42 = int_to_ptr.vmem [resolvable:$true] %s41
      %47 = dma.hbm_to_vmem [thread:$0]  %s8, 12288, %s42, [#allocation5], 128, 128, 8
    $region37: #{image_encoder_forward.1} parent=1 // pred_fallthru
      _
    // Predicated region
    $region38: #{image_encoder_forward.1} parent=1 // pred_check
      _
    $region39: #{image_encoder_forward.1} parent=1 // pred_check_branch
      %49 = sbr.rel (0) target = $region41
    $region40: #{image_encoder_forward.1} parent=1 // pred_region
      _
    $region41: #{image_encoder_forward.1} parent=1 // pred_fallthru
      _
    // Predicated region
    $region42: #{image_encoder_forward.1} parent=1 // pred_check
      _
    $region43: #{image_encoder_forward.1} parent=1 // pred_check_branch
      %51 = sbr.rel (0) target = $region45
    $region44: #{image_encoder_forward.1} parent=1 // pred_region
      _
    $region45: #{image_encoder_forward.1} parent=1 // pred_fallthru
      _
    // Predicated region
    $region46: #{image_encoder_forward.1} parent=1 // pred_check
      _
    $region47: #{image_encoder_forward.1} parent=1 // pred_check_branch
      %53 = sbr.rel (0) target = $region49
    $region48: #{image_encoder_forward.1} parent=1 // pred_region
      _
    $region49: #{image_encoder_forward.1} parent=1 // pred_fallthru
      _
    // Predicated region
    $region50: #{image_encoder_forward.1} parent=1 // pred_check
      _
    $region51: #{image_encoder_forward.1} parent=1 // pred_check_branch
      %55 = sbr.rel (0) target = $region53
    $region52: #{image_encoder_forward.1} parent=1 // pred_region
      _
    $region53: #{image_encoder_forward.1} parent=1 // pred_fallthru
      _
    // Predicated region
    $region54: #{image_encoder_forward.1} parent=1 // pred_check
      _
    $region55: #{image_encoder_forward.1} parent=1 // pred_check_branch
      %57 = sbr.rel (0) target = $region57
    $region56: #{image_encoder_forward.1} parent=1 // pred_region
      _
    $region57: #{image_encoder_forward.1} parent=1 // pred_fallthru
      _
    // Predicated region
    $region58: #{image_encoder_forward.1} parent=1 // pred_check
      _
    $region59: #{image_encoder_forward.1} parent=1 // pred_check_branch
      %59 = sbr.rel (0) target = $region61
    $region60: #{image_encoder_forward.1} parent=1 // pred_region
      %60 = dma.done [#allocation5], 12288
    $region61: #{image_encoder_forward.1} parent=1 // pred_fallthru
      _
    %v62 = vld [vmem:[%s1] sm:$0xff]
    %v63 = vld [vmem:[%s1 + $0x8] sm:$0xff]
    %v64 = vld [vmem:[%s1 + $0x10] sm:$0xff]
    %v65 = vld [vmem:[%s1 + $0x18] sm:$0xff]
    %v66 = vld [vmem:[%s1 + $0x20] sm:$0xff]
    %v67 = vld [vmem:[%s1 + $0x28] sm:$0xff]
    %v68 = vld [vmem:[%s1 + $0x30] sm:$0xff]
    %v69 = vld [vmem:[%s1 + $0x38] sm:$0xff]
    %v70 = vld [vmem:[%s1 + $0x40] sm:$0xff]
    %v71 = vld [vmem:[%s1 + $0x48] sm:$0xff]
    %v72 = vld [vmem:[%s1 + $0x50] sm:$0xff]
    %v73 = vld [vmem:[%s1 + $0x58] sm:$0xff]
    %v74 = vld [vmem:[%s1 + $0x60] sm:$0xff]
    %v75 = vld [vmem:[%s1 + $0x68] sm:$0xff]
    %v76 = vld [vmem:[%s1 + $0x70] sm:$0xff]
    %v77 = vld [vmem:[%s1 + $0x78] sm:$0xff]
    %v78 = vld [vmem:[%s1 + $0x80] sm:$0xff]
    %v79 = vld [vmem:[%s1 + $0x88] sm:$0xff]
    %v80 = vld [vmem:[%s1 + $0x90] sm:$0xff]
    %v81 = vld [vmem:[%s1 + $0x98] sm:$0xff]
    %v82 = vld [vmem:[%s1 + $0xa0] sm:$0xff]
    %v83 = vld [vmem:[%s1 + $0xa8] sm:$0xff]
    %v84 = vld [vmem:[%s1 + $0xb0] sm:$0xff]
    %v85 = vld [vmem:[%s1 + $0xb8] sm:$0xff]
    %v86 = vld [vmem:[%s1 + $0xc0] sm:$0xff]
    %v87 = vld [vmem:[%s1 + $0xc8] sm:$0xff]
    %v88 = vld [vmem:[%s1 + $0xd0] sm:$0xff]
    %v89 = vld [vmem:[%s1 + $0xd8] sm:$0x11]
    %v90 = vld [vmem:[%s0] sm:$0x3]
    %v93 = vunpack.c.l.s4 1966171168
    %v94 = vunpack.c.0.s8 %v93
    %v95 = vlaneseq
    %v96 = vshrl.u32 %v95, 7
    %v97 = vsub.s32 %v94, %v96
    %v98 = vrot.slane %v90, %v97
    %v99 = vcombine.high %v98, %v98
    %v101 = vunpack.c.l.s4 1966171168
    %v102 = vunpack.c.0.s8 %v101
    %v103 = vlaneseq
    %v104 = vshrl.u32 %v103, 7
    %v105 = vsub.s32 %v102, %v104
    %v106 = vrot.slane %v98, %v105
    %v108 = vunpack.c.l.s4 1966171168
    %v109 = vunpack.c.0.s8 %v108
    %v110 = vlaneseq
    %v111 = vshrl.u32 %v110, 7
    %v112 = vsub.s32 %v109, %v111
    %v113 = vrot.slane %v99, %v112
    %v143 = vunpack.c.l.b16 %v62
    %v144 = vunpack.c.h.b16 %v62
    %v145 = vunpack.c.l.b16 %v63
    %v146 = vunpack.c.h.b16 %v63
    %v147 = vunpack.c.l.b16 %v64
    %v148 = vunpack.c.h.b16 %v64
    %v149 = vunpack.c.l.b16 %v65
    %v150 = vunpack.c.h.b16 %v65
    %v151 = vunpack.c.l.b16 %v66
    %v152 = vunpack.c.h.b16 %v66
    %v153 = vunpack.c.l.b16 %v67
    %v154 = vunpack.c.h.b16 %v67
    %v155 = vunpack.c.l.b16 %v68
    %v156 = vunpack.c.h.b16 %v68
    %v157 = vunpack.c.l.b16 %v69
    %v158 = vunpack.c.h.b16 %v69
    %v159 = vunpack.c.l.b16 %v70
    %v160 = vunpack.c.h.b16 %v70
    %v161 = vunpack.c.l.b16 %v71
    %v162 = vunpack.c.h.b16 %v71
    %v163 = vunpack.c.l.b16 %v72
    %v164 = vunpack.c.h.b16 %v72
    %v165 = vunpack.c.l.b16 %v73
    %v166 = vunpack.c.h.b16 %v73
    %v167 = vunpack.c.l.b16 %v74
    %v168 = vunpack.c.h.b16 %v74
    %v169 = vunpack.c.l.b16 %v75
    %v170 = vunpack.c.h.b16 %v75
    %v171 = vunpack.c.l.b16 %v76
    %v172 = vunpack.c.h.b16 %v76
    %v173 = vunpack.c.l.b16 %v77
    %v174 = vunpack.c.h.b16 %v77
    %v175 = vunpack.c.l.b16 %v78
    %v176 = vunpack.c.h.b16 %v78
    %v177 = vunpack.c.l.b16 %v79
    %v178 = vunpack.c.h.b16 %v79
    %v179 = vunpack.c.l.b16 %v80
    %v180 = vunpack.c.h.b16 %v80
    %v181 = vunpack.c.l.b16 %v81
    %v182 = vunpack.c.h.b16 %v81
    %v183 = vunpack.c.l.b16 %v82
    %v184 = vunpack.c.h.b16 %v82
    %v185 = vunpack.c.l.b16 %v83
    %v186 = vunpack.c.h.b16 %v83
    %v187 = vunpack.c.l.b16 %v84
    %v188 = vunpack.c.h.b16 %v84
    %v189 = vunpack.c.l.b16 %v85
    %v190 = vunpack.c.h.b16 %v85
    %v191 = vunpack.c.l.b16 %v86
    %v192 = vunpack.c.h.b16 %v86
    %v193 = vunpack.c.l.b16 %v87
    %v194 = vunpack.c.h.b16 %v87
    %v195 = vunpack.c.l.b16 %v88
    %v196 = vunpack.c.h.b16 %v88
    %v197 = vunpack.c.l.b16 %v89
    %v198 = vunpack.c.h.b16 %v89
    %v199 = vpack.c.b16 %v145, %v143
    %v200 = vpack.c.b16 %v146, %v144
    %v201 = vpack.c.b16 %v149, %v147
    %v202 = vpack.c.b16 %v150, %v148
    %v203 = vpack.c.b16 %v153, %v151
    %v204 = vpack.c.b16 %v154, %v152
    %v205 = vpack.c.b16 %v157, %v155
    %v206 = vpack.c.b16 %v158, %v156
    %v207 = vpack.c.b16 %v161, %v159
    %v208 = vpack.c.b16 %v162, %v160
    %v209 = vpack.c.b16 %v165, %v163
    %v210 = vpack.c.b16 %v166, %v164
    %v211 = vpack.c.b16 %v169, %v167
    %v212 = vpack.c.b16 %v170, %v168
    %v213 = vpack.c.b16 %v173, %v171
    %v214 = vpack.c.b16 %v174, %v172
    %v215 = vpack.c.b16 %v177, %v175
    %v216 = vpack.c.b16 %v178, %v176
    %v217 = vpack.c.b16 %v181, %v179
    %v218 = vpack.c.b16 %v182, %v180
    %v219 = vpack.c.b16 %v185, %v183
    %v220 = vpack.c.b16 %v186, %v184
    %v221 = vpack.c.b16 %v189, %v187
    %v222 = vpack.c.b16 %v190, %v188
    %v223 = vpack.c.b16 %v193, %v191
    %v224 = vpack.c.b16 %v194, %v192
    %v225 = vpack.c.b16 %v197, %v195
    %v226 = vpack.c.b16 %v198, %v196
    %vm253 = vcmask 728064
    %v255 = vsel %vm253, %v113, 0
    %vm257 = vcmask 1043456
    %vm258 = vcmask 1044480
    %v259 = vsel %vm257, 4294967295, 65535
    %v260 = vsel %vm258, %v259, 0
    %v262 = vand.u32 %v225, %v260
    %v265 = vand.u32 %v226, %v260
    %267 = vmatprep.subr.bf16.mxu0 %v200
    %268 = vmatpush1.bf16.msra.mxu0 %v199
    %269 = vmatprep.subr.bf16.mxu0 %v202
    %270 = vmatpush1.bf16.msra.mxu0 %v201
    %271 = vmatprep.subr.bf16.mxu0 %v204
    %272 = vmatpush1.bf16.msra.mxu0 %v203
    %273 = vmatprep.subr.bf16.mxu0 %v206
    %274 = vmatpush1.bf16.msra.mxu0 %v205
    %275 = vmatprep.subr.bf16.mxu0 %v208
    %276 = vmatpush1.bf16.msra.mxu0 %v207
    %277 = vmatprep.subr.bf16.mxu0 %v210
    %278 = vmatpush1.bf16.msra.mxu0 %v209
    %279 = vmatprep.subr.bf16.mxu0 %v212
    %280 = vmatpush1.bf16.msra.mxu0 %v211
    %281 = vmatprep.subr.bf16.mxu0 %v214
    %282 = vmatpush1.bf16.msra.mxu0 %v213
    %283 = vmatprep.subr.bf16.mxu0 %v216
    %284 = vmatpush1.bf16.msra.mxu0 %v215
    %285 = vmatprep.subr.bf16.mxu0 %v218
    %286 = vmatpush1.bf16.msra.mxu0 %v217
    %287 = vmatprep.subr.bf16.mxu0 %v220
    %288 = vmatpush1.bf16.msra.mxu0 %v219
    %289 = vmatprep.subr.bf16.mxu0 %v222
    %290 = vmatpush1.bf16.msra.mxu0 %v221
    %291 = vmatprep.subr.bf16.mxu0 %v224
    %292 = vmatpush1.bf16.msra.mxu0 %v223
    %293 = vmatprep.subr.bf16.mxu0 %v265
    %294 = vmatpush1.bf16.msra.mxu0 %v262
    %295 = vmatprep.subr.bf16.mxu0 0
    %296 = vmatpush1.bf16.msra.mxu0 0
    %297 = vmatprep.subr.bf16.mxu0 0
    %298 = vmatpush1.bf16.msra.mxu0 0
    %299 = vmatprep.mubr.bf16.mxu0 %v255
    %300 = vmatmul.mubr.bf16.gmra.mrb[0].mxu0 %v106
    %v301 = vpop.f32.mrb[0].mxu0
    %v302 = vadd.f32 0.0, %v301
    %v303 = vpop.f32.mrb[0].mxu0
    %v304 = vadd.f32 0.0, %v303
    %v305 = vpop.f32.mrb[0].mxu0
    %v306 = vpop.f32.mrb[0].mxu0
    %307 = vdwg.mxu0
    %s308 = scalar_lea.vmem %s0, 2
    %v309 = vld [vmem:[%s308] sm:$0x3]
    %v312 = vunpack.c.l.s4 1966171168
    %v313 = vunpack.c.0.s8 %v312
    %v314 = vlaneseq
    %v315 = vshrl.u32 %v314, 7
    %v316 = vsub.s32 %v313, %v315
    %v317 = vrot.slane %v309, %v316
    %v318 = vcombine.high %v317, %v317
    %v320 = vunpack.c.l.s4 1966171168
    %v321 = vunpack.c.0.s8 %v320
    %v322 = vlaneseq
    %v323 = vshrl.u32 %v322, 7
    %v324 = vsub.s32 %v321, %v323
    %v325 = vrot.slane %v317, %v324
    %v327 = vunpack.c.l.s4 1966171168
    %v328 = vunpack.c.0.s8 %v327
    %v329 = vlaneseq
    %v330 = vshrl.u32 %v329, 7
    %v331 = vsub.s32 %v328, %v330
    %v332 = vrot.slane %v318, %v331
    %v335 = vsel %vm253, %v332, 0
    %337 = vmatprep.subr.bf16.mxu0 %v200
    %338 = vmatpush1.bf16.msra.mxu0 %v199
    %339 = vmatprep.subr.bf16.mxu0 %v202
    %340 = vmatpush1.bf16.msra.mxu0 %v201
    %341 = vmatprep.subr.bf16.mxu0 %v204
    %342 = vmatpush1.bf16.msra.mxu0 %v203
    %343 = vmatprep.subr.bf16.mxu0 %v206
    %344 = vmatpush1.bf16.msra.mxu0 %v205
    %345 = vmatprep.subr.bf16.mxu0 %v208
    %346 = vmatpush1.bf16.msra.mxu0 %v207
    %347 = vmatprep.subr.bf16.mxu0 %v210
    %348 = vmatpush1.bf16.msra.mxu0 %v209
    %349 = vmatprep.subr.bf16.mxu0 %v212
    %350 = vmatpush1.bf16.msra.mxu0 %v211
    %351 = vmatprep.subr.bf16.mxu0 %v214
    %352 = vmatpush1.bf16.msra.mxu0 %v213
    %353 = vmatprep.subr.bf16.mxu0 %v216
    %354 = vmatpush1.bf16.msra.mxu0 %v215
    %355 = vmatprep.subr.bf16.mxu0 %v218
    %356 = vmatpush1.bf16.msra.mxu0 %v217
    %357 = vmatprep.subr.bf16.mxu0 %v220
    %358 = vmatpush1.bf16.msra.mxu0 %v219
    %359 = vmatprep.subr.bf16.mxu0 %v222
    %360 = vmatpush1.bf16.msra.mxu0 %v221
    %361 = vmatprep.subr.bf16.mxu0 %v224
    %362 = vmatpush1.bf16.msra.mxu0 %v223
    %363 = vmatprep.subr.bf16.mxu0 %v265
    %364 = vmatpush1.bf16.msra.mxu0 %v262
    %365 = vmatprep.subr.bf16.mxu0 0
    %366 = vmatpush1.bf16.msra.mxu0 0
    %367 = vmatprep.subr.bf16.mxu0 0
    %368 = vmatpush1.bf16.msra.mxu0 0
    %369 = vmatprep.mubr.bf16.mxu0 %v335
    %370 = vmatmul.mubr.bf16.gmra.mrb[0].mxu0 %v325
    %v371 = vpop.f32.mrb[0].mxu0
    %v372 = vadd.f32 0.0, %v371
    %v373 = vpop.f32.mrb[0].mxu0
    %v374 = vadd.f32 0.0, %v373
    %v375 = vpop.f32.mrb[0].mxu0
    %v376 = vpop.f32.mrb[0].mxu0
    %377 = vdwg.mxu0
    %s378 = scalar_lea.vmem %s0, 4
    %v379 = vld [vmem:[%s378] sm:$0x3]
    %v382 = vunpack.c.l.s4 1966171168
    %v383 = vunpack.c.0.s8 %v382
    %v384 = vlaneseq
    %v385 = vshrl.u32 %v384, 7
    %v386 = vsub.s32 %v383, %v385
    %v387 = vrot.slane %v379, %v386
    %v388 = vcombine.high %v387, %v387
    %v390 = vunpack.c.l.s4 1966171168
    %v391 = vunpack.c.0.s8 %v390
    %v392 = vlaneseq
    %v393 = vshrl.u32 %v392, 7
    %v394 = vsub.s32 %v391, %v393
    %v395 = vrot.slane %v387, %v394
    %v397 = vunpack.c.l.s4 1966171168
    %v398 = vunpack.c.0.s8 %v397
    %v399 = vlaneseq
    %v400 = vshrl.u32 %v399, 7
    %v401 = vsub.s32 %v398, %v400
    %v402 = vrot.slane %v388, %v401
    %v405 = vsel %vm253, %v402, 0
    %407 = vmatprep.subr.bf16.mxu0 %v200
    %408 = vmatpush1.bf16.msra.mxu0 %v199
    %409 = vmatprep.subr.bf16.mxu0 %v202
    %410 = vmatpush1.bf16.msra.mxu0 %v201
    %411 = vmatprep.subr.bf16.mxu0 %v204
    %412 = vmatpush1.bf16.msra.mxu0 %v203
    %413 = vmatprep.subr.bf16.mxu0 %v206
    %414 = vmatpush1.bf16.msra.mxu0 %v205
    %415 = vmatprep.subr.bf16.mxu0 %v208
    %416 = vmatpush1.bf16.msra.mxu0 %v207
    %417 = vmatprep.subr.bf16.mxu0 %v210
    %418 = vmatpush1.bf16.msra.mxu0 %v209
    %419 = vmatprep.subr.bf16.mxu0 %v212
    %420 = vmatpush1.bf16.msra.mxu0 %v211
    %421 = vmatprep.subr.bf16.mxu0 %v214
    %422 = vmatpush1.bf16.msra.mxu0 %v213
    %423 = vmatprep.subr.bf16.mxu0 %v216
    %424 = vmatpush1.bf16.msra.mxu0 %v215
    %425 = vmatprep.subr.bf16.mxu0 %v218
    %426 = vmatpush1.bf16.msra.mxu0 %v217
    %427 = vmatprep.subr.bf16.mxu0 %v220
    %428 = vmatpush1.bf16.msra.mxu0 %v219
    %429 = vmatprep.subr.bf16.mxu0 %v222
    %430 = vmatpush1.bf16.msra.mxu0 %v221
    %431 = vmatprep.subr.bf16.mxu0 %v224
    %432 = vmatpush1.bf16.msra.mxu0 %v223
    %433 = vmatprep.subr.bf16.mxu0 %v265
    %434 = vmatpush1.bf16.msra.mxu0 %v262
    %435 = vmatprep.subr.bf16.mxu0 0
    %436 = vmatpush1.bf16.msra.mxu0 0
    %437 = vmatprep.subr.bf16.mxu0 0
    %438 = vmatpush1.bf16.msra.mxu0 0
    %439 = vmatprep.mubr.bf16.mxu0 %v405
    %440 = vmatmul.mubr.bf16.gmra.mrb[0].mxu0 %v395
    %v441 = vpop.f32.mrb[0].mxu0
    %v442 = vadd.f32 0.0, %v441
    %v443 = vpop.f32.mrb[0].mxu0
    %v444 = vadd.f32 0.0, %v443
    %v445 = vpop.f32.mrb[0].mxu0
    %v446 = vpop.f32.mrb[0].mxu0
    %447 = vdwg.mxu0
    %s448 = scalar_lea.vmem %s0, 6
    %v449 = vld [vmem:[%s448] sm:$0x3]
    %v452 = vunpack.c.l.s4 1966171168
    %v453 = vunpack.c.0.s8 %v452
    %v454 = vlaneseq
    %v455 = vshrl.u32 %v454, 7
    %v456 = vsub.s32 %v453, %v455
    %v457 = vrot.slane %v449, %v456
    %v458 = vcombine.high %v457, %v457
    %v460 = vunpack.c.l.s4 1966171168
    %v461 = vunpack.c.0.s8 %v460
    %v462 = vlaneseq
    %v463 = vshrl.u32 %v462, 7
    %v464 = vsub.s32 %v461, %v463
    %v465 = vrot.slane %v457, %v464
    %v467 = vunpack.c.l.s4 1966171168
    %v468 = vunpack.c.0.s8 %v467
    %v469 = vlaneseq
    %v470 = vshrl.u32 %v469, 7
    %v471 = vsub.s32 %v468, %v470
    %v472 = vrot.slane %v458, %v471
    %v475 = vsel %vm253, %v472, 0
    %477 = vmatprep.subr.bf16.mxu0 %v200
    %478 = vmatpush1.bf16.msra.mxu0 %v199
    %479 = vmatprep.subr.bf16.mxu0 %v202
    %480 = vmatpush1.bf16.msra.mxu0 %v201
    %481 = vmatprep.subr.bf16.mxu0 %v204
    %482 = vmatpush1.bf16.msra.mxu0 %v203
    %483 = vmatprep.subr.bf16.mxu0 %v206
    %484 = vmatpush1.bf16.msra.mxu0 %v205
    %485 = vmatprep.subr.bf16.mxu0 %v208
    %486 = vmatpush1.bf16.msra.mxu0 %v207
    %487 = vmatprep.subr.bf16.mxu0 %v210
    %488 = vmatpush1.bf16.msra.mxu0 %v209
    %489 = vmatprep.subr.bf16.mxu0 %v212
    %490 = vmatpush1.bf16.msra.mxu0 %v211
    %491 = vmatprep.subr.bf16.mxu0 %v214
    %492 = vmatpush1.bf16.msra.mxu0 %v213
    %493 = vmatprep.subr.bf16.mxu0 %v216
    %494 = vmatpush1.bf16.msra.mxu0 %v215
    %495 = vmatprep.subr.bf16.mxu0 %v218
    %496 = vmatpush1.bf16.msra.mxu0 %v217
    %497 = vmatprep.subr.bf16.mxu0 %v220
    %498 = vmatpush1.bf16.msra.mxu0 %v219
    %499 = vmatprep.subr.bf16.mxu0 %v222
    %500 = vmatpush1.bf16.msra.mxu0 %v221
    %501 = vmatprep.subr.bf16.mxu0 %v224
    %502 = vmatpush1.bf16.msra.mxu0 %v223
    %503 = vmatprep.subr.bf16.mxu0 %v265
    %504 = vmatpush1.bf16.msra.mxu0 %v262
    %505 = vmatprep.subr.bf16.mxu0 0
    %506 = vmatpush1.bf16.msra.mxu0 0
    %507 = vmatprep.subr.bf16.mxu0 0
    %508 = vmatpush1.bf16.msra.mxu0 0
    %509 = vmatprep.mubr.bf16.mxu0 %v475
    %510 = vmatmul.mubr.bf16.gmra.mrb[0].mxu0 %v465
    %v511 = vpop.f32.mrb[0].mxu0
    %v512 = vadd.f32 0.0, %v511
    %v513 = vpop.f32.mrb[0].mxu0
    %v514 = vadd.f32 0.0, %v513
    %v515 = vpop.f32.mrb[0].mxu0
    %v516 = vpop.f32.mrb[0].mxu0
    %517 = vdwg.mxu0
    %s518 = scalar_lea.vmem %s0, 8
    %v519 = vld [vmem:[%s518] sm:$0x3]
    %v522 = vunpack.c.l.s4 1966171168
    %v523 = vunpack.c.0.s8 %v522
    %v524 = vlaneseq
    %v525 = vshrl.u32 %v524, 7
    %v526 = vsub.s32 %v523, %v525
    %v527 = vrot.slane %v519, %v526
    %v528 = vcombine.high %v527, %v527
    %v530 = vunpack.c.l.s4 1966171168
    %v531 = vunpack.c.0.s8 %v530
    %v532 = vlaneseq
    %v533 = vshrl.u32 %v532, 7
    %v534 = vsub.s32 %v531, %v533
    %v535 = vrot.slane %v527, %v534
    %v537 = vunpack.c.l.s4 1966171168
    %v538 = vunpack.c.0.s8 %v537
    %v539 = vlaneseq
    %v540 = vshrl.u32 %v539, 7
    %v541 = vsub.s32 %v538, %v540
    %v542 = vrot.slane %v528, %v541
    %v545 = vsel %vm253, %v542, 0
    %547 = vmatprep.subr.bf16.mxu0 %v200
    %548 = vmatpush1.bf16.msra.mxu0 %v199
    %549 = vmatprep.subr.bf16.mxu0 %v202
    %550 = vmatpush1.bf16.msra.mxu0 %v201
    %551 = vmatprep.subr.bf16.mxu0 %v204
    %552 = vmatpush1.bf16.msra.mxu0 %v203
    %553 = vmatprep.subr.bf16.mxu0 %v206
    %554 = vmatpush1.bf16.msra.mxu0 %v205
    %555 = vmatprep.subr.bf16.mxu0 %v208
    %556 = vmatpush1.bf16.msra.mxu0 %v207
    %557 = vmatprep.subr.bf16.mxu0 %v210
    %558 = vmatpush1.bf16.msra.mxu0 %v209
    %559 = vmatprep.subr.bf16.mxu0 %v212
    %560 = vmatpush1.bf16.msra.mxu0 %v211
    %561 = vmatprep.subr.bf16.mxu0 %v214
    %562 = vmatpush1.bf16.msra.mxu0 %v213
    %563 = vmatprep.subr.bf16.mxu0 %v216
    %564 = vmatpush1.bf16.msra.mxu0 %v215
    %565 = vmatprep.subr.bf16.mxu0 %v218
    %566 = vmatpush1.bf16.msra.mxu0 %v217
    %567 = vmatprep.subr.bf16.mxu0 %v220
    %568 = vmatpush1.bf16.msra.mxu0 %v219
    %569 = vmatprep.subr.bf16.mxu0 %v222
    %570 = vmatpush1.bf16.msra.mxu0 %v221
    %571 = vmatprep.subr.bf16.mxu0 %v224
    %572 = vmatpush1.bf16.msra.mxu0 %v223
    %573 = vmatprep.subr.bf16.mxu0 %v265
    %574 = vmatpush1.bf16.msra.mxu0 %v262
    %575 = vmatprep.subr.bf16.mxu0 0
    %576 = vmatpush1.bf16.msra.mxu0 0
    %577 = vmatprep.subr.bf16.mxu0 0
    %578 = vmatpush1.bf16.msra.mxu0 0
    %579 = vmatprep.mubr.bf16.mxu0 %v545
    %580 = vmatmul.mubr.bf16.gmra.mrb[0].mxu0 %v535
    %v581 = vpop.f32.mrb[0].mxu0
    %v582 = vadd.f32 0.0, %v581
    %v583 = vpop.f32.mrb[0].mxu0
    %v584 = vadd.f32 0.0, %v583
    %v585 = vpop.f32.mrb[0].mxu0
    %v586 = vpop.f32.mrb[0].mxu0
    %587 = vdwg.mxu0
    %s588 = scalar_lea.vmem %s0, 10
    %v589 = vld [vmem:[%s588] sm:$0x3]
    %v592 = vunpack.c.l.s4 1966171168
    %v593 = vunpack.c.0.s8 %v592
    %v594 = vlaneseq
    %v595 = vshrl.u32 %v594, 7
    %v596 = vsub.s32 %v593, %v595
    %v597 = vrot.slane %v589, %v596
    %v598 = vcombine.high %v597, %v597
    %v600 = vunpack.c.l.s4 1966171168
    %v601 = vunpack.c.0.s8 %v600
    %v602 = vlaneseq
    %v603 = vshrl.u32 %v602, 7
    %v604 = vsub.s32 %v601, %v603
    %v605 = vrot.slane %v597, %v604
    %v607 = vunpack.c.l.s4 1966171168
    %v608 = vunpack.c.0.s8 %v607
    %v609 = vlaneseq
    %v610 = vshrl.u32 %v609, 7
    %v611 = vsub.s32 %v608, %v610
    %v612 = vrot.slane %v598, %v611
    %v615 = vsel %vm253, %v612, 0
    %617 = vmatprep.subr.bf16.mxu0 %v200
    %618 = vmatpush1.bf16.msra.mxu0 %v199
    %619 = vmatprep.subr.bf16.mxu0 %v202
    %620 = vmatpush1.bf16.msra.mxu0 %v201
    %621 = vmatprep.subr.bf16.mxu0 %v204
    %622 = vmatpush1.bf16.msra.mxu0 %v203
    %623 = vmatprep.subr.bf16.mxu0 %v206
    %624 = vmatpush1.bf16.msra.mxu0 %v205
    %625 = vmatprep.subr.bf16.mxu0 %v208
    %626 = vmatpush1.bf16.msra.mxu0 %v207
    %627 = vmatprep.subr.bf16.mxu0 %v210
    %628 = vmatpush1.bf16.msra.mxu0 %v209
    %629 = vmatprep.subr.bf16.mxu0 %v212
    %630 = vmatpush1.bf16.msra.mxu0 %v211
    %631 = vmatprep.subr.bf16.mxu0 %v214
    %632 = vmatpush1.bf16.msra.mxu0 %v213
    %633 = vmatprep.subr.bf16.mxu0 %v216
    %634 = vmatpush1.bf16.msra.mxu0 %v215
    %635 = vmatprep.subr.bf16.mxu0 %v218
    %636 = vmatpush1.bf16.msra.mxu0 %v217
    %637 = vmatprep.subr.bf16.mxu0 %v220
    %638 = vmatpush1.bf16.msra.mxu0 %v219
    %639 = vmatprep.subr.bf16.mxu0 %v222
    %640 = vmatpush1.bf16.msra.mxu0 %v221
    %641 = vmatprep.subr.bf16.mxu0 %v224
    %642 = vmatpush1.bf16.msra.mxu0 %v223
    %643 = vmatprep.subr.bf16.mxu0 %v265
    %644 = vmatpush1.bf16.msra.mxu0 %v262
    %645 = vmatprep.subr.bf16.mxu0 0
    %646 = vmatpush1.bf16.msra.mxu0 0
    %647 = vmatprep.subr.bf16.mxu0 0
    %648 = vmatpush1.bf16.msra.mxu0 0
    %649 = vmatprep.mubr.bf16.mxu0 %v615
    %650 = vmatmul.mubr.bf16.gmra.mrb[0].mxu0 %v605
    %v651 = vpop.f32.mrb[0].mxu0
    %v652 = vadd.f32 0.0, %v651
    %v653 = vpop.f32.mrb[0].mxu0
    %v654 = vadd.f32 0.0, %v653
    %v655 = vpop.f32.mrb[0].mxu0
    %v656 = vpop.f32.mrb[0].mxu0
    %657 = vdwg.mxu0
    %s658 = scalar_lea.vmem %s0, 12
    %v659 = vld [vmem:[%s658] sm:$0x3]
    %v662 = vunpack.c.l.s4 1966171168
    %v663 = vunpack.c.0.s8 %v662
    %v664 = vlaneseq
    %v665 = vshrl.u32 %v664, 7
    %v666 = vsub.s32 %v663, %v665
    %v667 = vrot.slane %v659, %v666
    %v668 = vcombine.high %v667, %v667
    %v670 = vunpack.c.l.s4 1966171168
    %v671 = vunpack.c.0.s8 %v670
    %v672 = vlaneseq
    %v673 = vshrl.u32 %v672, 7
    %v674 = vsub.s32 %v671, %v673
    %v675 = vrot.slane %v667, %v674
    %v677 = vunpack.c.l.s4 1966171168
    %v678 = vunpack.c.0.s8 %v677
    %v679 = vlaneseq
    %v680 = vshrl.u32 %v679, 7
    %v681 = vsub.s32 %v678, %v680
    %v682 = vrot.slane %v668, %v681
    %v685 = vsel %vm253, %v682, 0
    %687 = vmatprep.subr.bf16.mxu0 %v200
    %688 = vmatpush1.bf16.msra.mxu0 %v199
    %689 = vmatprep.subr.bf16.mxu0 %v202
    %690 = vmatpush1.bf16.msra.mxu0 %v201
    %691 = vmatprep.subr.bf16.mxu0 %v204
    %692 = vmatpush1.bf16.msra.mxu0 %v203
    %693 = vmatprep.subr.bf16.mxu0 %v206
    %694 = vmatpush1.bf16.msra.mxu0 %v205
    %695 = vmatprep.subr.bf16.mxu0 %v208
    %696 = vmatpush1.bf16.msra.mxu0 %v207
    %697 = vmatprep.subr.bf16.mxu0 %v210
    %698 = vmatpush1.bf16.msra.mxu0 %v209
    %699 = vmatprep.subr.bf16.mxu0 %v212
    %700 = vmatpush1.bf16.msra.mxu0 %v211
    %701 = vmatprep.subr.bf16.mxu0 %v214
    %702 = vmatpush1.bf16.msra.mxu0 %v213
    %703 = vmatprep.subr.bf16.mxu0 %v216
    %704 = vmatpush1.bf16.msra.mxu0 %v215
    %705 = vmatprep.subr.bf16.mxu0 %v218
    %706 = vmatpush1.bf16.msra.mxu0 %v217
    %707 = vmatprep.subr.bf16.mxu0 %v220
    %708 = vmatpush1.bf16.msra.mxu0 %v219
    %709 = vmatprep.subr.bf16.mxu0 %v222
    %710 = vmatpush1.bf16.msra.mxu0 %v221
    %711 = vmatprep.subr.bf16.mxu0 %v224
    %712 = vmatpush1.bf16.msra.mxu0 %v223
    %713 = vmatprep.subr.bf16.mxu0 %v265
    %714 = vmatpush1.bf16.msra.mxu0 %v262
    %715 = vmatprep.subr.bf16.mxu0 0
    %716 = vmatpush1.bf16.msra.mxu0 0
    %717 = vmatprep.subr.bf16.mxu0 0
    %718 = vmatpush1.bf16.msra.mxu0 0
    %719 = vmatprep.mubr.bf16.mxu0 %v685
    %720 = vmatmul.mubr.bf16.gmra.mrb[0].mxu0 %v675
    %v721 = vpop.f32.mrb[0].mxu0
    %v722 = vadd.f32 0.0, %v721
    %v723 = vpop.f32.mrb[0].mxu0
    %v724 = vadd.f32 0.0, %v723
    %v725 = vpop.f32.mrb[0].mxu0
    %v726 = vpop.f32.mrb[0].mxu0
    %727 = vdwg.mxu0
    %s728 = scalar_lea.vmem %s0, 14
    %v729 = vld [vmem:[%s728] sm:$0x3]
    %v732 = vunpack.c.l.s4 1966171168
    %v733 = vunpack.c.0.s8 %v732
    %v734 = vlaneseq
    %v735 = vshrl.u32 %v734, 7
    %v736 = vsub.s32 %v733, %v735
    %v737 = vrot.slane %v729, %v736
    %v738 = vcombine.high %v737, %v737
    %v740 = vunpack.c.l.s4 1966171168
    %v741 = vunpack.c.0.s8 %v740
    %v742 = vlaneseq
    %v743 = vshrl.u32 %v742, 7
    %v744 = vsub.s32 %v741, %v743
    %v745 = vrot.slane %v737, %v744
    %v747 = vunpack.c.l.s4 1966171168
    %v748 = vunpack.c.0.s8 %v747
    %v749 = vlaneseq
    %v750 = vshrl.u32 %v749, 7
    %v751 = vsub.s32 %v748, %v750
    %v752 = vrot.slane %v738, %v751
    %v755 = vsel %vm253, %v752, 0
    %757 = vmatprep.subr.bf16.mxu0 %v200
    %758 = vmatpush1.bf16.msra.mxu0 %v199
    %759 = vmatprep.subr.bf16.mxu0 %v202
    %760 = vmatpush1.bf16.msra.mxu0 %v201
    %761 = vmatprep.subr.bf16.mxu0 %v204
    %762 = vmatpush1.bf16.msra.mxu0 %v203
    %763 = vmatprep.subr.bf16.mxu0 %v206
    %764 = vmatpush1.bf16.msra.mxu0 %v205
    %765 = vmatprep.subr.bf16.mxu0 %v208
    %766 = vmatpush1.bf16.msra.mxu0 %v207
    %767 = vmatprep.subr.bf16.mxu0 %v210
    %768 = vmatpush1.bf16.msra.mxu0 %v209
    %769 = vmatprep.subr.bf16.mxu0 %v212
    %770 = vmatpush1.bf16.msra.mxu0 %v211
    %771 = vmatprep.subr.bf16.mxu0 %v214
    %772 = vmatpush1.bf16.msra.mxu0 %v213
    %773 = vmatprep.subr.bf16.mxu0 %v216
    %774 = vmatpush1.bf16.msra.mxu0 %v215
    %775 = vmatprep.subr.bf16.mxu0 %v218
    %776 = vmatpush1.bf16.msra.mxu0 %v217
    %777 = vmatprep.subr.bf16.mxu0 %v220
    %778 = vmatpush1.bf16.msra.mxu0 %v219
    %779 = vmatprep.subr.bf16.mxu0 %v222
    %780 = vmatpush1.bf16.msra.mxu0 %v221
    %781 = vmatprep.subr.bf16.mxu0 %v224
    %782 = vmatpush1.bf16.msra.mxu0 %v223
    %783 = vmatprep.subr.bf16.mxu0 %v265
    %784 = vmatpush1.bf16.msra.mxu0 %v262
    %785 = vmatprep.subr.bf16.mxu0 0
    %786 = vmatpush1.bf16.msra.mxu0 0
    %787 = vmatprep.subr.bf16.mxu0 0
    %788 = vmatpush1.bf16.msra.mxu0 0
    %789 = vmatprep.mubr.bf16.mxu0 %v755
    %790 = vmatmul.mubr.bf16.gmra.mrb[0].mxu0 %v745
    %v791 = vpop.f32.mrb[0].mxu0
    %v792 = vadd.f32 0.0, %v791
    %v793 = vpop.f32.mrb[0].mxu0
    %v794 = vadd.f32 0.0, %v793
    %v795 = vpop.f32.mrb[0].mxu0
    %v796 = vpop.f32.mrb[0].mxu0
    %797 = vdwg.mxu0
    %v798 = vld [vmem:[%s2] sm:$0x3]
    %v799 = vld [vmem:[%s2 + $0x2] sm:$0x3]
    %v800 = vld [vmem:[%s2 + $0x4] sm:$0x3]
    %v801 = vld [vmem:[%s2 + $0x6] sm:$0x3]
    %v802 = vld [vmem:[%s2 + $0x8] sm:$0x3]
    %v803 = vld [vmem:[%s2 + $0xa] sm:$0x3]
    %v804 = vld [vmem:[%s2 + $0xc] sm:$0x3]
    %v805 = vld [vmem:[%s2 + $0xe] sm:$0x3]
    %v806 = vld [vmem:[%s3] sm:$0x3]
    %v807 = vld [vmem:[%s3 + $0x2] sm:$0x3]
    %v808 = vld [vmem:[%s3 + $0x4] sm:$0x3]
    %v809 = vld [vmem:[%s3 + $0x6] sm:$0x3]
    %v810 = vld [vmem:[%s3 + $0x8] sm:$0x3]
    %v811 = vld [vmem:[%s3 + $0xa] sm:$0x3]
    %v812 = vld [vmem:[%s3 + $0xc] sm:$0x3]
    %v813 = vld [vmem:[%s3 + $0xe] sm:$0x3]
    %vm814 = vcmask 1041408
    %v815 = vsel %vm814, %v302, 0.0
    %v816 = vsel %vm814, %v304, 0.0
    %v817 = vadd.f32 %v815, %v816
    %818 = vadd.xlane.f32.xlu0 %v817
    %v819 = vpop.xlane.xlu0 %818
    %v820 = vsel %vm814, %v372, 0.0
    %v821 = vsel %vm814, %v374, 0.0
    %v822 = vadd.f32 %v820, %v821
    %823 = vadd.xlane.f32.xlu0 %v822
    %v824 = vpop.xlane.xlu0 %823
    %v825 = vsel %vm814, %v442, 0.0
    %v826 = vsel %vm814, %v444, 0.0
    %v827 = vadd.f32 %v825, %v826
    %828 = vadd.xlane.f32.xlu0 %v827
    %v829 = vpop.xlane.xlu0 %828
    %v830 = vsel %vm814, %v512, 0.0
    %v831 = vsel %vm814, %v514, 0.0
    %v832 = vadd.f32 %v830, %v831
    %833 = vadd.xlane.f32.xlu0 %v832
    %v834 = vpop.xlane.xlu0 %833
    %v835 = vsel %vm814, %v582, 0.0
    %v836 = vsel %vm814, %v584, 0.0
    %v837 = vadd.f32 %v835, %v836
    %838 = vadd.xlane.f32.xlu0 %v837
    %v839 = vpop.xlane.xlu0 %838
    %v840 = vsel %vm814, %v652, 0.0
    %v841 = vsel %vm814, %v654, 0.0
    %v842 = vadd.f32 %v840, %v841
    %843 = vadd.xlane.f32.xlu0 %v842
    %v844 = vpop.xlane.xlu0 %843
    %v845 = vsel %vm814, %v722, 0.0
    %v846 = vsel %vm814, %v724, 0.0
    %v847 = vadd.f32 %v845, %v846
    %848 = vadd.xlane.f32.xlu0 %v847
    %v849 = vpop.xlane.xlu0 %848
    %v850 = vsel %vm814, %v792, 0.0
    %v851 = vsel %vm814, %v794, 0.0
    %v852 = vadd.f32 %v850, %v851
    %853 = vadd.xlane.f32.xlu0 %v852
    %v854 = vpop.xlane.xlu0 %853
    %v855 = vsel %vm814, %v819, 0.0
    %v856 = vsel %vm814, %v824, 0.0
    %v857 = vadd.f32 %v855, %v856
    %v858 = vsel %vm814, %v829, 0.0
    %v859 = vadd.f32 %v857, %v858
    %v860 = vsel %vm814, %v834, 0.0
    %v861 = vadd.f32 %v859, %v860
    %v862 = vsel %vm814, %v839, 0.0
    %v863 = vadd.f32 %v861, %v862
    %v864 = vsel %vm814, %v844, 0.0
    %v865 = vadd.f32 %v863, %v864
    %v866 = vsel %vm814, %v849, 0.0
    %v867 = vadd.f32 %v865, %v866
    %v868 = vsel %vm814, %v854, 0.0
    %v869 = vadd.f32 %v867, %v868
    %v870 = vmul.f32 %v869, 0.00048828125
    %v871 = vsub.f32 %v302, %v870
    %v872 = vsub.f32 %v304, %v870
    %v873 = vsub.f32 %v372, %v870
    %v874 = vsub.f32 %v374, %v870
    %v875 = vsub.f32 %v442, %v870
    %v876 = vsub.f32 %v444, %v870
    %v877 = vsub.f32 %v512, %v870
    %v878 = vsub.f32 %v514, %v870
    %v879 = vsub.f32 %v582, %v870
    %v880 = vsub.f32 %v584, %v870
    %v881 = vsub.f32 %v652, %v870
    %v882 = vsub.f32 %v654, %v870
    %v883 = vsub.f32 %v722, %v870
    %v884 = vsub.f32 %v724, %v870
    %v885 = vsub.f32 %v792, %v870
    %v886 = vsub.f32 %v794, %v870
    %v887 = vmul.f32 %v871, %v871
    %v888 = vmul.f32 %v872, %v872
    %v889 = vmul.f32 %v873, %v873
    %v890 = vmul.f32 %v874, %v874
    %v891 = vmul.f32 %v875, %v875
    %v892 = vmul.f32 %v876, %v876
    %v893 = vmul.f32 %v877, %v877
    %v894 = vmul.f32 %v878, %v878
    %v895 = vmul.f32 %v879, %v879
    %v896 = vmul.f32 %v880, %v880
    %v897 = vmul.f32 %v881, %v881
    %v898 = vmul.f32 %v882, %v882
    %v899 = vmul.f32 %v883, %v883
    %v900 = vmul.f32 %v884, %v884
    %v901 = vmul.f32 %v885, %v885
    %v902 = vmul.f32 %v886, %v886
    %v903 = vsel %vm814, %v887, 0.0
    %v904 = vsel %vm814, %v888, 0.0
    %v905 = vadd.f32 %v903, %v904
    %906 = vadd.xlane.f32.xlu0 %v905
    %v907 = vpop.xlane.xlu0 %906
    %v908 = vsel %vm814, %v889, 0.0
    %v909 = vsel %vm814, %v890, 0.0
    %v910 = vadd.f32 %v908, %v909
    %911 = vadd.xlane.f32.xlu0 %v910
    %v912 = vpop.xlane.xlu0 %911
    %v913 = vsel %vm814, %v891, 0.0
    %v914 = vsel %vm814, %v892, 0.0
    %v915 = vadd.f32 %v913, %v914
    %916 = vadd.xlane.f32.xlu0 %v915
    %v917 = vpop.xlane.xlu0 %916
    %v918 = vsel %vm814, %v893, 0.0
    %v919 = vsel %vm814, %v894, 0.0
    %v920 = vadd.f32 %v918, %v919
    %921 = vadd.xlane.f32.xlu0 %v920
    %v922 = vpop.xlane.xlu0 %921
    %v923 = vsel %vm814, %v895, 0.0
    %v924 = vsel %vm814, %v896, 0.0
    %v925 = vadd.f32 %v923, %v924
    %926 = vadd.xlane.f32.xlu0 %v925
    %v927 = vpop.xlane.xlu0 %926
    %v928 = vsel %vm814, %v897, 0.0
    %v929 = vsel %vm814, %v898, 0.0
    %v930 = vadd.f32 %v928, %v929
    %931 = vadd.xlane.f32.xlu0 %v930
    %v932 = vpop.xlane.xlu0 %931
    %v933 = vsel %vm814, %v899, 0.0
    %v934 = vsel %vm814, %v900, 0.0
    %v935 = vadd.f32 %v933, %v934
    %936 = vadd.xlane.f32.xlu0 %v935
    %v937 = vpop.xlane.xlu0 %936
    %v938 = vsel %vm814, %v901, 0.0
    %v939 = vsel %vm814, %v902, 0.0
    %v940 = vadd.f32 %v938, %v939
    %941 = vadd.xlane.f32.xlu0 %v940
    %v942 = vpop.xlane.xlu0 %941
    %v943 = vsel %vm814, %v907, 0.0
    %v944 = vsel %vm814, %v912, 0.0
    %v945 = vadd.f32 %v943, %v944
    %v946 = vsel %vm814, %v917, 0.0
    %v947 = vadd.f32 %v945, %v946
    %v948 = vsel %vm814, %v922, 0.0
    %v949 = vadd.f32 %v947, %v948
    %v950 = vsel %vm814, %v927, 0.0
    %v951 = vadd.f32 %v949, %v950
    %v952 = vsel %vm814, %v932, 0.0
    %v953 = vadd.f32 %v951, %v952
    %v954 = vsel %vm814, %v937, 0.0
    %v955 = vadd.f32 %v953, %v954
    %v956 = vsel %vm814, %v942, 0.0
    %v957 = vadd.f32 %v955, %v956
    %v958 = vmul.f32 %v957, 0.00048828125
    %v959 = vadd.f32 %v958, 1e-05
    %v960 = vrsqrt.pop %v959
    %v961 = vmul.f32 %v871, %v960
    %v962 = vmul.f32 %v872, %v960
    %v963 = vmul.f32 %v873, %v960
    %v964 = vmul.f32 %v874, %v960
    %v965 = vmul.f32 %v875, %v960
    %v966 = vmul.f32 %v876, %v960
    %v967 = vmul.f32 %v877, %v960
    %v968 = vmul.f32 %v878, %v960
    %v969 = vmul.f32 %v879, %v960
    %v970 = vmul.f32 %v880, %v960
    %v971 = vmul.f32 %v881, %v960
    %v972 = vmul.f32 %v882, %v960
    %v973 = vmul.f32 %v883, %v960
    %v974 = vmul.f32 %v884, %v960
    %v975 = vmul.f32 %v885, %v960
    %v976 = vmul.f32 %v886, %v960
    %v985 = vlaneseq
    %v986 = vshrl.u32 %v985, 7
    %v987 = vsub.s32 0, %v986
    %v988 = vrot.slane %v798, %v987
    %v989 = vlaneseq
    %v990 = vshrl.u32 %v989, 7
    %v991 = vsub.s32 1, %v990
    %v992 = vrot.slane %v798, %v991
    %v993 = vlaneseq
    %v994 = vshrl.u32 %v993, 7
    %v995 = vsub.s32 0, %v994
    %v996 = vrot.slane %v799, %v995
    %v997 = vlaneseq
    %v998 = vshrl.u32 %v997, 7
    %v999 = vsub.s32 1, %v998
    %v1000 = vrot.slane %v799, %v999
    %v1001 = vlaneseq
    %v1002 = vshrl.u32 %v1001, 7
    %v1003 = vsub.s32 0, %v1002
    %v1004 = vrot.slane %v800, %v1003
    %v1005 = vlaneseq
    %v1006 = vshrl.u32 %v1005, 7
    %v1007 = vsub.s32 1, %v1006
    %v1008 = vrot.slane %v800, %v1007
    %v1009 = vlaneseq
    %v1010 = vshrl.u32 %v1009, 7
    %v1011 = vsub.s32 0, %v1010
    %v1012 = vrot.slane %v801, %v1011
    %v1013 = vlaneseq
    %v1014 = vshrl.u32 %v1013, 7
    %v1015 = vsub.s32 1, %v1014
    %v1016 = vrot.slane %v801, %v1015
    %v1017 = vlaneseq
    %v1018 = vshrl.u32 %v1017, 7
    %v1019 = vsub.s32 0, %v1018
    %v1020 = vrot.slane %v802, %v1019
    %v1021 = vlaneseq
    %v1022 = vshrl.u32 %v1021, 7
    %v1023 = vsub.s32 1, %v1022
    %v1024 = vrot.slane %v802, %v1023
    %v1025 = vlaneseq
    %v1026 = vshrl.u32 %v1025, 7
    %v1027 = vsub.s32 0, %v1026
    %v1028 = vrot.slane %v803, %v1027
    %v1029 = vlaneseq
    %v1030 = vshrl.u32 %v1029, 7
    %v1031 = vsub.s32 1, %v1030
    %v1032 = vrot.slane %v803, %v1031
    %v1033 = vlaneseq
    %v1034 = vshrl.u32 %v1033, 7
    %v1035 = vsub.s32 0, %v1034
    %v1036 = vrot.slane %v804, %v1035
    %v1037 = vlaneseq
    %v1038 = vshrl.u32 %v1037, 7
    %v1039 = vsub.s32 1, %v1038
    %v1040 = vrot.slane %v804, %v1039
    %v1041 = vlaneseq
    %v1042 = vshrl.u32 %v1041, 7
    %v1043 = vsub.s32 0, %v1042
    %v1044 = vrot.slane %v805, %v1043
    %v1045 = vlaneseq
    %v1046 = vshrl.u32 %v1045, 7
    %v1047 = vsub.s32 1, %v1046
    %v1048 = vrot.slane %v805, %v1047
    %v1065 = vmul.f32 %v961, %v988
    %v1066 = vmul.f32 %v962, %v992
    %v1067 = vmul.f32 %v963, %v996
    %v1068 = vmul.f32 %v964, %v1000
    %v1069 = vmul.f32 %v965, %v1004
    %v1070 = vmul.f32 %v966, %v1008
    %v1071 = vmul.f32 %v967, %v1012
    %v1072 = vmul.f32 %v968, %v1016
    %v1073 = vmul.f32 %v969, %v1020
    %v1074 = vmul.f32 %v970, %v1024
    %v1075 = vmul.f32 %v971, %v1028
    %v1076 = vmul.f32 %v972, %v1032
    %v1077 = vmul.f32 %v973, %v1036
    %v1078 = vmul.f32 %v974, %v1040
    %v1079 = vmul.f32 %v975, %v1044
    %v1080 = vmul.f32 %v976, %v1048
    %v1089 = vlaneseq
    %v1090 = vshrl.u32 %v1089, 7
    %v1091 = vsub.s32 0, %v1090
    %v1092 = vrot.slane %v806, %v1091
    %v1093 = vlaneseq
    %v1094 = vshrl.u32 %v1093, 7
    %v1095 = vsub.s32 1, %v1094
    %v1096 = vrot.slane %v806, %v1095
    %v1097 = vlaneseq
    %v1098 = vshrl.u32 %v1097, 7
    %v1099 = vsub.s32 0, %v1098
    %v1100 = vrot.slane %v807, %v1099
    %v1101 = vlaneseq
    %v1102 = vshrl.u32 %v1101, 7
    %v1103 = vsub.s32 1, %v1102
    %v1104 = vrot.slane %v807, %v1103
    %v1105 = vlaneseq
    %v1106 = vshrl.u32 %v1105, 7
    %v1107 = vsub.s32 0, %v1106
    %v1108 = vrot.slane %v808, %v1107
    %v1109 = vlaneseq
    %v1110 = vshrl.u32 %v1109, 7
    %v1111 = vsub.s32 1, %v1110
    %v1112 = vrot.slane %v808, %v1111
    %v1113 = vlaneseq
    %v1114 = vshrl.u32 %v1113, 7
    %v1115 = vsub.s32 0, %v1114
    %v1116 = vrot.slane %v809, %v1115
    %v1117 = vlaneseq
    %v1118 = vshrl.u32 %v1117, 7
    %v1119 = vsub.s32 1, %v1118
    %v1120 = vrot.slane %v809, %v1119
    %v1121 = vlaneseq
    %v1122 = vshrl.u32 %v1121, 7
    %v1123 = vsub.s32 0, %v1122
    %v1124 = vrot.slane %v810, %v1123
    %v1125 = vlaneseq
    %v1126 = vshrl.u32 %v1125, 7
    %v1127 = vsub.s32 1, %v1126
    %v1128 = vrot.slane %v810, %v1127
    %v1129 = vlaneseq
    %v1130 = vshrl.u32 %v1129, 7
    %v1131 = vsub.s32 0, %v1130
    %v1132 = vrot.slane %v811, %v1131
    %v1133 = vlaneseq
    %v1134 = vshrl.u32 %v1133, 7
    %v1135 = vsub.s32 1, %v1134
    %v1136 = vrot.slane %v811, %v1135
    %v1137 = vlaneseq
    %v1138 = vshrl.u32 %v1137, 7
    %v1139 = vsub.s32 0, %v1138
    %v1140 = vrot.slane %v812, %v1139
    %v1141 = vlaneseq
    %v1142 = vshrl.u32 %v1141, 7
    %v1143 = vsub.s32 1, %v1142
    %v1144 = vrot.slane %v812, %v1143
    %v1145 = vlaneseq
    %v1146 = vshrl.u32 %v1145, 7
    %v1147 = vsub.s32 0, %v1146
    %v1148 = vrot.slane %v813, %v1147
    %v1149 = vlaneseq
    %v1150 = vshrl.u32 %v1149, 7
    %v1151 = vsub.s32 1, %v1150
    %v1152 = vrot.slane %v813, %v1151
    %v1169 = vadd.f32 %v1065, %v1092
    %v1170 = vadd.f32 %v1066, %v1096
    %v1171 = vadd.f32 %v1067, %v1100
    %v1172 = vadd.f32 %v1068, %v1104
    %v1173 = vadd.f32 %v1069, %v1108
    %v1174 = vadd.f32 %v1070, %v1112
    %v1175 = vadd.f32 %v1071, %v1116
    %v1176 = vadd.f32 %v1072, %v1120
    %v1177 = vadd.f32 %v1073, %v1124
    %v1178 = vadd.f32 %v1074, %v1128
    %v1179 = vadd.f32 %v1075, %v1132
    %v1180 = vadd.f32 %v1076, %v1136
    %v1181 = vadd.f32 %v1077, %v1140
    %v1182 = vadd.f32 %v1078, %v1144
    %v1183 = vadd.f32 %v1079, %v1148
    %v1184 = vadd.f32 %v1080, %v1152
    %vm1185 = vcmp.ge.f32.partialorder %v1169, 0.0
    %vm1186 = vcmp.ge.f32.partialorder %v1170, 0.0
    %vm1187 = vcmp.ge.f32.partialorder %v1171, 0.0
    %vm1188 = vcmp.ge.f32.partialorder %v1172, 0.0
    %vm1189 = vcmp.ge.f32.partialorder %v1173, 0.0
    %vm1190 = vcmp.ge.f32.partialorder %v1174, 0.0
    %vm1191 = vcmp.ge.f32.partialorder %v1175, 0.0
    %vm1192 = vcmp.ge.f32.partialorder %v1176, 0.0
    %vm1193 = vcmp.ge.f32.partialorder %v1177, 0.0
    %vm1194 = vcmp.ge.f32.partialorder %v1178, 0.0
    %vm1195 = vcmp.ge.f32.partialorder %v1179, 0.0
    %vm1196 = vcmp.ge.f32.partialorder %v1180, 0.0
    %vm1197 = vcmp.ge.f32.partialorder %v1181, 0.0
    %vm1198 = vcmp.ge.f32.partialorder %v1182, 0.0
    %vm1199 = vcmp.ge.f32.partialorder %v1183, 0.0
    %vm1200 = vcmp.ge.f32.partialorder %v1184, 0.0
    %v1201 = vmul.f32 %v1169, 0.01
    %v1202 = vmul.f32 %v1170, 0.01
    %v1203 = vmul.f32 %v1171, 0.01
    %v1204 = vmul.f32 %v1172, 0.01
    %v1205 = vmul.f32 %v1173, 0.01
    %v1206 = vmul.f32 %v1174, 0.01
    %v1207 = vmul.f32 %v1175, 0.01
    %v1208 = vmul.f32 %v1176, 0.01
    %v1209 = vmul.f32 %v1177, 0.01
    %v1210 = vmul.f32 %v1178, 0.01
    %v1211 = vmul.f32 %v1179, 0.01
    %v1212 = vmul.f32 %v1180, 0.01
    %v1213 = vmul.f32 %v1181, 0.01
    %v1214 = vmul.f32 %v1182, 0.01
    %v1215 = vmul.f32 %v1183, 0.01
    %v1216 = vmul.f32 %v1184, 0.01
    %v1217 = vsel %vm1185, %v1169, %v1201
    %v1218 = vsel %vm1186, %v1170, %v1202
    %v1219 = vsel %vm1187, %v1171, %v1203
    %v1220 = vsel %vm1188, %v1172, %v1204
    %v1221 = vsel %vm1189, %v1173, %v1205
    %v1222 = vsel %vm1190, %v1174, %v1206
    %v1223 = vsel %vm1191, %v1175, %v1207
    %v1224 = vsel %vm1192, %v1176, %v1208
    %v1225 = vsel %vm1193, %v1177, %v1209
    %v1226 = vsel %vm1194, %v1178, %v1210
    %v1227 = vsel %vm1195, %v1179, %v1211
    %v1228 = vsel %vm1196, %v1180, %v1212
    %v1229 = vsel %vm1197, %v1181, %v1213
    %v1230 = vsel %vm1198, %v1182, %v1214
    %v1231 = vsel %vm1199, %v1183, %v1215
    %v1232 = vsel %vm1200, %v1184, %v1216
    %v1233 = vpack.c.bf16 %v1217, %v1217
    %v1234 = vpack.c.bf16 %v1218, %v1218
    %v1235 = vpack.c.bf16 %v1219, %v1219
    %v1236 = vpack.c.bf16 %v1220, %v1220
    %v1237 = vpack.c.bf16 %v1221, %v1221
    %v1238 = vpack.c.bf16 %v1222, %v1222
    %v1239 = vpack.c.bf16 %v1223, %v1223
    %v1240 = vpack.c.bf16 %v1224, %v1224
    %v1241 = vpack.c.bf16 %v1225, %v1225
    %v1242 = vpack.c.bf16 %v1226, %v1226
    %v1243 = vpack.c.bf16 %v1227, %v1227
    %v1244 = vpack.c.bf16 %v1228, %v1228
    %v1245 = vpack.c.bf16 %v1229, %v1229
    %v1246 = vpack.c.bf16 %v1230, %v1230
    %v1247 = vpack.c.bf16 %v1231, %v1231
    %v1248 = vpack.c.bf16 %v1232, %v1232
    %v1265 = vcombine.low %v1233, %v1234
    %v1267 = vunpack.c.l.s4 1966171168
    %v1268 = vunpack.c.0.s8 %v1267
    %v1269 = vlaneseq
    %v1270 = vshrl.u32 %v1269, 7
    %v1271 = vsub.s32 %v1268, %v1270
    %v1272 = vrot.slane %v1265, %v1271
    %v1274 = vunpack.c.l.s4 1966171168
    %v1275 = vunpack.c.0.s8 %v1274
    %v1276 = vlaneseq
    %v1277 = vshrl.u32 %v1276, 7
    %v1278 = vsub.s32 %v1275, %v1277
    %v1279 = vrot.slane %v1272, %v1278
    %v1280 = vcombine.low %v1235, %v1236
    %v1282 = vunpack.c.l.s4 1966171168
    %v1283 = vunpack.c.0.s8 %v1282
    %v1284 = vlaneseq
    %v1285 = vshrl.u32 %v1284, 7
    %v1286 = vsub.s32 %v1283, %v1285
    %v1287 = vrot.slane %v1280, %v1286
    %v1289 = vunpack.c.l.s4 1966171168
    %v1290 = vunpack.c.0.s8 %v1289
    %v1291 = vlaneseq
    %v1292 = vshrl.u32 %v1291, 7
    %v1293 = vsub.s32 %v1290, %v1292
    %v1294 = vrot.slane %v1287, %v1293
    %v1295 = vcombine.low %v1237, %v1238
    %v1297 = vunpack.c.l.s4 1966171168
    %v1298 = vunpack.c.0.s8 %v1297
    %v1299 = vlaneseq
    %v1300 = vshrl.u32 %v1299, 7
    %v1301 = vsub.s32 %v1298, %v1300
    %v1302 = vrot.slane %v1295, %v1301
    %v1304 = vunpack.c.l.s4 1966171168
    %v1305 = vunpack.c.0.s8 %v1304
    %v1306 = vlaneseq
    %v1307 = vshrl.u32 %v1306, 7
    %v1308 = vsub.s32 %v1305, %v1307
    %v1309 = vrot.slane %v1302, %v1308
    %v1310 = vcombine.low %v1239, %v1240
    %v1312 = vunpack.c.l.s4 1966171168
    %v1313 = vunpack.c.0.s8 %v1312
    %v1314 = vlaneseq
    %v1315 = vshrl.u32 %v1314, 7
    %v1316 = vsub.s32 %v1313, %v1315
    %v1317 = vrot.slane %v1310, %v1316
    %v1319 = vunpack.c.l.s4 1966171168
    %v1320 = vunpack.c.0.s8 %v1319
    %v1321 = vlaneseq
    %v1322 = vshrl.u32 %v1321, 7
    %v1323 = vsub.s32 %v1320, %v1322
    %v1324 = vrot.slane %v1317, %v1323
    %v1325 = vcombine.low %v1241, %v1242
    %v1327 = vunpack.c.l.s4 1966171168
    %v1328 = vunpack.c.0.s8 %v1327
    %v1329 = vlaneseq
    %v1330 = vshrl.u32 %v1329, 7
    %v1331 = vsub.s32 %v1328, %v1330
    %v1332 = vrot.slane %v1325, %v1331
    %v1334 = vunpack.c.l.s4 1966171168
    %v1335 = vunpack.c.0.s8 %v1334
    %v1336 = vlaneseq
    %v1337 = vshrl.u32 %v1336, 7
    %v1338 = vsub.s32 %v1335, %v1337
    %v1339 = vrot.slane %v1332, %v1338
    %v1340 = vcombine.low %v1243, %v1244
    %v1342 = vunpack.c.l.s4 1966171168
    %v1343 = vunpack.c.0.s8 %v1342
    %v1344 = vlaneseq
    %v1345 = vshrl.u32 %v1344, 7
    %v1346 = vsub.s32 %v1343, %v1345
    %v1347 = vrot.slane %v1340, %v1346
    %v1349 = vunpack.c.l.s4 1966171168
    %v1350 = vunpack.c.0.s8 %v1349
    %v1351 = vlaneseq
    %v1352 = vshrl.u32 %v1351, 7
    %v1353 = vsub.s32 %v1350, %v1352
    %v1354 = vrot.slane %v1347, %v1353
    %v1355 = vcombine.low %v1245, %v1246
    %v1357 = vunpack.c.l.s4 1966171168
    %v1358 = vunpack.c.0.s8 %v1357
    %v1359 = vlaneseq
    %v1360 = vshrl.u32 %v1359, 7
    %v1361 = vsub.s32 %v1358, %v1360
    %v1362 = vrot.slane %v1355, %v1361
    %v1364 = vunpack.c.l.s4 1966171168
    %v1365 = vunpack.c.0.s8 %v1364
    %v1366 = vlaneseq
    %v1367 = vshrl.u32 %v1366, 7
    %v1368 = vsub.s32 %v1365, %v1367
    %v1369 = vrot.slane %v1362, %v1368
    %v1370 = vcombine.low %v1247, %v1248
    %v1372 = vunpack.c.l.s4 1966171168
    %v1373 = vunpack.c.0.s8 %v1372
    %v1374 = vlaneseq
    %v1375 = vshrl.u32 %v1374, 7
    %v1376 = vsub.s32 %v1373, %v1375
    %v1377 = vrot.slane %v1370, %v1376
    %v1379 = vunpack.c.l.s4 1966171168
    %v1380 = vunpack.c.0.s8 %v1379
    %v1381 = vlaneseq
    %v1382 = vshrl.u32 %v1381, 7
    %v1383 = vsub.s32 %v1380, %v1382
    %v1384 = vrot.slane %v1377, %v1383
    %1393 = vst [vmem:[#allocation2] sm:$0x3] %v1279
    %1394 = vst [vmem:[#allocation2 + $0x2] sm:$0x3] %v1294
    %1395 = vst [vmem:[#allocation2 + $0x4] sm:$0x3] %v1309
    %1396 = vst [vmem:[#allocation2 + $0x6] sm:$0x3] %v1324
    %1397 = vst [vmem:[#allocation2 + $0x8] sm:$0x3] %v1339
    %1398 = vst [vmem:[#allocation2 + $0xa] sm:$0x3] %v1354
    %1399 = vst [vmem:[#allocation2 + $0xc] sm:$0x3] %v1369
    %1400 = vst [vmem:[#allocation2 + $0xe] sm:$0x3] %v1384
    %v1401 = vld [vmem:[%s5] sm:$0x3]
    %v1402 = vld [vmem:[#allocation2] sm:$0x3]
    %s1403 = scalar_lea.vmem %s4, 256
    %v1404 = vld [vmem:[%s1403] sm:$0xff]
    %v1405 = vld [vmem:[%s1403 + $0x8] sm:$0xff]
    %v1406 = vld [vmem:[%s1403 + $0x10] sm:$0xff]
    %v1407 = vld [vmem:[%s1403 + $0x18] sm:$0xff]
    %v1408 = vld [vmem:[%s1403 + $0x20] sm:$0xff]
    %v1409 = vld [vmem:[%s1403 + $0x28] sm:$0xff]
    %v1410 = vld [vmem:[%s1403 + $0x30] sm:$0xff]
    %v1411 = vld [vmem:[%s1403 + $0x38] sm:$0xff]
    %v1412 = vld [vmem:[%s1403 + $0x40] sm:$0xff]
    %v1413 = vld [vmem:[%s1403 + $0x48] sm:$0xff]
    %v1414 = vld [vmem:[%s1403 + $0x50] sm:$0xff]
    %v1415 = vld [vmem:[%s1403 + $0x58] sm:$0xff]
    %v1416 = vld [vmem:[%s1403 + $0x60] sm:$0xff]
    %v1417 = vld [vmem:[%s1403 + $0x68] sm:$0xff]
    %v1418 = vld [vmem:[%s1403 + $0x70] sm:$0xff]
    %v1419 = vld [vmem:[%s1403 + $0x78] sm:$0xff]
    %v1420 = vld [vmem:[%s1403 + $0x80] sm:$0xff]
    %v1421 = vld [vmem:[%s1403 + $0x88] sm:$0xff]
    %v1422 = vld [vmem:[%s1403 + $0x90] sm:$0xff]
    %v1423 = vld [vmem:[%s1403 + $0x98] sm:$0xff]
    %v1424 = vld [vmem:[%s1403 + $0xa0] sm:$0xff]
    %v1425 = vld [vmem:[%s1403 + $0xa8] sm:$0xff]
    %v1426 = vld [vmem:[%s1403 + $0xb0] sm:$0xff]
    %v1427 = vld [vmem:[%s1403 + $0xb8] sm:$0xff]
    %v1428 = vld [vmem:[%s1403 + $0xc0] sm:$0xff]
    %v1429 = vld [vmem:[%s1403 + $0xc8] sm:$0xff]
    %v1430 = vld [vmem:[%s1403 + $0xd0] sm:$0xff]
    %v1431 = vld [vmem:[%s1403 + $0xd8] sm:$0xff]
    %v1432 = vld [vmem:[%s1403 + $0xe0] sm:$0xff]
    %v1433 = vld [vmem:[%s1403 + $0xe8] sm:$0xff]
    %v1434 = vld [vmem:[%s1403 + $0xf0] sm:$0xff]
    %v1435 = vld [vmem:[%s1403 + $0xf8] sm:$0xff]
    %s1436 = scalar_lea.vmem [#allocation2], 2
    %v1437 = vld [vmem:[%s1436] sm:$0x3]
    %s1438 = scalar_lea.vmem %s4, 512
    %v1439 = vld [vmem:[%s1438] sm:$0xff]
    %v1440 = vld [vmem:[%s1438 + $0x8] sm:$0xff]
    %v1441 = vld [vmem:[%s1438 + $0x10] sm:$0xff]
    %v1442 = vld [vmem:[%s1438 + $0x18] sm:$0xff]
    %v1443 = vld [vmem:[%s1438 + $0x20] sm:$0xff]
    %v1444 = vld [vmem:[%s1438 + $0x28] sm:$0xff]
    %v1445 = vld [vmem:[%s1438 + $0x30] sm:$0xff]
    %v1446 = vld [vmem:[%s1438 + $0x38] sm:$0xff]
    %v1447 = vld [vmem:[%s1438 + $0x40] sm:$0xff]
    %v1448 = vld [vmem:[%s1438 + $0x48] sm:$0xff]
    %v1449 = vld [vmem:[%s1438 + $0x50] sm:$0xff]
    %v1450 = vld [vmem:[%s1438 + $0x58] sm:$0xff]
    %v1451 = vld [vmem:[%s1438 + $0x60] sm:$0xff]
    %v1452 = vld [vmem:[%s1438 + $0x68] sm:$0xff]
    %v1453 = vld [vmem:[%s1438 + $0x70] sm:$0xff]
    %v1454 = vld [vmem:[%s1438 + $0x78] sm:$0xff]
    %v1455 = vld [vmem:[%s1438 + $0x80] sm:$0xff]
    %v1456 = vld [vmem:[%s1438 + $0x88] sm:$0xff]
    %v1457 = vld [vmem:[%s1438 + $0x90] sm:$0xff]
    %v1458 = vld [vmem:[%s1438 + $0x98] sm:$0xff]
    %v1459 = vld [vmem:[%s1438 + $0xa0] sm:$0xff]
    %v1460 = vld [vmem:[%s1438 + $0xa8] sm:$0xff]
    %v1461 = vld [vmem:[%s1438 + $0xb0] sm:$0xff]
    %v1462 = vld [vmem:[%s1438 + $0xb8] sm:$0xff]
    %v1463 = vld [vmem:[%s1438 + $0xc0] sm:$0xff]
    %v1464 = vld [vmem:[%s1438 + $0xc8] sm:$0xff]
    %v1465 = vld [vmem:[%s1438 + $0xd0] sm:$0xff]
    %v1466 = vld [vmem:[%s1438 + $0xd8] sm:$0xff]
    %v1467 = vld [vmem:[%s1438 + $0xe0] sm:$0xff]
    %v1468 = vld [vmem:[%s1438 + $0xe8] sm:$0xff]
    %v1469 = vld [vmem:[%s1438 + $0xf0] sm:$0xff]
    %v1470 = vld [vmem:[%s1438 + $0xf8] sm:$0xff]
    %v1473 = vunpack.c.l.s4 1966171168
    %v1474 = vunpack.c.0.s8 %v1473
    %v1475 = vlaneseq
    %v1476 = vshrl.u32 %v1475, 7
    %v1477 = vsub.s32 %v1474, %v1476
    %v1478 = vrot.slane %v1437, %v1477
    %v1479 = vcombine.high %v1478, %v1478
    %v1481 = vunpack.c.l.s4 1966171168
    %v1482 = vunpack.c.0.s8 %v1481
    %v1483 = vlaneseq
    %v1484 = vshrl.u32 %v1483, 7
    %v1485 = vsub.s32 %v1482, %v1484
    %v1486 = vrot.slane %v1478, %v1485
    %v1488 = vunpack.c.l.s4 1966171168
    %v1489 = vunpack.c.0.s8 %v1488
    %v1490 = vlaneseq
    %v1491 = vshrl.u32 %v1490, 7
    %v1492 = vsub.s32 %v1489, %v1491
    %v1493 = vrot.slane %v1479, %v1492
    %v1528 = vunpack.c.l.b16 %v1439
    %v1529 = vunpack.c.h.b16 %v1439
    %v1530 = vunpack.c.l.b16 %v1440
    %v1531 = vunpack.c.h.b16 %v1440
    %v1532 = vunpack.c.l.b16 %v1441
    %v1533 = vunpack.c.h.b16 %v1441
    %v1534 = vunpack.c.l.b16 %v1442
    %v1535 = vunpack.c.h.b16 %v1442
    %v1536 = vunpack.c.l.b16 %v1443
    %v1537 = vunpack.c.h.b16 %v1443
    %v1538 = vunpack.c.l.b16 %v1444
    %v1539 = vunpack.c.h.b16 %v1444
    %v1540 = vunpack.c.l.b16 %v1445
    %v1541 = vunpack.c.h.b16 %v1445
    %v1542 = vunpack.c.l.b16 %v1446
    %v1543 = vunpack.c.h.b16 %v1446
    %v1544 = vunpack.c.l.b16 %v1447
    %v1545 = vunpack.c.h.b16 %v1447
    %v1546 = vunpack.c.l.b16 %v1448
    %v1547 = vunpack.c.h.b16 %v1448
    %v1548 = vunpack.c.l.b16 %v1449
    %v1549 = vunpack.c.h.b16 %v1449
    %v1550 = vunpack.c.l.b16 %v1450
    %v1551 = vunpack.c.h.b16 %v1450
    %v1552 = vunpack.c.l.b16 %v1451
    %v1553 = vunpack.c.h.b16 %v1451
    %v1554 = vunpack.c.l.b16 %v1452
    %v1555 = vunpack.c.h.b16 %v1452
    %v1556 = vunpack.c.l.b16 %v1453
    %v1557 = vunpack.c.h.b16 %v1453
    %v1558 = vunpack.c.l.b16 %v1454
    %v1559 = vunpack.c.h.b16 %v1454
    %v1560 = vunpack.c.l.b16 %v1455
    %v1561 = vunpack.c.h.b16 %v1455
    %v1562 = vunpack.c.l.b16 %v1456
    %v1563 = vunpack.c.h.b16 %v1456
    %v1564 = vunpack.c.l.b16 %v1457
    %v1565 = vunpack.c.h.b16 %v1457
    %v1566 = vunpack.c.l.b16 %v1458
    %v1567 = vunpack.c.h.b16 %v1458
    %v1568 = vunpack.c.l.b16 %v1459
    %v1569 = vunpack.c.h.b16 %v1459
    %v1570 = vunpack.c.l.b16 %v1460
    %v1571 = vunpack.c.h.b16 %v1460
    %v1572 = vunpack.c.l.b16 %v1461
    %v1573 = vunpack.c.h.b16 %v1461
    %v1574 = vunpack.c.l.b16 %v1462
    %v1575 = vunpack.c.h.b16 %v1462
    %v1576 = vunpack.c.l.b16 %v1463
    %v1577 = vunpack.c.h.b16 %v1463
    %v1578 = vunpack.c.l.b16 %v1464
    %v1579 = vunpack.c.h.b16 %v1464
    %v1580 = vunpack.c.l.b16 %v1465
    %v1581 = vunpack.c.h.b16 %v1465
    %v1582 = vunpack.c.l.b16 %v1466
    %v1583 = vunpack.c.h.b16 %v1466
    %v1584 = vunpack.c.l.b16 %v1467
    %v1585 = vunpack.c.h.b16 %v1467
    %v1586 = vunpack.c.l.b16 %v1468
    %v1587 = vunpack.c.h.b16 %v1468
    %v1588 = vunpack.c.l.b16 %v1469
    %v1589 = vunpack.c.h.b16 %v1469
    %v1590 = vunpack.c.l.b16 %v1470
    %v1591 = vunpack.c.h.b16 %v1470
    %v1592 = vpack.c.b16 %v1530, %v1528
    %v1593 = vpack.c.b16 %v1531, %v1529
    %v1594 = vpack.c.b16 %v1534, %v1532
    %v1595 = vpack.c.b16 %v1535, %v1533
    %v1596 = vpack.c.b16 %v1538, %v1536
    %v1597 = vpack.c.b16 %v1539, %v1537
    %v1598 = vpack.c.b16 %v1542, %v1540
    %v1599 = vpack.c.b16 %v1543, %v1541
    %v1600 = vpack.c.b16 %v1546, %v1544
    %v1601 = vpack.c.b16 %v1547, %v1545
    %v1602 = vpack.c.b16 %v1550, %v1548
    %v1603 = vpack.c.b16 %v1551, %v1549
    %v1604 = vpack.c.b16 %v1554, %v1552
    %v1605 = vpack.c.b16 %v1555, %v1553
    %v1606 = vpack.c.b16 %v1558, %v1556
    %v1607 = vpack.c.b16 %v1559, %v1557
    %v1608 = vpack.c.b16 %v1562, %v1560
    %v1609 = vpack.c.b16 %v1563, %v1561
    %v1610 = vpack.c.b16 %v1566, %v1564
    %v1611 = vpack.c.b16 %v1567, %v1565
    %v1612 = vpack.c.b16 %v1570, %v1568
    %v1613 = vpack.c.b16 %v1571, %v1569
    %v1614 = vpack.c.b16 %v1574, %v1572
    %v1615 = vpack.c.b16 %v1575, %v1573
    %v1616 = vpack.c.b16 %v1578, %v1576
    %v1617 = vpack.c.b16 %v1579, %v1577
    %v1618 = vpack.c.b16 %v1582, %v1580
    %v1619 = vpack.c.b16 %v1583, %v1581
    %v1620 = vpack.c.b16 %v1586, %v1584
    %v1621 = vpack.c.b16 %v1587, %v1585
    %v1622 = vpack.c.b16 %v1590, %v1588
    %v1623 = vpack.c.b16 %v1591, %v1589
    %1656 = vmatprep.subr.bf16.mxu0 %v1593
    %1657 = vmatpush1.bf16.msra.mxu0 %v1592
    %1658 = vmatprep.subr.bf16.mxu0 %v1595
    %1659 = vmatpush1.bf16.msra.mxu0 %v1594
    %1660 = vmatprep.subr.bf16.mxu0 %v1597
    %1661 = vmatpush1.bf16.msra.mxu0 %v1596
    %1662 = vmatprep.subr.bf16.mxu0 %v1599
    %1663 = vmatpush1.bf16.msra.mxu0 %v1598
    %1664 = vmatprep.subr.bf16.mxu0 %v1601
    %1665 = vmatpush1.bf16.msra.mxu0 %v1600
    %1666 = vmatprep.subr.bf16.mxu0 %v1603
    %1667 = vmatpush1.bf16.msra.mxu0 %v1602
    %1668 = vmatprep.subr.bf16.mxu0 %v1605
    %1669 = vmatpush1.bf16.msra.mxu0 %v1604
    %1670 = vmatprep.subr.bf16.mxu0 %v1607
    %1671 = vmatpush1.bf16.msra.mxu0 %v1606
    %1672 = vmatprep.subr.bf16.mxu0 %v1609
    %1673 = vmatpush1.bf16.msra.mxu0 %v1608
    %1674 = vmatprep.subr.bf16.mxu0 %v1611
    %1675 = vmatpush1.bf16.msra.mxu0 %v1610
    %1676 = vmatprep.subr.bf16.mxu0 %v1613
    %1677 = vmatpush1.bf16.msra.mxu0 %v1612
    %1678 = vmatprep.subr.bf16.mxu0 %v1615
    %1679 = vmatpush1.bf16.msra.mxu0 %v1614
    %1680 = vmatprep.subr.bf16.mxu0 %v1617
    %1681 = vmatpush1.bf16.msra.mxu0 %v1616
    %1682 = vmatprep.subr.bf16.mxu0 %v1619
    %1683 = vmatpush1.bf16.msra.mxu0 %v1618
    %1684 = vmatprep.subr.bf16.mxu0 %v1621
    %1685 = vmatpush1.bf16.msra.mxu0 %v1620
    %1686 = vmatprep.subr.bf16.mxu0 %v1623
    %1687 = vmatpush1.bf16.msra.mxu0 %v1622
    %1688 = vmatprep.mubr.bf16.mxu0 %v1493
    %1689 = vmatmul.mubr.bf16.gmra.mrb[0].mxu0 %v1486
    %v1690 = vpop.f32.mrb[0].mxu0
    %v1691 = vadd.f32 0.0, %v1690
    %v1692 = vpop.f32.mrb[0].mxu0
    %v1693 = vadd.f32 0.0, %v1692
    %v1694 = vpop.f32.mrb[0].mxu0
    %v1695 = vpop.f32.mrb[0].mxu0
    %1696 = vdwg.mxu0
    %v1699 = vunpack.c.l.s4 1966171168
    %v1700 = vunpack.c.0.s8 %v1699
    %v1701 = vlaneseq
    %v1702 = vshrl.u32 %v1701, 7
    %v1703 = vsub.s32 %v1700, %v1702
    %v1704 = vrot.slane %v1402, %v1703
    %v1705 = vcombine.high %v1704, %v1704
    %v1707 = vunpack.c.l.s4 1966171168
    %v1708 = vunpack.c.0.s8 %v1707
    %v1709 = vlaneseq
    %v1710 = vshrl.u32 %v1709, 7
    %v1711 = vsub.s32 %v1708, %v1710
    %v1712 = vrot.slane %v1704, %v1711
    %v1714 = vunpack.c.l.s4 1966171168
    %v1715 = vunpack.c.0.s8 %v1714
    %v1716 = vlaneseq
    %v1717 = vshrl.u32 %v1716, 7
    %v1718 = vsub.s32 %v1715, %v1717
    %v1719 = vrot.slane %v1705, %v1718
    %v1754 = vunpack.c.l.b16 %v1404
    %v1755 = vunpack.c.h.b16 %v1404
    %v1756 = vunpack.c.l.b16 %v1405
    %v1757 = vunpack.c.h.b16 %v1405
    %v1758 = vunpack.c.l.b16 %v1406
    %v1759 = vunpack.c.h.b16 %v1406
    %v1760 = vunpack.c.l.b16 %v1407
    %v1761 = vunpack.c.h.b16 %v1407
    %v1762 = vunpack.c.l.b16 %v1408
    %v1763 = vunpack.c.h.b16 %v1408
    %v1764 = vunpack.c.l.b16 %v1409
    %v1765 = vunpack.c.h.b16 %v1409
    %v1766 = vunpack.c.l.b16 %v1410
    %v1767 = vunpack.c.h.b16 %v1410
    %v1768 = vunpack.c.l.b16 %v1411
    %v1769 = vunpack.c.h.b16 %v1411
    %v1770 = vunpack.c.l.b16 %v1412
    %v1771 = vunpack.c.h.b16 %v1412
    %v1772 = vunpack.c.l.b16 %v1413
    %v1773 = vunpack.c.h.b16 %v1413
    %v1774 = vunpack.c.l.b16 %v1414
    %v1775 = vunpack.c.h.b16 %v1414
    %v1776 = vunpack.c.l.b16 %v1415
    %v1777 = vunpack.c.h.b16 %v1415
    %v1778 = vunpack.c.l.b16 %v1416
    %v1779 = vunpack.c.h.b16 %v1416
    %v1780 = vunpack.c.l.b16 %v1417
    %v1781 = vunpack.c.h.b16 %v1417
    %v1782 = vunpack.c.l.b16 %v1418
    %v1783 = vunpack.c.h.b16 %v1418
    %v1784 = vunpack.c.l.b16 %v1419
    %v1785 = vunpack.c.h.b16 %v1419
    %v1786 = vunpack.c.l.b16 %v1420
    %v1787 = vunpack.c.h.b16 %v1420
    %v1788 = vunpack.c.l.b16 %v1421
    %v1789 = vunpack.c.h.b16 %v1421
    %v1790 = vunpack.c.l.b16 %v1422
    %v1791 = vunpack.c.h.b16 %v1422
    %v1792 = vunpack.c.l.b16 %v1423
    %v1793 = vunpack.c.h.b16 %v1423
    %v1794 = vunpack.c.l.b16 %v1424
    %v1795 = vunpack.c.h.b16 %v1424
    %v1796 = vunpack.c.l.b16 %v1425
    %v1797 = vunpack.c.h.b16 %v1425
    %v1798 = vunpack.c.l.b16 %v1426
    %v1799 = vunpack.c.h.b16 %v1426
    %v1800 = vunpack.c.l.b16 %v1427
    %v1801 = vunpack.c.h.b16 %v1427
    %v1802 = vunpack.c.l.b16 %v1428
    %v1803 = vunpack.c.h.b16 %v1428
    %v1804 = vunpack.c.l.b16 %v1429
    %v1805 = vunpack.c.h.b16 %v1429
    %v1806 = vunpack.c.l.b16 %v1430
    %v1807 = vunpack.c.h.b16 %v1430
    %v1808 = vunpack.c.l.b16 %v1431
    %v1809 = vunpack.c.h.b16 %v1431
    %v1810 = vunpack.c.l.b16 %v1432
    %v1811 = vunpack.c.h.b16 %v1432
    %v1812 = vunpack.c.l.b16 %v1433
    %v1813 = vunpack.c.h.b16 %v1433
    %v1814 = vunpack.c.l.b16 %v1434
    %v1815 = vunpack.c.h.b16 %v1434
    %v1816 = vunpack.c.l.b16 %v1435
    %v1817 = vunpack.c.h.b16 %v1435
    %v1818 = vpack.c.b16 %v1756, %v1754
    %v1819 = vpack.c.b16 %v1757, %v1755
    %v1820 = vpack.c.b16 %v1760, %v1758
    %v1821 = vpack.c.b16 %v1761, %v1759
    %v1822 = vpack.c.b16 %v1764, %v1762
    %v1823 = vpack.c.b16 %v1765, %v1763
    %v1824 = vpack.c.b16 %v1768, %v1766
    %v1825 = vpack.c.b16 %v1769, %v1767
    %v1826 = vpack.c.b16 %v1772, %v1770
    %v1827 = vpack.c.b16 %v1773, %v1771
    %v1828 = vpack.c.b16 %v1776, %v1774
    %v1829 = vpack.c.b16 %v1777, %v1775
    %v1830 = vpack.c.b16 %v1780, %v1778
    %v1831 = vpack.c.b16 %v1781, %v1779
    %v1832 = vpack.c.b16 %v1784, %v1782
    %v1833 = vpack.c.b16 %v1785, %v1783
    %v1834 = vpack.c.b16 %v1788, %v1786
    %v1835 = vpack.c.b16 %v1789, %v1787
    %v1836 = vpack.c.b16 %v1792, %v1790
    %v1837 = vpack.c.b16 %v1793, %v1791
    %v1838 = vpack.c.b16 %v1796, %v1794
    %v1839 = vpack.c.b16 %v1797, %v1795
    %v1840 = vpack.c.b16 %v1800, %v1798
    %v1841 = vpack.c.b16 %v1801, %v1799
    %v1842 = vpack.c.b16 %v1804, %v1802
    %v1843 = vpack.c.b16 %v1805, %v1803
    %v1844 = vpack.c.b16 %v1808, %v1806
    %v1845 = vpack.c.b16 %v1809, %v1807
    %v1846 = vpack.c.b16 %v1812, %v1810
    %v1847 = vpack.c.b16 %v1813, %v1811
    %v1848 = vpack.c.b16 %v1816, %v1814
    %v1849 = vpack.c.b16 %v1817, %v1815
    %1882 = vmatprep.subr.bf16.mxu0 %v1819
    %1883 = vmatpush1.bf16.msra.mxu0 %v1818
    %1884 = vmatprep.subr.bf16.mxu0 %v1821
    %1885 = vmatpush1.bf16.msra.mxu0 %v1820
    %1886 = vmatprep.subr.bf16.mxu0 %v1823
    %1887 = vmatpush1.bf16.msra.mxu0 %v1822
    %1888 = vmatprep.subr.bf16.mxu0 %v1825
    %1889 = vmatpush1.bf16.msra.mxu0 %v1824
    %1890 = vmatprep.subr.bf16.mxu0 %v1827
    %1891 = vmatpush1.bf16.msra.mxu0 %v1826
    %1892 = vmatprep.subr.bf16.mxu0 %v1829
    %1893 = vmatpush1.bf16.msra.mxu0 %v1828
    %1894 = vmatprep.subr.bf16.mxu0 %v1831
    %1895 = vmatpush1.bf16.msra.mxu0 %v1830
    %1896 = vmatprep.subr.bf16.mxu0 %v1833
    %1897 = vmatpush1.bf16.msra.mxu0 %v1832
    %1898 = vmatprep.subr.bf16.mxu0 %v1835
    %1899 = vmatpush1.bf16.msra.mxu0 %v1834
    %1900 = vmatprep.subr.bf16.mxu0 %v1837
    %1901 = vmatpush1.bf16.msra.mxu0 %v1836
    %1902 = vmatprep.subr.bf16.mxu0 %v1839
    %1903 = vmatpush1.bf16.msra.mxu0 %v1838
    %1904 = vmatprep.subr.bf16.mxu0 %v1841
    %1905 = vmatpush1.bf16.msra.mxu0 %v1840
    %1906 = vmatprep.subr.bf16.mxu0 %v1843
    %1907 = vmatpush1.bf16.msra.mxu0 %v1842
    %1908 = vmatprep.subr.bf16.mxu0 %v1845
    %1909 = vmatpush1.bf16.msra.mxu0 %v1844
    %1910 = vmatprep.subr.bf16.mxu0 %v1847
    %1911 = vmatpush1.bf16.msra.mxu0 %v1846
    %1912 = vmatprep.subr.bf16.mxu0 %v1849
    %1913 = vmatpush1.bf16.msra.mxu0 %v1848
    %1914 = vmatprep.mubr.bf16.mxu0 %v1719
    %1915 = vmatmul.mubr.bf16.gmra.mrb[0].mxu0 %v1712
    %v1916 = vpop.f32.mrb[0].mxu0
    %v1917 = vadd.f32 %v1691, %v1916
    %v1918 = vpop.f32.mrb[0].mxu0
    %v1919 = vadd.f32 %v1693, %v1918
    %v1920 = vpop.f32.mrb[0].mxu0
    %v1921 = vpop.f32.mrb[0].mxu0
    %1922 = vdwg.mxu0
    %v1924 = vlaneseq
    %v1925 = vshrl.u32 %v1924, 7
    %v1926 = vsub.s32 0, %v1925
    %v1927 = vrot.slane %v1401, %v1926
    %v1928 = vlaneseq
    %v1929 = vshrl.u32 %v1928, 7
    %v1930 = vsub.s32 1, %v1929
    %v1931 = vrot.slane %v1401, %v1930
    %v1934 = vadd.f32 %v1917, %v1927
    %v1935 = vadd.f32 %v1919, %v1931
    %v1936 = vld [vmem:[%s4] sm:$0xff]
    %v1937 = vld [vmem:[%s4 + $0x8] sm:$0xff]
    %v1938 = vld [vmem:[%s4 + $0x10] sm:$0xff]
    %v1939 = vld [vmem:[%s4 + $0x18] sm:$0xff]
    %v1940 = vld [vmem:[%s4 + $0x20] sm:$0xff]
    %v1941 = vld [vmem:[%s4 + $0x28] sm:$0xff]
    %v1942 = vld [vmem:[%s4 + $0x30] sm:$0xff]
    %v1943 = vld [vmem:[%s4 + $0x38] sm:$0xff]
    %v1944 = vld [vmem:[%s4 + $0x40] sm:$0xff]
    %v1945 = vld [vmem:[%s4 + $0x48] sm:$0xff]
    %v1946 = vld [vmem:[%s4 + $0x50] sm:$0xff]
    %v1947 = vld [vmem:[%s4 + $0x58] sm:$0xff]
    %v1948 = vld [vmem:[%s4 + $0x60] sm:$0xff]
    %v1949 = vld [vmem:[%s4 + $0x68] sm:$0xff]
    %v1950 = vld [vmem:[%s4 + $0x70] sm:$0xff]
    %v1951 = vld [vmem:[%s4 + $0x78] sm:$0xff]
    %v1952 = vld [vmem:[%s4 + $0x80] sm:$0xff]
    %v1953 = vld [vmem:[%s4 + $0x88] sm:$0xff]
    %v1954 = vld [vmem:[%s4 + $0x90] sm:$0xff]
    %v1955 = vld [vmem:[%s4 + $0x98] sm:$0xff]
    %v1956 = vld [vmem:[%s4 + $0xa0] sm:$0xff]
    %v1957 = vld [vmem:[%s4 + $0xa8] sm:$0xff]
    %v1958 = vld [vmem:[%s4 + $0xb0] sm:$0xff]
    %v1959 = vld [vmem:[%s4 + $0xb8] sm:$0xff]
    %v1960 = vld [vmem:[%s4 + $0xc0] sm:$0xff]
    %v1961 = vld [vmem:[%s4 + $0xc8] sm:$0xff]
    %v1962 = vld [vmem:[%s4 + $0xd0] sm:$0xff]
    %v1963 = vld [vmem:[%s4 + $0xd8] sm:$0xff]
    %v1964 = vld [vmem:[%s4 + $0xe0] sm:$0xff]
    %v1965 = vld [vmem:[%s4 + $0xe8] sm:$0xff]
    %v1966 = vld [vmem:[%s4 + $0xf0] sm:$0xff]
    %v1967 = vld [vmem:[%s4 + $0xf8] sm:$0xff]
    %s1968 = scalar_lea.vmem [#allocation2], 4
    %v1969 = vld [vmem:[%s1968] sm:$0x3]
    %v1972 = vunpack.c.l.s4 1966171168
    %v1973 = vunpack.c.0.s8 %v1972
    %v1974 = vlaneseq
    %v1975 = vshrl.u32 %v1974, 7
    %v1976 = vsub.s32 %v1973, %v1975
    %v1977 = vrot.slane %v1969, %v1976
    %v1978 = vcombine.high %v1977, %v1977
    %v1980 = vunpack.c.l.s4 1966171168
    %v1981 = vunpack.c.0.s8 %v1980
    %v1982 = vlaneseq
    %v1983 = vshrl.u32 %v1982, 7
    %v1984 = vsub.s32 %v1981, %v1983
    %v1985 = vrot.slane %v1977, %v1984
    %v1987 = vunpack.c.l.s4 1966171168
    %v1988 = vunpack.c.0.s8 %v1987
    %v1989 = vlaneseq
    %v1990 = vshrl.u32 %v1989, 7
    %v1991 = vsub.s32 %v1988, %v1990
    %v1992 = vrot.slane %v1978, %v1991
    %1995 = vmatprep.subr.bf16.mxu0 %v1819
    %1996 = vmatpush1.bf16.msra.mxu0 %v1818
    %1997 = vmatprep.subr.bf16.mxu0 %v1821
    %1998 = vmatpush1.bf16.msra.mxu0 %v1820
    %1999 = vmatprep.subr.bf16.mxu0 %v1823
    %2000 = vmatpush1.bf16.msra.mxu0 %v1822
    %2001 = vmatprep.subr.bf16.mxu0 %v1825
    %2002 = vmatpush1.bf16.msra.mxu0 %v1824
    %2003 = vmatprep.subr.bf16.mxu0 %v1827
    %2004 = vmatpush1.bf16.msra.mxu0 %v1826
    %2005 = vmatprep.subr.bf16.mxu0 %v1829
    %2006 = vmatpush1.bf16.msra.mxu0 %v1828
    %2007 = vmatprep.subr.bf16.mxu0 %v1831
    %2008 = vmatpush1.bf16.msra.mxu0 %v1830
    %2009 = vmatprep.subr.bf16.mxu0 %v1833
    %2010 = vmatpush1.bf16.msra.mxu0 %v1832
    %2011 = vmatprep.subr.bf16.mxu0 %v1835
    %2012 = vmatpush1.bf16.msra.mxu0 %v1834
    %2013 = vmatprep.subr.bf16.mxu0 %v1837
    %2014 = vmatpush1.bf16.msra.mxu0 %v1836
    %2015 = vmatprep.subr.bf16.mxu0 %v1839
    %2016 = vmatpush1.bf16.msra.mxu0 %v1838
    %2017 = vmatprep.subr.bf16.mxu0 %v1841
    %2018 = vmatpush1.bf16.msra.mxu0 %v1840
    %2019 = vmatprep.subr.bf16.mxu0 %v1843
    %2020 = vmatpush1.bf16.msra.mxu0 %v1842
    %2021 = vmatprep.subr.bf16.mxu0 %v1845
    %2022 = vmatpush1.bf16.msra.mxu0 %v1844
    %2023 = vmatprep.subr.bf16.mxu0 %v1847
    %2024 = vmatpush1.bf16.msra.mxu0 %v1846
    %2025 = vmatprep.subr.bf16.mxu0 %v1849
    %2026 = vmatpush1.bf16.msra.mxu0 %v1848
    %2027 = vmatprep.mubr.bf16.mxu0 %v1992
    %2028 = vmatmul.mubr.bf16.gmra.mrb[0].mxu0 %v1985
    %v2029 = vpop.f32.mrb[0].mxu0
    %v2030 = vadd.f32 0.0, %v2029
    %v2031 = vpop.f32.mrb[0].mxu0
    %v2032 = vadd.f32 0.0, %v2031
    %v2033 = vpop.f32.mrb[0].mxu0
    %v2034 = vpop.f32.mrb[0].mxu0
    %2035 = vdwg.mxu0
    %v2068 = vunpack.c.l.b16 %v1936
    %v2069 = vunpack.c.h.b16 %v1936
    %v2070 = vunpack.c.l.b16 %v1937
    %v2071 = vunpack.c.h.b16 %v1937
    %v2072 = vunpack.c.l.b16 %v1938
    %v2073 = vunpack.c.h.b16 %v1938
    %v2074 = vunpack.c.l.b16 %v1939
    %v2075 = vunpack.c.h.b16 %v1939
    %v2076 = vunpack.c.l.b16 %v1940
    %v2077 = vunpack.c.h.b16 %v1940
    %v2078 = vunpack.c.l.b16 %v1941
    %v2079 = vunpack.c.h.b16 %v1941
    %v2080 = vunpack.c.l.b16 %v1942
    %v2081 = vunpack.c.h.b16 %v1942
    %v2082 = vunpack.c.l.b16 %v1943
    %v2083 = vunpack.c.h.b16 %v1943
    %v2084 = vunpack.c.l.b16 %v1944
    %v2085 = vunpack.c.h.b16 %v1944
    %v2086 = vunpack.c.l.b16 %v1945
    %v2087 = vunpack.c.h.b16 %v1945
    %v2088 = vunpack.c.l.b16 %v1946
    %v2089 = vunpack.c.h.b16 %v1946
    %v2090 = vunpack.c.l.b16 %v1947
    %v2091 = vunpack.c.h.b16 %v1947
    %v2092 = vunpack.c.l.b16 %v1948
    %v2093 = vunpack.c.h.b16 %v1948
    %v2094 = vunpack.c.l.b16 %v1949
    %v2095 = vunpack.c.h.b16 %v1949
    %v2096 = vunpack.c.l.b16 %v1950
    %v2097 = vunpack.c.h.b16 %v1950
    %v2098 = vunpack.c.l.b16 %v1951
    %v2099 = vunpack.c.h.b16 %v1951
    %v2100 = vunpack.c.l.b16 %v1952
    %v2101 = vunpack.c.h.b16 %v1952
    %v2102 = vunpack.c.l.b16 %v1953
    %v2103 = vunpack.c.h.b16 %v1953
    %v2104 = vunpack.c.l.b16 %v1954
    %v2105 = vunpack.c.h.b16 %v1954
    %v2106 = vunpack.c.l.b16 %v1955
    %v2107 = vunpack.c.h.b16 %v1955
    %v2108 = vunpack.c.l.b16 %v1956
    %v2109 = vunpack.c.h.b16 %v1956
    %v2110 = vunpack.c.l.b16 %v1957
    %v2111 = vunpack.c.h.b16 %v1957
    %v2112 = vunpack.c.l.b16 %v1958
    %v2113 = vunpack.c.h.b16 %v1958
    %v2114 = vunpack.c.l.b16 %v1959
    %v2115 = vunpack.c.h.b16 %v1959
    %v2116 = vunpack.c.l.b16 %v1960
    %v2117 = vunpack.c.h.b16 %v1960
    %v2118 = vunpack.c.l.b16 %v1961
    %v2119 = vunpack.c.h.b16 %v1961
    %v2120 = vunpack.c.l.b16 %v1962
    %v2121 = vunpack.c.h.b16 %v1962
    %v2122 = vunpack.c.l.b16 %v1963
    %v2123 = vunpack.c.h.b16 %v1963
    %v2124 = vunpack.c.l.b16 %v1964
    %v2125 = vunpack.c.h.b16 %v1964
    %v2126 = vunpack.c.l.b16 %v1965
    %v2127 = vunpack.c.h.b16 %v1965
    %v2128 = vunpack.c.l.b16 %v1966
    %v2129 = vunpack.c.h.b16 %v1966
    %v2130 = vunpack.c.l.b16 %v1967
    %v2131 = vunpack.c.h.b16 %v1967
    %v2132 = vpack.c.b16 %v2070, %v2068
    %v2133 = vpack.c.b16 %v2071, %v2069
    %v2134 = vpack.c.b16 %v2074, %v2072
    %v2135 = vpack.c.b16 %v2075, %v2073
    %v2136 = vpack.c.b16 %v2078, %v2076
    %v2137 = vpack.c.b16 %v2079, %v2077
    %v2138 = vpack.c.b16 %v2082, %v2080
    %v2139 = vpack.c.b16 %v2083, %v2081
    %v2140 = vpack.c.b16 %v2086, %v2084
    %v2141 = vpack.c.b16 %v2087, %v2085
    %v2142 = vpack.c.b16 %v2090, %v2088
    %v2143 = vpack.c.b16 %v2091, %v2089
    %v2144 = vpack.c.b16 %v2094, %v2092
    %v2145 = vpack.c.b16 %v2095, %v2093
    %v2146 = vpack.c.b16 %v2098, %v2096
    %v2147 = vpack.c.b16 %v2099, %v2097
    %v2148 = vpack.c.b16 %v2102, %v2100
    %v2149 = vpack.c.b16 %v2103, %v2101
    %v2150 = vpack.c.b16 %v2106, %v2104
    %v2151 = vpack.c.b16 %v2107, %v2105
    %v2152 = vpack.c.b16 %v2110, %v2108
    %v2153 = vpack.c.b16 %v2111, %v2109
    %v2154 = vpack.c.b16 %v2114, %v2112
    %v2155 = vpack.c.b16 %v2115, %v2113
    %v2156 = vpack.c.b16 %v2118, %v2116
    %v2157 = vpack.c.b16 %v2119, %v2117
    %v2158 = vpack.c.b16 %v2122, %v2120
    %v2159 = vpack.c.b16 %v2123, %v2121
    %v2160 = vpack.c.b16 %v2126, %v2124
    %v2161 = vpack.c.b16 %v2127, %v2125
    %v2162 = vpack.c.b16 %v2130, %v2128
    %v2163 = vpack.c.b16 %v2131, %v2129
    %2196 = vmatprep.subr.bf16.mxu0 %v2133
    %2197 = vmatpush1.bf16.msra.mxu0 %v2132
    %2198 = vmatprep.subr.bf16.mxu0 %v2135
    %2199 = vmatpush1.bf16.msra.mxu0 %v2134
    %2200 = vmatprep.subr.bf16.mxu0 %v2137
    %2201 = vmatpush1.bf16.msra.mxu0 %v2136
    %2202 = vmatprep.subr.bf16.mxu0 %v2139
    %2203 = vmatpush1.bf16.msra.mxu0 %v2138
    %2204 = vmatprep.subr.bf16.mxu0 %v2141
    %2205 = vmatpush1.bf16.msra.mxu0 %v2140
    %2206 = vmatprep.subr.bf16.mxu0 %v2143
    %2207 = vmatpush1.bf16.msra.mxu0 %v2142
    %2208 = vmatprep.subr.bf16.mxu0 %v2145
    %2209 = vmatpush1.bf16.msra.mxu0 %v2144
    %2210 = vmatprep.subr.bf16.mxu0 %v2147
    %2211 = vmatpush1.bf16.msra.mxu0 %v2146
    %2212 = vmatprep.subr.bf16.mxu0 %v2149
    %2213 = vmatpush1.bf16.msra.mxu0 %v2148
    %2214 = vmatprep.subr.bf16.mxu0 %v2151
    %2215 = vmatpush1.bf16.msra.mxu0 %v2150
    %2216 = vmatprep.subr.bf16.mxu0 %v2153
    %2217 = vmatpush1.bf16.msra.mxu0 %v2152
    %2218 = vmatprep.subr.bf16.mxu0 %v2155
    %2219 = vmatpush1.bf16.msra.mxu0 %v2154
    %2220 = vmatprep.subr.bf16.mxu0 %v2157
    %2221 = vmatpush1.bf16.msra.mxu0 %v2156
    %2222 = vmatprep.subr.bf16.mxu0 %v2159
    %2223 = vmatpush1.bf16.msra.mxu0 %v2158
    %2224 = vmatprep.subr.bf16.mxu0 %v2161
    %2225 = vmatpush1.bf16.msra.mxu0 %v2160
    %2226 = vmatprep.subr.bf16.mxu0 %v2163
    %2227 = vmatpush1.bf16.msra.mxu0 %v2162
    %2228 = vmatprep.mubr.bf16.mxu0 %v1493
    %2229 = vmatmul.mubr.bf16.gmra.mrb[0].mxu0 %v1486
    %v2230 = vpop.f32.mrb[0].mxu0
    %v2231 = vadd.f32 %v2030, %v2230
    %v2232 = vpop.f32.mrb[0].mxu0
    %v2233 = vadd.f32 %v2032, %v2232
    %v2234 = vpop.f32.mrb[0].mxu0
    %v2235 = vpop.f32.mrb[0].mxu0
    %2236 = vdwg.mxu0
    %s2237 = scalar_lea.vmem [#allocation2], 6
    %v2238 = vld [vmem:[%s2237] sm:$0x3]
    %v2241 = vunpack.c.l.s4 1966171168
    %v2242 = vunpack.c.0.s8 %v2241
    %v2243 = vlaneseq
    %v2244 = vshrl.u32 %v2243, 7
    %v2245 = vsub.s32 %v2242, %v2244
    %v2246 = vrot.slane %v2238, %v2245
    %v2247 = vcombine.high %v2246, %v2246
    %v2249 = vunpack.c.l.s4 1966171168
    %v2250 = vunpack.c.0.s8 %v2249
    %v2251 = vlaneseq
    %v2252 = vshrl.u32 %v2251, 7
    %v2253 = vsub.s32 %v2250, %v2252
    %v2254 = vrot.slane %v2246, %v2253
    %v2256 = vunpack.c.l.s4 1966171168
    %v2257 = vunpack.c.0.s8 %v2256
    %v2258 = vlaneseq
    %v2259 = vshrl.u32 %v2258, 7
    %v2260 = vsub.s32 %v2257, %v2259
    %v2261 = vrot.slane %v2247, %v2260
    %2264 = vmatprep.subr.bf16.mxu0 %v1593
    %2265 = vmatpush1.bf16.msra.mxu0 %v1592
    %2266 = vmatprep.subr.bf16.mxu0 %v1595
    %2267 = vmatpush1.bf16.msra.mxu0 %v1594
    %2268 = vmatprep.subr.bf16.mxu0 %v1597
    %2269 = vmatpush1.bf16.msra.mxu0 %v1596
    %2270 = vmatprep.subr.bf16.mxu0 %v1599
    %2271 = vmatpush1.bf16.msra.mxu0 %v1598
    %2272 = vmatprep.subr.bf16.mxu0 %v1601
    %2273 = vmatpush1.bf16.msra.mxu0 %v1600
    %2274 = vmatprep.subr.bf16.mxu0 %v1603
    %2275 = vmatpush1.bf16.msra.mxu0 %v1602
    %2276 = vmatprep.subr.bf16.mxu0 %v1605
    %2277 = vmatpush1.bf16.msra.mxu0 %v1604
    %2278 = vmatprep.subr.bf16.mxu0 %v1607
    %2279 = vmatpush1.bf16.msra.mxu0 %v1606
    %2280 = vmatprep.subr.bf16.mxu0 %v1609
    %2281 = vmatpush1.bf16.msra.mxu0 %v1608
    %2282 = vmatprep.subr.bf16.mxu0 %v1611
    %2283 = vmatpush1.bf16.msra.mxu0 %v1610
    %2284 = vmatprep.subr.bf16.mxu0 %v1613
    %2285 = vmatpush1.bf16.msra.mxu0 %v1612
    %2286 = vmatprep.subr.bf16.mxu0 %v1615
    %2287 = vmatpush1.bf16.msra.mxu0 %v1614
    %2288 = vmatprep.subr.bf16.mxu0 %v1617
    %2289 = vmatpush1.bf16.msra.mxu0 %v1616
    %2290 = vmatprep.subr.bf16.mxu0 %v1619
    %2291 = vmatpush1.bf16.msra.mxu0 %v1618
    %2292 = vmatprep.subr.bf16.mxu0 %v1621
    %2293 = vmatpush1.bf16.msra.mxu0 %v1620
    %2294 = vmatprep.subr.bf16.mxu0 %v1623
    %2295 = vmatpush1.bf16.msra.mxu0 %v1622
    %2296 = vmatprep.mubr.bf16.mxu0 %v2261
    %2297 = vmatmul.mubr.bf16.gmra.mrb[0].mxu0 %v2254
    %v2298 = vpop.f32.mrb[0].mxu0
    %v2299 = vadd.f32 0.0, %v2298
    %v2300 = vpop.f32.mrb[0].mxu0
    %v2301 = vadd.f32 0.0, %v2300
    %v2302 = vpop.f32.mrb[0].mxu0
    %v2303 = vpop.f32.mrb[0].mxu0
    %2304 = vdwg.mxu0
    %v2305 = vadd.f32 %v2231, %v2299
    %v2306 = vadd.f32 %v2233, %v2301
    %v2307 = vadd.f32 %v2305, %v1927
    %v2308 = vadd.f32 %v2306, %v1931
    %s2309 = scalar_lea.vmem [#allocation2], 8
    %v2310 = vld [vmem:[%s2309] sm:$0x3]
    %v2313 = vunpack.c.l.s4 1966171168
    %v2314 = vunpack.c.0.s8 %v2313
    %v2315 = vlaneseq
    %v2316 = vshrl.u32 %v2315, 7
    %v2317 = vsub.s32 %v2314, %v2316
    %v2318 = vrot.slane %v2310, %v2317
    %v2319 = vcombine.high %v2318, %v2318
    %v2321 = vunpack.c.l.s4 1966171168
    %v2322 = vunpack.c.0.s8 %v2321
    %v2323 = vlaneseq
    %v2324 = vshrl.u32 %v2323, 7
    %v2325 = vsub.s32 %v2322, %v2324
    %v2326 = vrot.slane %v2318, %v2325
    %v2328 = vunpack.c.l.s4 1966171168
    %v2329 = vunpack.c.0.s8 %v2328
    %v2330 = vlaneseq
    %v2331 = vshrl.u32 %v2330, 7
    %v2332 = vsub.s32 %v2329, %v2331
    %v2333 = vrot.slane %v2319, %v2332
    %2336 = vmatprep.subr.bf16.mxu0 %v1819
    %2337 = vmatpush1.bf16.msra.mxu0 %v1818
    %2338 = vmatprep.subr.bf16.mxu0 %v1821
    %2339 = vmatpush1.bf16.msra.mxu0 %v1820
    %2340 = vmatprep.subr.bf16.mxu0 %v1823
    %2341 = vmatpush1.bf16.msra.mxu0 %v1822
    %2342 = vmatprep.subr.bf16.mxu0 %v1825
    %2343 = vmatpush1.bf16.msra.mxu0 %v1824
    %2344 = vmatprep.subr.bf16.mxu0 %v1827
    %2345 = vmatpush1.bf16.msra.mxu0 %v1826
    %2346 = vmatprep.subr.bf16.mxu0 %v1829
    %2347 = vmatpush1.bf16.msra.mxu0 %v1828
    %2348 = vmatprep.subr.bf16.mxu0 %v1831
    %2349 = vmatpush1.bf16.msra.mxu0 %v1830
    %2350 = vmatprep.subr.bf16.mxu0 %v1833
    %2351 = vmatpush1.bf16.msra.mxu0 %v1832
    %2352 = vmatprep.subr.bf16.mxu0 %v1835
    %2353 = vmatpush1.bf16.msra.mxu0 %v1834
    %2354 = vmatprep.subr.bf16.mxu0 %v1837
    %2355 = vmatpush1.bf16.msra.mxu0 %v1836
    %2356 = vmatprep.subr.bf16.mxu0 %v1839
    %2357 = vmatpush1.bf16.msra.mxu0 %v1838
    %2358 = vmatprep.subr.bf16.mxu0 %v1841
    %2359 = vmatpush1.bf16.msra.mxu0 %v1840
    %2360 = vmatprep.subr.bf16.mxu0 %v1843
    %2361 = vmatpush1.bf16.msra.mxu0 %v1842
    %2362 = vmatprep.subr.bf16.mxu0 %v1845
    %2363 = vmatpush1.bf16.msra.mxu0 %v1844
    %2364 = vmatprep.subr.bf16.mxu0 %v1847
    %2365 = vmatpush1.bf16.msra.mxu0 %v1846
    %2366 = vmatprep.subr.bf16.mxu0 %v1849
    %2367 = vmatpush1.bf16.msra.mxu0 %v1848
    %2368 = vmatprep.mubr.bf16.mxu0 %v2333
    %2369 = vmatmul.mubr.bf16.gmra.mrb[0].mxu0 %v2326
    %v2370 = vpop.f32.mrb[0].mxu0
    %v2371 = vadd.f32 0.0, %v2370
    %v2372 = vpop.f32.mrb[0].mxu0
    %v2373 = vadd.f32 0.0, %v2372
    %v2374 = vpop.f32.mrb[0].mxu0
    %v2375 = vpop.f32.mrb[0].mxu0
    %2376 = vdwg.mxu0
    %2377 = vmatprep.subr.bf16.mxu0 %v2133
    %2378 = vmatpush1.bf16.msra.mxu0 %v2132
    %2379 = vmatprep.subr.bf16.mxu0 %v2135
    %2380 = vmatpush1.bf16.msra.mxu0 %v2134
    %2381 = vmatprep.subr.bf16.mxu0 %v2137
    %2382 = vmatpush1.bf16.msra.mxu0 %v2136
    %2383 = vmatprep.subr.bf16.mxu0 %v2139
    %2384 = vmatpush1.bf16.msra.mxu0 %v2138
    %2385 = vmatprep.subr.bf16.mxu0 %v2141
    %2386 = vmatpush1.bf16.msra.mxu0 %v2140
    %2387 = vmatprep.subr.bf16.mxu0 %v2143
    %2388 = vmatpush1.bf16.msra.mxu0 %v2142
    %2389 = vmatprep.subr.bf16.mxu0 %v2145
    %2390 = vmatpush1.bf16.msra.mxu0 %v2144
    %2391 = vmatprep.subr.bf16.mxu0 %v2147
    %2392 = vmatpush1.bf16.msra.mxu0 %v2146
    %2393 = vmatprep.subr.bf16.mxu0 %v2149
    %2394 = vmatpush1.bf16.msra.mxu0 %v2148
    %2395 = vmatprep.subr.bf16.mxu0 %v2151
    %2396 = vmatpush1.bf16.msra.mxu0 %v2150
    %2397 = vmatprep.subr.bf16.mxu0 %v2153
    %2398 = vmatpush1.bf16.msra.mxu0 %v2152
    %2399 = vmatprep.subr.bf16.mxu0 %v2155
    %2400 = vmatpush1.bf16.msra.mxu0 %v2154
    %2401 = vmatprep.subr.bf16.mxu0 %v2157
    %2402 = vmatpush1.bf16.msra.mxu0 %v2156
    %2403 = vmatprep.subr.bf16.mxu0 %v2159
    %2404 = vmatpush1.bf16.msra.mxu0 %v2158
    %2405 = vmatprep.subr.bf16.mxu0 %v2161
    %2406 = vmatpush1.bf16.msra.mxu0 %v2160
    %2407 = vmatprep.subr.bf16.mxu0 %v2163
    %2408 = vmatpush1.bf16.msra.mxu0 %v2162
    %2409 = vmatprep.mubr.bf16.mxu0 %v2261
    %2410 = vmatmul.mubr.bf16.gmra.mrb[0].mxu0 %v2254
    %v2411 = vpop.f32.mrb[0].mxu0
    %v2412 = vadd.f32 %v2371, %v2411
    %v2413 = vpop.f32.mrb[0].mxu0
    %v2414 = vadd.f32 %v2373, %v2413
    %v2415 = vpop.f32.mrb[0].mxu0
    %v2416 = vpop.f32.mrb[0].mxu0
    %2417 = vdwg.mxu0
    %s2418 = scalar_lea.vmem [#allocation2], 10
    %v2419 = vld [vmem:[%s2418] sm:$0x3]
    %v2422 = vunpack.c.l.s4 1966171168
    %v2423 = vunpack.c.0.s8 %v2422
    %v2424 = vlaneseq
    %v2425 = vshrl.u32 %v2424, 7
    %v2426 = vsub.s32 %v2423, %v2425
    %v2427 = vrot.slane %v2419, %v2426
    %v2428 = vcombine.high %v2427, %v2427
    %v2430 = vunpack.c.l.s4 1966171168
    %v2431 = vunpack.c.0.s8 %v2430
    %v2432 = vlaneseq
    %v2433 = vshrl.u32 %v2432, 7
    %v2434 = vsub.s32 %v2431, %v2433
    %v2435 = vrot.slane %v2427, %v2434
    %v2437 = vunpack.c.l.s4 1966171168
    %v2438 = vunpack.c.0.s8 %v2437
    %v2439 = vlaneseq
    %v2440 = vshrl.u32 %v2439, 7
    %v2441 = vsub.s32 %v2438, %v2440
    %v2442 = vrot.slane %v2428, %v2441
    %2445 = vmatprep.subr.bf16.mxu0 %v1593
    %2446 = vmatpush1.bf16.msra.mxu0 %v1592
    %2447 = vmatprep.subr.bf16.mxu0 %v1595
    %2448 = vmatpush1.bf16.msra.mxu0 %v1594
    %2449 = vmatprep.subr.bf16.mxu0 %v1597
    %2450 = vmatpush1.bf16.msra.mxu0 %v1596
    %2451 = vmatprep.subr.bf16.mxu0 %v1599
    %2452 = vmatpush1.bf16.msra.mxu0 %v1598
    %2453 = vmatprep.subr.bf16.mxu0 %v1601
    %2454 = vmatpush1.bf16.msra.mxu0 %v1600
    %2455 = vmatprep.subr.bf16.mxu0 %v1603
    %2456 = vmatpush1.bf16.msra.mxu0 %v1602
    %2457 = vmatprep.subr.bf16.mxu0 %v1605
    %2458 = vmatpush1.bf16.msra.mxu0 %v1604
    %2459 = vmatprep.subr.bf16.mxu0 %v1607
    %2460 = vmatpush1.bf16.msra.mxu0 %v1606
    %2461 = vmatprep.subr.bf16.mxu0 %v1609
    %2462 = vmatpush1.bf16.msra.mxu0 %v1608
    %2463 = vmatprep.subr.bf16.mxu0 %v1611
    %2464 = vmatpush1.bf16.msra.mxu0 %v1610
    %2465 = vmatprep.subr.bf16.mxu0 %v1613
    %2466 = vmatpush1.bf16.msra.mxu0 %v1612
    %2467 = vmatprep.subr.bf16.mxu0 %v1615
    %2468 = vmatpush1.bf16.msra.mxu0 %v1614
    %2469 = vmatprep.subr.bf16.mxu0 %v1617
    %2470 = vmatpush1.bf16.msra.mxu0 %v1616
    %2471 = vmatprep.subr.bf16.mxu0 %v1619
    %2472 = vmatpush1.bf16.msra.mxu0 %v1618
    %2473 = vmatprep.subr.bf16.mxu0 %v1621
    %2474 = vmatpush1.bf16.msra.mxu0 %v1620
    %2475 = vmatprep.subr.bf16.mxu0 %v1623
    %2476 = vmatpush1.bf16.msra.mxu0 %v1622
    %2477 = vmatprep.mubr.bf16.mxu0 %v2442
    %2478 = vmatmul.mubr.bf16.gmra.mrb[0].mxu0 %v2435
    %v2479 = vpop.f32.mrb[0].mxu0
    %v2480 = vadd.f32 0.0, %v2479
    %v2481 = vpop.f32.mrb[0].mxu0
    %v2482 = vadd.f32 0.0, %v2481
    %v2483 = vpop.f32.mrb[0].mxu0
    %v2484 = vpop.f32.mrb[0].mxu0
    %2485 = vdwg.mxu0
    %v2486 = vadd.f32 %v2412, %v2480
    %v2487 = vadd.f32 %v2414, %v2482
    %v2488 = vadd.f32 %v2486, %v1927
    %v2489 = vadd.f32 %v2487, %v1931
    %s2490 = scalar_lea.vmem [#allocation2], 12
    %v2491 = vld [vmem:[%s2490] sm:$0x3]
    %v2494 = vunpack.c.l.s4 1966171168
    %v2495 = vunpack.c.0.s8 %v2494
    %v2496 = vlaneseq
    %v2497 = vshrl.u32 %v2496, 7
    %v2498 = vsub.s32 %v2495, %v2497
    %v2499 = vrot.slane %v2491, %v2498
    %v2500 = vcombine.high %v2499, %v2499
    %v2502 = vunpack.c.l.s4 1966171168
    %v2503 = vunpack.c.0.s8 %v2502
    %v2504 = vlaneseq
    %v2505 = vshrl.u32 %v2504, 7
    %v2506 = vsub.s32 %v2503, %v2505
    %v2507 = vrot.slane %v2499, %v2506
    %v2509 = vunpack.c.l.s4 1966171168
    %v2510 = vunpack.c.0.s8 %v2509
    %v2511 = vlaneseq
    %v2512 = vshrl.u32 %v2511, 7
    %v2513 = vsub.s32 %v2510, %v2512
    %v2514 = vrot.slane %v2500, %v2513
    %2517 = vmatprep.subr.bf16.mxu0 %v1819
    %2518 = vmatpush1.bf16.msra.mxu0 %v1818
    %2519 = vmatprep.subr.bf16.mxu0 %v1821
    %2520 = vmatpush1.bf16.msra.mxu0 %v1820
    %2521 = vmatprep.subr.bf16.mxu0 %v1823
    %2522 = vmatpush1.bf16.msra.mxu0 %v1822
    %2523 = vmatprep.subr.bf16.mxu0 %v1825
    %2524 = vmatpush1.bf16.msra.mxu0 %v1824
    %2525 = vmatprep.subr.bf16.mxu0 %v1827
    %2526 = vmatpush1.bf16.msra.mxu0 %v1826
    %2527 = vmatprep.subr.bf16.mxu0 %v1829
    %2528 = vmatpush1.bf16.msra.mxu0 %v1828
    %2529 = vmatprep.subr.bf16.mxu0 %v1831
    %2530 = vmatpush1.bf16.msra.mxu0 %v1830
    %2531 = vmatprep.subr.bf16.mxu0 %v1833
    %2532 = vmatpush1.bf16.msra.mxu0 %v1832
    %2533 = vmatprep.subr.bf16.mxu0 %v1835
    %2534 = vmatpush1.bf16.msra.mxu0 %v1834
    %2535 = vmatprep.subr.bf16.mxu0 %v1837
    %2536 = vmatpush1.bf16.msra.mxu0 %v1836
    %2537 = vmatprep.subr.bf16.mxu0 %v1839
    %2538 = vmatpush1.bf16.msra.mxu0 %v1838
    %2539 = vmatprep.subr.bf16.mxu0 %v1841
    %2540 = vmatpush1.bf16.msra.mxu0 %v1840
    %2541 = vmatprep.subr.bf16.mxu0 %v1843
    %2542 = vmatpush1.bf16.msra.mxu0 %v1842
    %2543 = vmatprep.subr.bf16.mxu0 %v1845
    %2544 = vmatpush1.bf16.msra.mxu0 %v1844
    %2545 = vmatprep.subr.bf16.mxu0 %v1847
    %2546 = vmatpush1.bf16.msra.mxu0 %v1846
    %2547 = vmatprep.subr.bf16.mxu0 %v1849
    %2548 = vmatpush1.bf16.msra.mxu0 %v1848
    %2549 = vmatprep.mubr.bf16.mxu0 %v2514
    %2550 = vmatmul.mubr.bf16.gmra.mrb[0].mxu0 %v2507
    %v2551 = vpop.f32.mrb[0].mxu0
    %v2552 = vadd.f32 0.0, %v2551
    %v2553 = vpop.f32.mrb[0].mxu0
    %v2554 = vadd.f32 0.0, %v2553
    %v2555 = vpop.f32.mrb[0].mxu0
    %v2556 = vpop.f32.mrb[0].mxu0
    %2557 = vdwg.mxu0
    %2558 = vmatprep.subr.bf16.mxu0 %v2133
    %2559 = vmatpush1.bf16.msra.mxu0 %v2132
    %2560 = vmatprep.subr.bf16.mxu0 %v2135
    %2561 = vmatpush1.bf16.msra.mxu0 %v2134
    %2562 = vmatprep.subr.bf16.mxu0 %v2137
    %2563 = vmatpush1.bf16.msra.mxu0 %v2136
    %2564 = vmatprep.subr.bf16.mxu0 %v2139
    %2565 = vmatpush1.bf16.msra.mxu0 %v2138
    %2566 = vmatprep.subr.bf16.mxu0 %v2141
    %2567 = vmatpush1.bf16.msra.mxu0 %v2140
    %2568 = vmatprep.subr.bf16.mxu0 %v2143
    %2569 = vmatpush1.bf16.msra.mxu0 %v2142
    %2570 = vmatprep.subr.bf16.mxu0 %v2145
    %2571 = vmatpush1.bf16.msra.mxu0 %v2144
    %2572 = vmatprep.subr.bf16.mxu0 %v2147
    %2573 = vmatpush1.bf16.msra.mxu0 %v2146
    %2574 = vmatprep.subr.bf16.mxu0 %v2149
    %2575 = vmatpush1.bf16.msra.mxu0 %v2148
    %2576 = vmatprep.subr.bf16.mxu0 %v2151
    %2577 = vmatpush1.bf16.msra.mxu0 %v2150
    %2578 = vmatprep.subr.bf16.mxu0 %v2153
    %2579 = vmatpush1.bf16.msra.mxu0 %v2152
    %2580 = vmatprep.subr.bf16.mxu0 %v2155
    %2581 = vmatpush1.bf16.msra.mxu0 %v2154
    %2582 = vmatprep.subr.bf16.mxu0 %v2157
    %2583 = vmatpush1.bf16.msra.mxu0 %v2156
    %2584 = vmatprep.subr.bf16.mxu0 %v2159
    %2585 = vmatpush1.bf16.msra.mxu0 %v2158
    %2586 = vmatprep.subr.bf16.mxu0 %v2161
    %2587 = vmatpush1.bf16.msra.mxu0 %v2160
    %2588 = vmatprep.subr.bf16.mxu0 %v2163
    %2589 = vmatpush1.bf16.msra.mxu0 %v2162
    %2590 = vmatprep.mubr.bf16.mxu0 %v2442
    %2591 = vmatmul.mubr.bf16.gmra.mrb[0].mxu0 %v2435
    %v2592 = vpop.f32.mrb[0].mxu0
    %v2593 = vadd.f32 %v2552, %v2592
    %v2594 = vpop.f32.mrb[0].mxu0
    %v2595 = vadd.f32 %v2554, %v2594
    %v2596 = vpop.f32.mrb[0].mxu0
    %v2597 = vpop.f32.mrb[0].mxu0
    %2598 = vdwg.mxu0
    %s2599 = scalar_lea.vmem [#allocation2], 14
    %v2600 = vld [vmem:[%s2599] sm:$0x3]
    %v2603 = vunpack.c.l.s4 1966171168
    %v2604 = vunpack.c.0.s8 %v2603
    %v2605 = vlaneseq
    %v2606 = vshrl.u32 %v2605, 7
    %v2607 = vsub.s32 %v2604, %v2606
    %v2608 = vrot.slane %v2600, %v2607
    %v2609 = vcombine.high %v2608, %v2608
    %v2611 = vunpack.c.l.s4 1966171168
    %v2612 = vunpack.c.0.s8 %v2611
    %v2613 = vlaneseq
    %v2614 = vshrl.u32 %v2613, 7
    %v2615 = vsub.s32 %v2612, %v2614
    %v2616 = vrot.slane %v2608, %v2615
    %v2618 = vunpack.c.l.s4 1966171168
    %v2619 = vunpack.c.0.s8 %v2618
    %v2620 = vlaneseq
    %v2621 = vshrl.u32 %v2620, 7
    %v2622 = vsub.s32 %v2619, %v2621
    %v2623 = vrot.slane %v2609, %v2622
    %2626 = vmatprep.subr.bf16.mxu0 %v1593
    %2627 = vmatpush1.bf16.msra.mxu0 %v1592
    %2628 = vmatprep.subr.bf16.mxu0 %v1595
    %2629 = vmatpush1.bf16.msra.mxu0 %v1594
    %2630 = vmatprep.subr.bf16.mxu0 %v1597
    %2631 = vmatpush1.bf16.msra.mxu0 %v1596
    %2632 = vmatprep.subr.bf16.mxu0 %v1599
    %2633 = vmatpush1.bf16.msra.mxu0 %v1598
    %2634 = vmatprep.subr.bf16.mxu0 %v1601
    %2635 = vmatpush1.bf16.msra.mxu0 %v1600
    %2636 = vmatprep.subr.bf16.mxu0 %v1603
    %2637 = vmatpush1.bf16.msra.mxu0 %v1602
    %2638 = vmatprep.subr.bf16.mxu0 %v1605
    %2639 = vmatpush1.bf16.msra.mxu0 %v1604
    %2640 = vmatprep.subr.bf16.mxu0 %v1607
    %2641 = vmatpush1.bf16.msra.mxu0 %v1606
    %2642 = vmatprep.subr.bf16.mxu0 %v1609
    %2643 = vmatpush1.bf16.msra.mxu0 %v1608
    %2644 = vmatprep.subr.bf16.mxu0 %v1611
    %2645 = vmatpush1.bf16.msra.mxu0 %v1610
    %2646 = vmatprep.subr.bf16.mxu0 %v1613
    %2647 = vmatpush1.bf16.msra.mxu0 %v1612
    %2648 = vmatprep.subr.bf16.mxu0 %v1615
    %2649 = vmatpush1.bf16.msra.mxu0 %v1614
    %2650 = vmatprep.subr.bf16.mxu0 %v1617
    %2651 = vmatpush1.bf16.msra.mxu0 %v1616
    %2652 = vmatprep.subr.bf16.mxu0 %v1619
    %2653 = vmatpush1.bf16.msra.mxu0 %v1618
    %2654 = vmatprep.subr.bf16.mxu0 %v1621
    %2655 = vmatpush1.bf16.msra.mxu0 %v1620
    %2656 = vmatprep.subr.bf16.mxu0 %v1623
    %2657 = vmatpush1.bf16.msra.mxu0 %v1622
    %2658 = vmatprep.mubr.bf16.mxu0 %v2623
    %2659 = vmatmul.mubr.bf16.gmra.mrb[0].mxu0 %v2616
    %v2660 = vpop.f32.mrb[0].mxu0
    %v2661 = vadd.f32 0.0, %v2660
    %v2662 = vpop.f32.mrb[0].mxu0
    %v2663 = vadd.f32 0.0, %v2662
    %v2664 = vpop.f32.mrb[0].mxu0
    %v2665 = vpop.f32.mrb[0].mxu0
    %2666 = vdwg.mxu0
    %v2667 = vadd.f32 %v2593, %v2661
    %v2668 = vadd.f32 %v2595, %v2663
    %v2669 = vadd.f32 %v2667, %v1927
    %v2670 = vadd.f32 %v2668, %v1931
    %v2671 = vld [vmem:[%s6] sm:$0x3]
    %v2672 = vld [vmem:[%s6 + $0x2] sm:$0x3]
    %v2673 = vld [vmem:[%s6 + $0x4] sm:$0x3]
    %v2674 = vld [vmem:[%s6 + $0x6] sm:$0x3]
    %v2675 = vld [vmem:[%s7] sm:$0x3]
    %v2676 = vld [vmem:[%s7 + $0x2] sm:$0x3]
    %v2677 = vld [vmem:[%s7 + $0x4] sm:$0x3]
    %v2678 = vld [vmem:[%s7 + $0x6] sm:$0x3]
    %v2679 = vsel %vm814, %v1934, 0.0
    %v2680 = vsel %vm814, %v1935, 0.0
    %v2681 = vadd.f32 %v2679, %v2680
    %2682 = vadd.xlane.f32.xlu0 %v2681
    %v2683 = vpop.xlane.xlu0 %2682
    %v2684 = vsel %vm814, %v2307, 0.0
    %v2685 = vsel %vm814, %v2308, 0.0
    %v2686 = vadd.f32 %v2684, %v2685
    %2687 = vadd.xlane.f32.xlu0 %v2686
    %v2688 = vpop.xlane.xlu0 %2687
    %v2689 = vsel %vm814, %v2488, 0.0
    %v2690 = vsel %vm814, %v2489, 0.0
    %v2691 = vadd.f32 %v2689, %v2690
    %2692 = vadd.xlane.f32.xlu0 %v2691
    %v2693 = vpop.xlane.xlu0 %2692
    %v2694 = vsel %vm814, %v2669, 0.0
    %v2695 = vsel %vm814, %v2670, 0.0
    %v2696 = vadd.f32 %v2694, %v2695
    %2697 = vadd.xlane.f32.xlu0 %v2696
    %v2698 = vpop.xlane.xlu0 %2697
    %v2699 = vsel %vm814, %v2683, 0.0
    %v2700 = vsel %vm814, %v2688, 0.0
    %v2701 = vadd.f32 %v2699, %v2700
    %v2702 = vsel %vm814, %v2693, 0.0
    %v2703 = vadd.f32 %v2701, %v2702
    %v2704 = vsel %vm814, %v2698, 0.0
    %v2705 = vadd.f32 %v2703, %v2704
    %v2706 = vmul.f32 %v2705, 0.0009765625
    %v2707 = vsub.f32 %v1934, %v2706
    %v2708 = vsub.f32 %v1935, %v2706
    %v2709 = vsub.f32 %v2307, %v2706
    %v2710 = vsub.f32 %v2308, %v2706
    %v2711 = vsub.f32 %v2488, %v2706
    %v2712 = vsub.f32 %v2489, %v2706
    %v2713 = vsub.f32 %v2669, %v2706
    %v2714 = vsub.f32 %v2670, %v2706
    %v2715 = vmul.f32 %v2707, %v2707
    %v2716 = vmul.f32 %v2708, %v2708
    %v2717 = vmul.f32 %v2709, %v2709
    %v2718 = vmul.f32 %v2710, %v2710
    %v2719 = vmul.f32 %v2711, %v2711
    %v2720 = vmul.f32 %v2712, %v2712
    %v2721 = vmul.f32 %v2713, %v2713
    %v2722 = vmul.f32 %v2714, %v2714
    %v2723 = vsel %vm814, %v2715, 0.0
    %v2724 = vsel %vm814, %v2716, 0.0
    %v2725 = vadd.f32 %v2723, %v2724
    %2726 = vadd.xlane.f32.xlu0 %v2725
    %v2727 = vpop.xlane.xlu0 %2726
    %v2728 = vsel %vm814, %v2717, 0.0
    %v2729 = vsel %vm814, %v2718, 0.0
    %v2730 = vadd.f32 %v2728, %v2729
    %2731 = vadd.xlane.f32.xlu0 %v2730
    %v2732 = vpop.xlane.xlu0 %2731
    %v2733 = vsel %vm814, %v2719, 0.0
    %v2734 = vsel %vm814, %v2720, 0.0
    %v2735 = vadd.f32 %v2733, %v2734
    %2736 = vadd.xlane.f32.xlu0 %v2735
    %v2737 = vpop.xlane.xlu0 %2736
    %v2738 = vsel %vm814, %v2721, 0.0
    %v2739 = vsel %vm814, %v2722, 0.0
    %v2740 = vadd.f32 %v2738, %v2739
    %2741 = vadd.xlane.f32.xlu0 %v2740
    %v2742 = vpop.xlane.xlu0 %2741
    %v2743 = vsel %vm814, %v2727, 0.0
    %v2744 = vsel %vm814, %v2732, 0.0
    %v2745 = vadd.f32 %v2743, %v2744
    %v2746 = vsel %vm814, %v2737, 0.0
    %v2747 = vadd.f32 %v2745, %v2746
    %v2748 = vsel %vm814, %v2742, 0.0
    %v2749 = vadd.f32 %v2747, %v2748
    %v2750 = vmul.f32 %v2749, 0.0009765625
    %v2751 = vadd.f32 %v2750, 1e-05
    %v2752 = vrsqrt.pop %v2751
    %v2753 = vmul.f32 %v2707, %v2752
    %v2754 = vmul.f32 %v2708, %v2752
    %v2755 = vmul.f32 %v2709, %v2752
    %v2756 = vmul.f32 %v2710, %v2752
    %v2757 = vmul.f32 %v2711, %v2752
    %v2758 = vmul.f32 %v2712, %v2752
    %v2759 = vmul.f32 %v2713, %v2752
    %v2760 = vmul.f32 %v2714, %v2752
    %v2765 = vlaneseq
    %v2766 = vshrl.u32 %v2765, 7
    %v2767 = vsub.s32 0, %v2766
    %v2768 = vrot.slane %v2671, %v2767
    %v2769 = vlaneseq
    %v2770 = vshrl.u32 %v2769, 7
    %v2771 = vsub.s32 1, %v2770
    %v2772 = vrot.slane %v2671, %v2771
    %v2773 = vlaneseq
    %v2774 = vshrl.u32 %v2773, 7
    %v2775 = vsub.s32 0, %v2774
    %v2776 = vrot.slane %v2672, %v2775
    %v2777 = vlaneseq
    %v2778 = vshrl.u32 %v2777, 7
    %v2779 = vsub.s32 1, %v2778
    %v2780 = vrot.slane %v2672, %v2779
    %v2781 = vlaneseq
    %v2782 = vshrl.u32 %v2781, 7
    %v2783 = vsub.s32 0, %v2782
    %v2784 = vrot.slane %v2673, %v2783
    %v2785 = vlaneseq
    %v2786 = vshrl.u32 %v2785, 7
    %v2787 = vsub.s32 1, %v2786
    %v2788 = vrot.slane %v2673, %v2787
    %v2789 = vlaneseq
    %v2790 = vshrl.u32 %v2789, 7
    %v2791 = vsub.s32 0, %v2790
    %v2792 = vrot.slane %v2674, %v2791
    %v2793 = vlaneseq
    %v2794 = vshrl.u32 %v2793, 7
    %v2795 = vsub.s32 1, %v2794
    %v2796 = vrot.slane %v2674, %v2795
    %v2805 = vmul.f32 %v2753, %v2768
    %v2806 = vmul.f32 %v2754, %v2772
    %v2807 = vmul.f32 %v2755, %v2776
    %v2808 = vmul.f32 %v2756, %v2780
    %v2809 = vmul.f32 %v2757, %v2784
    %v2810 = vmul.f32 %v2758, %v2788
    %v2811 = vmul.f32 %v2759, %v2792
    %v2812 = vmul.f32 %v2760, %v2796
    %v2817 = vlaneseq
    %v2818 = vshrl.u32 %v2817, 7
    %v2819 = vsub.s32 0, %v2818
    %v2820 = vrot.slane %v2675, %v2819
    %v2821 = vlaneseq
    %v2822 = vshrl.u32 %v2821, 7
    %v2823 = vsub.s32 1, %v2822
    %v2824 = vrot.slane %v2675, %v2823
    %v2825 = vlaneseq
    %v2826 = vshrl.u32 %v2825, 7
    %v2827 = vsub.s32 0, %v2826
    %v2828 = vrot.slane %v2676, %v2827
    %v2829 = vlaneseq
    %v2830 = vshrl.u32 %v2829, 7
    %v2831 = vsub.s32 1, %v2830
    %v2832 = vrot.slane %v2676, %v2831
    %v2833 = vlaneseq
    %v2834 = vshrl.u32 %v2833, 7
    %v2835 = vsub.s32 0, %v2834
    %v2836 = vrot.slane %v2677, %v2835
    %v2837 = vlaneseq
    %v2838 = vshrl.u32 %v2837, 7
    %v2839 = vsub.s32 1, %v2838
    %v2840 = vrot.slane %v2677, %v2839
    %v2841 = vlaneseq
    %v2842 = vshrl.u32 %v2841, 7
    %v2843 = vsub.s32 0, %v2842
    %v2844 = vrot.slane %v2678, %v2843
    %v2845 = vlaneseq
    %v2846 = vshrl.u32 %v2845, 7
    %v2847 = vsub.s32 1, %v2846
    %v2848 = vrot.slane %v2678, %v2847
    %v2857 = vadd.f32 %v2805, %v2820
    %v2858 = vadd.f32 %v2806, %v2824
    %v2859 = vadd.f32 %v2807, %v2828
    %v2860 = vadd.f32 %v2808, %v2832
    %v2861 = vadd.f32 %v2809, %v2836
    %v2862 = vadd.f32 %v2810, %v2840
    %v2863 = vadd.f32 %v2811, %v2844
    %v2864 = vadd.f32 %v2812, %v2848
    %vm2865 = vcmp.ge.f32.partialorder %v2857, 0.0
    %vm2866 = vcmp.ge.f32.partialorder %v2858, 0.0
    %vm2867 = vcmp.ge.f32.partialorder %v2859, 0.0
    %vm2868 = vcmp.ge.f32.partialorder %v2860, 0.0
    %vm2869 = vcmp.ge.f32.partialorder %v2861, 0.0
    %vm2870 = vcmp.ge.f32.partialorder %v2862, 0.0
    %vm2871 = vcmp.ge.f32.partialorder %v2863, 0.0
    %vm2872 = vcmp.ge.f32.partialorder %v2864, 0.0
    %v2873 = vmul.f32 %v2857, 0.01
    %v2874 = vmul.f32 %v2858, 0.01
    %v2875 = vmul.f32 %v2859, 0.01
    %v2876 = vmul.f32 %v2860, 0.01
    %v2877 = vmul.f32 %v2861, 0.01
    %v2878 = vmul.f32 %v2862, 0.01
    %v2879 = vmul.f32 %v2863, 0.01
    %v2880 = vmul.f32 %v2864, 0.01
    %v2881 = vsel %vm2865, %v2857, %v2873
    %v2882 = vsel %vm2866, %v2858, %v2874
    %v2883 = vsel %vm2867, %v2859, %v2875
    %v2884 = vsel %vm2868, %v2860, %v2876
    %v2885 = vsel %vm2869, %v2861, %v2877
    %v2886 = vsel %vm2870, %v2862, %v2878
    %v2887 = vsel %vm2871, %v2863, %v2879
    %v2888 = vsel %vm2872, %v2864, %v2880
    %v2889 = vpack.c.bf16 %v2881, %v2881
    %v2890 = vpack.c.bf16 %v2882, %v2882
    %v2891 = vpack.c.bf16 %v2883, %v2883
    %v2892 = vpack.c.bf16 %v2884, %v2884
    %v2893 = vpack.c.bf16 %v2885, %v2885
    %v2894 = vpack.c.bf16 %v2886, %v2886
    %v2895 = vpack.c.bf16 %v2887, %v2887
    %v2896 = vpack.c.bf16 %v2888, %v2888
    %v2905 = vcombine.low %v2889, %v2890
    %v2907 = vunpack.c.l.s4 1966171168
    %v2908 = vunpack.c.0.s8 %v2907
    %v2909 = vlaneseq
    %v2910 = vshrl.u32 %v2909, 7
    %v2911 = vsub.s32 %v2908, %v2910
    %v2912 = vrot.slane %v2905, %v2911
    %v2914 = vunpack.c.l.s4 1966171168
    %v2915 = vunpack.c.0.s8 %v2914
    %v2916 = vlaneseq
    %v2917 = vshrl.u32 %v2916, 7
    %v2918 = vsub.s32 %v2915, %v2917
    %v2919 = vrot.slane %v2912, %v2918
    %v2920 = vcombine.low %v2891, %v2892
    %v2922 = vunpack.c.l.s4 1966171168
    %v2923 = vunpack.c.0.s8 %v2922
    %v2924 = vlaneseq
    %v2925 = vshrl.u32 %v2924, 7
    %v2926 = vsub.s32 %v2923, %v2925
    %v2927 = vrot.slane %v2920, %v2926
    %v2929 = vunpack.c.l.s4 1966171168
    %v2930 = vunpack.c.0.s8 %v2929
    %v2931 = vlaneseq
    %v2932 = vshrl.u32 %v2931, 7
    %v2933 = vsub.s32 %v2930, %v2932
    %v2934 = vrot.slane %v2927, %v2933
    %v2935 = vcombine.low %v2893, %v2894
    %v2937 = vunpack.c.l.s4 1966171168
    %v2938 = vunpack.c.0.s8 %v2937
    %v2939 = vlaneseq
    %v2940 = vshrl.u32 %v2939, 7
    %v2941 = vsub.s32 %v2938, %v2940
    %v2942 = vrot.slane %v2935, %v2941
    %v2944 = vunpack.c.l.s4 1966171168
    %v2945 = vunpack.c.0.s8 %v2944
    %v2946 = vlaneseq
    %v2947 = vshrl.u32 %v2946, 7
    %v2948 = vsub.s32 %v2945, %v2947
    %v2949 = vrot.slane %v2942, %v2948
    %v2950 = vcombine.low %v2895, %v2896
    %v2952 = vunpack.c.l.s4 1966171168
    %v2953 = vunpack.c.0.s8 %v2952
    %v2954 = vlaneseq
    %v2955 = vshrl.u32 %v2954, 7
    %v2956 = vsub.s32 %v2953, %v2955
    %v2957 = vrot.slane %v2950, %v2956
    %v2959 = vunpack.c.l.s4 1966171168
    %v2960 = vunpack.c.0.s8 %v2959
    %v2961 = vlaneseq
    %v2962 = vshrl.u32 %v2961, 7
    %v2963 = vsub.s32 %v2960, %v2962
    %v2964 = vrot.slane %v2957, %v2963
    %2969 = vst [vmem:[#allocation3] sm:$0x3] %v2919
    %2970 = vst [vmem:[#allocation3 + $0x2] sm:$0x3] %v2934
    %2971 = vst [vmem:[#allocation3 + $0x4] sm:$0x3] %v2949
    %2972 = vst [vmem:[#allocation3 + $0x6] sm:$0x3] %v2964
    %v2973 = vld [vmem:[%s9] sm:$0x3]
    %v2974 = vld [vmem:[#allocation3] sm:$0x3]
    %s2975 = scalar_lea.vmem [#allocation4], 256
    %v2976 = vld [vmem:[%s2975] sm:$0xff]
    %v2977 = vld [vmem:[%s2975 + $0x8] sm:$0xff]
    %v2978 = vld [vmem:[%s2975 + $0x10] sm:$0xff]
    %v2979 = vld [vmem:[%s2975 + $0x18] sm:$0xff]
    %v2980 = vld [vmem:[%s2975 + $0x20] sm:$0xff]
    %v2981 = vld [vmem:[%s2975 + $0x28] sm:$0xff]
    %v2982 = vld [vmem:[%s2975 + $0x30] sm:$0xff]
    %v2983 = vld [vmem:[%s2975 + $0x38] sm:$0xff]
    %v2984 = vld [vmem:[%s2975 + $0x40] sm:$0xff]
    %v2985 = vld [vmem:[%s2975 + $0x48] sm:$0xff]
    %v2986 = vld [vmem:[%s2975 + $0x50] sm:$0xff]
    %v2987 = vld [vmem:[%s2975 + $0x58] sm:$0xff]
    %v2988 = vld [vmem:[%s2975 + $0x60] sm:$0xff]
    %v2989 = vld [vmem:[%s2975 + $0x68] sm:$0xff]
    %v2990 = vld [vmem:[%s2975 + $0x70] sm:$0xff]
    %v2991 = vld [vmem:[%s2975 + $0x78] sm:$0xff]
    %v2992 = vld [vmem:[%s2975 + $0x80] sm:$0xff]
    %v2993 = vld [vmem:[%s2975 + $0x88] sm:$0xff]
    %v2994 = vld [vmem:[%s2975 + $0x90] sm:$0xff]
    %v2995 = vld [vmem:[%s2975 + $0x98] sm:$0xff]
    %v2996 = vld [vmem:[%s2975 + $0xa0] sm:$0xff]
    %v2997 = vld [vmem:[%s2975 + $0xa8] sm:$0xff]
    %v2998 = vld [vmem:[%s2975 + $0xb0] sm:$0xff]
    %v2999 = vld [vmem:[%s2975 + $0xb8] sm:$0xff]
    %v3000 = vld [vmem:[%s2975 + $0xc0] sm:$0xff]
    %v3001 = vld [vmem:[%s2975 + $0xc8] sm:$0xff]
    %v3002 = vld [vmem:[%s2975 + $0xd0] sm:$0xff]
    %v3003 = vld [vmem:[%s2975 + $0xd8] sm:$0xff]
    %v3004 = vld [vmem:[%s2975 + $0xe0] sm:$0xff]
    %v3005 = vld [vmem:[%s2975 + $0xe8] sm:$0xff]
    %v3006 = vld [vmem:[%s2975 + $0xf0] sm:$0xff]
    %v3007 = vld [vmem:[%s2975 + $0xf8] sm:$0xff]
    %s3008 = scalar_lea.vmem [#allocation3], 2
    %v3009 = vld [vmem:[%s3008] sm:$0x3]
    %s3010 = scalar_lea.vmem [#allocation4], 512
    %v3011 = vld [vmem:[%s3010] sm:$0xff]
    %v3012 = vld [vmem:[%s3010 + $0x8] sm:$0xff]
    %v3013 = vld [vmem:[%s3010 + $0x10] sm:$0xff]
    %v3014 = vld [vmem:[%s3010 + $0x18] sm:$0xff]
    %v3015 = vld [vmem:[%s3010 + $0x20] sm:$0xff]
    %v3016 = vld [vmem:[%s3010 + $0x28] sm:$0xff]
    %v3017 = vld [vmem:[%s3010 + $0x30] sm:$0xff]
    %v3018 = vld [vmem:[%s3010 + $0x38] sm:$0xff]
    %v3019 = vld [vmem:[%s3010 + $0x40] sm:$0xff]
    %v3020 = vld [vmem:[%s3010 + $0x48] sm:$0xff]
    %v3021 = vld [vmem:[%s3010 + $0x50] sm:$0xff]
    %v3022 = vld [vmem:[%s3010 + $0x58] sm:$0xff]
    %v3023 = vld [vmem:[%s3010 + $0x60] sm:$0xff]
    %v3024 = vld [vmem:[%s3010 + $0x68] sm:$0xff]
    %v3025 = vld [vmem:[%s3010 + $0x70] sm:$0xff]
    %v3026 = vld [vmem:[%s3010 + $0x78] sm:$0xff]
    %v3027 = vld [vmem:[%s3010 + $0x80] sm:$0xff]
    %v3028 = vld [vmem:[%s3010 + $0x88] sm:$0xff]
    %v3029 = vld [vmem:[%s3010 + $0x90] sm:$0xff]
    %v3030 = vld [vmem:[%s3010 + $0x98] sm:$0xff]
    %v3031 = vld [vmem:[%s3010 + $0xa0] sm:$0xff]
    %v3032 = vld [vmem:[%s3010 + $0xa8] sm:$0xff]
    %v3033 = vld [vmem:[%s3010 + $0xb0] sm:$0xff]
    %v3034 = vld [vmem:[%s3010 + $0xb8] sm:$0xff]
    %v3035 = vld [vmem:[%s3010 + $0xc0] sm:$0xff]
    %v3036 = vld [vmem:[%s3010 + $0xc8] sm:$0xff]
    %v3037 = vld [vmem:[%s3010 + $0xd0] sm:$0xff]
    %v3038 = vld [vmem:[%s3010 + $0xd8] sm:$0xff]
    %v3039 = vld [vmem:[%s3010 + $0xe0] sm:$0xff]
    %v3040 = vld [vmem:[%s3010 + $0xe8] sm:$0xff]
    %v3041 = vld [vmem:[%s3010 + $0xf0] sm:$0xff]
    %v3042 = vld [vmem:[%s3010 + $0xf8] sm:$0xff]
    %v3045 = vunpack.c.l.s4 1966171168
    %v3046 = vunpack.c.0.s8 %v3045
    %v3047 = vlaneseq
    %v3048 = vshrl.u32 %v3047, 7
    %v3049 = vsub.s32 %v3046, %v3048
    %v3050 = vrot.slane %v3009, %v3049
    %v3051 = vcombine.high %v3050, %v3050
    %v3053 = vunpack.c.l.s4 1966171168
    %v3054 = vunpack.c.0.s8 %v3053
    %v3055 = vlaneseq
    %v3056 = vshrl.u32 %v3055, 7
    %v3057 = vsub.s32 %v3054, %v3056
    %v3058 = vrot.slane %v3050, %v3057
    %v3060 = vunpack.c.l.s4 1966171168
    %v3061 = vunpack.c.0.s8 %v3060
    %v3062 = vlaneseq
    %v3063 = vshrl.u32 %v3062, 7
    %v3064 = vsub.s32 %v3061, %v3063
    %v3065 = vrot.slane %v3051, %v3064
    %v3100 = vunpack.c.l.b16 %v3011
    %v3101 = vunpack.c.h.b16 %v3011
    %v3102 = vunpack.c.l.b16 %v3012
    %v3103 = vunpack.c.h.b16 %v3012
    %v3104 = vunpack.c.l.b16 %v3013
    %v3105 = vunpack.c.h.b16 %v3013
    %v3106 = vunpack.c.l.b16 %v3014
    %v3107 = vunpack.c.h.b16 %v3014
    %v3108 = vunpack.c.l.b16 %v3015
    %v3109 = vunpack.c.h.b16 %v3015
    %v3110 = vunpack.c.l.b16 %v3016
    %v3111 = vunpack.c.h.b16 %v3016
    %v3112 = vunpack.c.l.b16 %v3017
    %v3113 = vunpack.c.h.b16 %v3017
    %v3114 = vunpack.c.l.b16 %v3018
    %v3115 = vunpack.c.h.b16 %v3018
    %v3116 = vunpack.c.l.b16 %v3019
    %v3117 = vunpack.c.h.b16 %v3019
    %v3118 = vunpack.c.l.b16 %v3020
    %v3119 = vunpack.c.h.b16 %v3020
    %v3120 = vunpack.c.l.b16 %v3021
    %v3121 = vunpack.c.h.b16 %v3021
    %v3122 = vunpack.c.l.b16 %v3022
    %v3123 = vunpack.c.h.b16 %v3022
    %v3124 = vunpack.c.l.b16 %v3023
    %v3125 = vunpack.c.h.b16 %v3023
    %v3126 = vunpack.c.l.b16 %v3024
    %v3127 = vunpack.c.h.b16 %v3024
    %v3128 = vunpack.c.l.b16 %v3025
    %v3129 = vunpack.c.h.b16 %v3025
    %v3130 = vunpack.c.l.b16 %v3026
    %v3131 = vunpack.c.h.b16 %v3026
    %v3132 = vunpack.c.l.b16 %v3027
    %v3133 = vunpack.c.h.b16 %v3027
    %v3134 = vunpack.c.l.b16 %v3028
    %v3135 = vunpack.c.h.b16 %v3028
    %v3136 = vunpack.c.l.b16 %v3029
    %v3137 = vunpack.c.h.b16 %v3029
    %v3138 = vunpack.c.l.b16 %v3030
    %v3139 = vunpack.c.h.b16 %v3030
    %v3140 = vunpack.c.l.b16 %v3031
    %v3141 = vunpack.c.h.b16 %v3031
    %v3142 = vunpack.c.l.b16 %v3032
    %v3143 = vunpack.c.h.b16 %v3032
    %v3144 = vunpack.c.l.b16 %v3033
    %v3145 = vunpack.c.h.b16 %v3033
    %v3146 = vunpack.c.l.b16 %v3034
    %v3147 = vunpack.c.h.b16 %v3034
    %v3148 = vunpack.c.l.b16 %v3035
    %v3149 = vunpack.c.h.b16 %v3035
    %v3150 = vunpack.c.l.b16 %v3036
    %v3151 = vunpack.c.h.b16 %v3036
    %v3152 = vunpack.c.l.b16 %v3037
    %v3153 = vunpack.c.h.b16 %v3037
    %v3154 = vunpack.c.l.b16 %v3038
    %v3155 = vunpack.c.h.b16 %v3038
    %v3156 = vunpack.c.l.b16 %v3039
    %v3157 = vunpack.c.h.b16 %v3039
    %v3158 = vunpack.c.l.b16 %v3040
    %v3159 = vunpack.c.h.b16 %v3040
    %v3160 = vunpack.c.l.b16 %v3041
    %v3161 = vunpack.c.h.b16 %v3041
    %v3162 = vunpack.c.l.b16 %v3042
    %v3163 = vunpack.c.h.b16 %v3042
    %v3164 = vpack.c.b16 %v3102, %v3100
    %v3165 = vpack.c.b16 %v3103, %v3101
    %v3166 = vpack.c.b16 %v3106, %v3104
    %v3167 = vpack.c.b16 %v3107, %v3105
    %v3168 = vpack.c.b16 %v3110, %v3108
    %v3169 = vpack.c.b16 %v3111, %v3109
    %v3170 = vpack.c.b16 %v3114, %v3112
    %v3171 = vpack.c.b16 %v3115, %v3113
    %v3172 = vpack.c.b16 %v3118, %v3116
    %v3173 = vpack.c.b16 %v3119, %v3117
    %v3174 = vpack.c.b16 %v3122, %v3120
    %v3175 = vpack.c.b16 %v3123, %v3121
    %v3176 = vpack.c.b16 %v3126, %v3124
    %v3177 = vpack.c.b16 %v3127, %v3125
    %v3178 = vpack.c.b16 %v3130, %v3128
    %v3179 = vpack.c.b16 %v3131, %v3129
    %v3180 = vpack.c.b16 %v3134, %v3132
    %v3181 = vpack.c.b16 %v3135, %v3133
    %v3182 = vpack.c.b16 %v3138, %v3136
    %v3183 = vpack.c.b16 %v3139, %v3137
    %v3184 = vpack.c.b16 %v3142, %v3140
    %v3185 = vpack.c.b16 %v3143, %v3141
    %v3186 = vpack.c.b16 %v3146, %v3144
    %v3187 = vpack.c.b16 %v3147, %v3145
    %v3188 = vpack.c.b16 %v3150, %v3148
    %v3189 = vpack.c.b16 %v3151, %v3149
    %v3190 = vpack.c.b16 %v3154, %v3152
    %v3191 = vpack.c.b16 %v3155, %v3153
    %v3192 = vpack.c.b16 %v3158, %v3156
    %v3193 = vpack.c.b16 %v3159, %v3157
    %v3194 = vpack.c.b16 %v3162, %v3160
    %v3195 = vpack.c.b16 %v3163, %v3161
    %3228 = vmatprep.subr.bf16.mxu0 %v3165
    %3229 = vmatpush1.bf16.msra.mxu0 %v3164
    %3230 = vmatprep.subr.bf16.mxu0 %v3167
    %3231 = vmatpush1.bf16.msra.mxu0 %v3166
    %3232 = vmatprep.subr.bf16.mxu0 %v3169
    %3233 = vmatpush1.bf16.msra.mxu0 %v3168
    %3234 = vmatprep.subr.bf16.mxu0 %v3171
    %3235 = vmatpush1.bf16.msra.mxu0 %v3170
    %3236 = vmatprep.subr.bf16.mxu0 %v3173
    %3237 = vmatpush1.bf16.msra.mxu0 %v3172
    %3238 = vmatprep.subr.bf16.mxu0 %v3175
    %3239 = vmatpush1.bf16.msra.mxu0 %v3174
    %3240 = vmatprep.subr.bf16.mxu0 %v3177
    %3241 = vmatpush1.bf16.msra.mxu0 %v3176
    %3242 = vmatprep.subr.bf16.mxu0 %v3179
    %3243 = vmatpush1.bf16.msra.mxu0 %v3178
    %3244 = vmatprep.subr.bf16.mxu0 %v3181
    %3245 = vmatpush1.bf16.msra.mxu0 %v3180
    %3246 = vmatprep.subr.bf16.mxu0 %v3183
    %3247 = vmatpush1.bf16.msra.mxu0 %v3182
    %3248 = vmatprep.subr.bf16.mxu0 %v3185
    %3249 = vmatpush1.bf16.msra.mxu0 %v3184
    %3250 = vmatprep.subr.bf16.mxu0 %v3187
    %3251 = vmatpush1.bf16.msra.mxu0 %v3186
    %3252 = vmatprep.subr.bf16.mxu0 %v3189
    %3253 = vmatpush1.bf16.msra.mxu0 %v3188
    %3254 = vmatprep.subr.bf16.mxu0 %v3191
    %3255 = vmatpush1.bf16.msra.mxu0 %v3190
    %3256 = vmatprep.subr.bf16.mxu0 %v3193
    %3257 = vmatpush1.bf16.msra.mxu0 %v3192
    %3258 = vmatprep.subr.bf16.mxu0 %v3195
    %3259 = vmatpush1.bf16.msra.mxu0 %v3194
    %3260 = vmatprep.mubr.bf16.mxu0 %v3065
    %3261 = vmatmul.mubr.bf16.gmra.mrb[0].mxu0 %v3058
    %v3262 = vpop.f32.mrb[0].mxu0
    %v3263 = vadd.f32 0.0, %v3262
    %v3264 = vpop.f32.mrb[0].mxu0
    %v3265 = vadd.f32 0.0, %v3264
    %v3266 = vpop.f32.mrb[0].mxu0
    %v3267 = vpop.f32.mrb[0].mxu0
    %3268 = vdwg.mxu0
    %v3271 = vunpack.c.l.s4 1966171168
    %v3272 = vunpack.c.0.s8 %v3271
    %v3273 = vlaneseq
    %v3274 = vshrl.u32 %v3273, 7
    %v3275 = vsub.s32 %v3272, %v3274
    %v3276 = vrot.slane %v2974, %v3275
    %v3277 = vcombine.high %v3276, %v3276
    %v3279 = vunpack.c.l.s4 1966171168
    %v3280 = vunpack.c.0.s8 %v3279
    %v3281 = vlaneseq
    %v3282 = vshrl.u32 %v3281, 7
    %v3283 = vsub.s32 %v3280, %v3282
    %v3284 = vrot.slane %v3276, %v3283
    %v3286 = vunpack.c.l.s4 1966171168
    %v3287 = vunpack.c.0.s8 %v3286
    %v3288 = vlaneseq
    %v3289 = vshrl.u32 %v3288, 7
    %v3290 = vsub.s32 %v3287, %v3289
    %v3291 = vrot.slane %v3277, %v3290
    %v3326 = vunpack.c.l.b16 %v2976
    %v3327 = vunpack.c.h.b16 %v2976
    %v3328 = vunpack.c.l.b16 %v2977
    %v3329 = vunpack.c.h.b16 %v2977
    %v3330 = vunpack.c.l.b16 %v2978
    %v3331 = vunpack.c.h.b16 %v2978
    %v3332 = vunpack.c.l.b16 %v2979
    %v3333 = vunpack.c.h.b16 %v2979
    %v3334 = vunpack.c.l.b16 %v2980
    %v3335 = vunpack.c.h.b16 %v2980
    %v3336 = vunpack.c.l.b16 %v2981
    %v3337 = vunpack.c.h.b16 %v2981
    %v3338 = vunpack.c.l.b16 %v2982
    %v3339 = vunpack.c.h.b16 %v2982
    %v3340 = vunpack.c.l.b16 %v2983
    %v3341 = vunpack.c.h.b16 %v2983
    %v3342 = vunpack.c.l.b16 %v2984
    %v3343 = vunpack.c.h.b16 %v2984
    %v3344 = vunpack.c.l.b16 %v2985
    %v3345 = vunpack.c.h.b16 %v2985
    %v3346 = vunpack.c.l.b16 %v2986
    %v3347 = vunpack.c.h.b16 %v2986
    %v3348 = vunpack.c.l.b16 %v2987
    %v3349 = vunpack.c.h.b16 %v2987
    %v3350 = vunpack.c.l.b16 %v2988
    %v3351 = vunpack.c.h.b16 %v2988
    %v3352 = vunpack.c.l.b16 %v2989
    %v3353 = vunpack.c.h.b16 %v2989
    %v3354 = vunpack.c.l.b16 %v2990
    %v3355 = vunpack.c.h.b16 %v2990
    %v3356 = vunpack.c.l.b16 %v2991
    %v3357 = vunpack.c.h.b16 %v2991
    %v3358 = vunpack.c.l.b16 %v2992
    %v3359 = vunpack.c.h.b16 %v2992
    %v3360 = vunpack.c.l.b16 %v2993
    %v3361 = vunpack.c.h.b16 %v2993
    %v3362 = vunpack.c.l.b16 %v2994
    %v3363 = vunpack.c.h.b16 %v2994
    %v3364 = vunpack.c.l.b16 %v2995
    %v3365 = vunpack.c.h.b16 %v2995
    %v3366 = vunpack.c.l.b16 %v2996
    %v3367 = vunpack.c.h.b16 %v2996
    %v3368 = vunpack.c.l.b16 %v2997
    %v3369 = vunpack.c.h.b16 %v2997
    %v3370 = vunpack.c.l.b16 %v2998
    %v3371 = vunpack.c.h.b16 %v2998
    %v3372 = vunpack.c.l.b16 %v2999
    %v3373 = vunpack.c.h.b16 %v2999
    %v3374 = vunpack.c.l.b16 %v3000
    %v3375 = vunpack.c.h.b16 %v3000
    %v3376 = vunpack.c.l.b16 %v3001
    %v3377 = vunpack.c.h.b16 %v3001
    %v3378 = vunpack.c.l.b16 %v3002
    %v3379 = vunpack.c.h.b16 %v3002
    %v3380 = vunpack.c.l.b16 %v3003
    %v3381 = vunpack.c.h.b16 %v3003
    %v3382 = vunpack.c.l.b16 %v3004
    %v3383 = vunpack.c.h.b16 %v3004
    %v3384 = vunpack.c.l.b16 %v3005
    %v3385 = vunpack.c.h.b16 %v3005
    %v3386 = vunpack.c.l.b16 %v3006
    %v3387 = vunpack.c.h.b16 %v3006
    %v3388 = vunpack.c.l.b16 %v3007
    %v3389 = vunpack.c.h.b16 %v3007
    %v3390 = vpack.c.b16 %v3328, %v3326
    %v3391 = vpack.c.b16 %v3329, %v3327
    %v3392 = vpack.c.b16 %v3332, %v3330
    %v3393 = vpack.c.b16 %v3333, %v3331
    %v3394 = vpack.c.b16 %v3336, %v3334
    %v3395 = vpack.c.b16 %v3337, %v3335
    %v3396 = vpack.c.b16 %v3340, %v3338
    %v3397 = vpack.c.b16 %v3341, %v3339
    %v3398 = vpack.c.b16 %v3344, %v3342
    %v3399 = vpack.c.b16 %v3345, %v3343
    %v3400 = vpack.c.b16 %v3348, %v3346
    %v3401 = vpack.c.b16 %v3349, %v3347
    %v3402 = vpack.c.b16 %v3352, %v3350
    %v3403 = vpack.c.b16 %v3353, %v3351
    %v3404 = vpack.c.b16 %v3356, %v3354
    %v3405 = vpack.c.b16 %v3357, %v3355
    %v3406 = vpack.c.b16 %v3360, %v3358
    %v3407 = vpack.c.b16 %v3361, %v3359
    %v3408 = vpack.c.b16 %v3364, %v3362
    %v3409 = vpack.c.b16 %v3365, %v3363
    %v3410 = vpack.c.b16 %v3368, %v3366
    %v3411 = vpack.c.b16 %v3369, %v3367
    %v3412 = vpack.c.b16 %v3372, %v3370
    %v3413 = vpack.c.b16 %v3373, %v3371
    %v3414 = vpack.c.b16 %v3376, %v3374
    %v3415 = vpack.c.b16 %v3377, %v3375
    %v3416 = vpack.c.b16 %v3380, %v3378
    %v3417 = vpack.c.b16 %v3381, %v3379
    %v3418 = vpack.c.b16 %v3384, %v3382
    %v3419 = vpack.c.b16 %v3385, %v3383
    %v3420 = vpack.c.b16 %v3388, %v3386
    %v3421 = vpack.c.b16 %v3389, %v3387
    %3454 = vmatprep.subr.bf16.mxu0 %v3391
    %3455 = vmatpush1.bf16.msra.mxu0 %v3390
    %3456 = vmatprep.subr.bf16.mxu0 %v3393
    %3457 = vmatpush1.bf16.msra.mxu0 %v3392
    %3458 = vmatprep.subr.bf16.mxu0 %v3395
    %3459 = vmatpush1.bf16.msra.mxu0 %v3394
    %3460 = vmatprep.subr.bf16.mxu0 %v3397
    %3461 = vmatpush1.bf16.msra.mxu0 %v3396
    %3462 = vmatprep.subr.bf16.mxu0 %v3399
    %3463 = vmatpush1.bf16.msra.mxu0 %v3398
    %3464 = vmatprep.subr.bf16.mxu0 %v3401
    %3465 = vmatpush1.bf16.msra.mxu0 %v3400
    %3466 = vmatprep.subr.bf16.mxu0 %v3403
    %3467 = vmatpush1.bf16.msra.mxu0 %v3402
    %3468 = vmatprep.subr.bf16.mxu0 %v3405
    %3469 = vmatpush1.bf16.msra.mxu0 %v3404
    %3470 = vmatprep.subr.bf16.mxu0 %v3407
    %3471 = vmatpush1.bf16.msra.mxu0 %v3406
    %3472 = vmatprep.subr.bf16.mxu0 %v3409
    %3473 = vmatpush1.bf16.msra.mxu0 %v3408
    %3474 = vmatprep.subr.bf16.mxu0 %v3411
    %3475 = vmatpush1.bf16.msra.mxu0 %v3410
    %3476 = vmatprep.subr.bf16.mxu0 %v3413
    %3477 = vmatpush1.bf16.msra.mxu0 %v3412
    %3478 = vmatprep.subr.bf16.mxu0 %v3415
    %3479 = vmatpush1.bf16.msra.mxu0 %v3414
    %3480 = vmatprep.subr.bf16.mxu0 %v3417
    %3481 = vmatpush1.bf16.msra.mxu0 %v3416
    %3482 = vmatprep.subr.bf16.mxu0 %v3419
    %3483 = vmatpush1.bf16.msra.mxu0 %v3418
    %3484 = vmatprep.subr.bf16.mxu0 %v3421
    %3485 = vmatpush1.bf16.msra.mxu0 %v3420
    %3486 = vmatprep.mubr.bf16.mxu0 %v3291
    %3487 = vmatmul.mubr.bf16.gmra.mrb[0].mxu0 %v3284
    %v3488 = vpop.f32.mrb[0].mxu0
    %v3489 = vadd.f32 %v3263, %v3488
    %v3490 = vpop.f32.mrb[0].mxu0
    %v3491 = vadd.f32 %v3265, %v3490
    %v3492 = vpop.f32.mrb[0].mxu0
    %v3493 = vpop.f32.mrb[0].mxu0
    %3494 = vdwg.mxu0
    %v3496 = vlaneseq
    %v3497 = vshrl.u32 %v3496, 7
    %v3498 = vsub.s32 0, %v3497
    %v3499 = vrot.slane %v2973, %v3498
    %v3500 = vlaneseq
    %v3501 = vshrl.u32 %v3500, 7
    %v3502 = vsub.s32 1, %v3501
    %v3503 = vrot.slane %v2973, %v3502
    %v3506 = vadd.f32 %v3489, %v3499
    %v3507 = vadd.f32 %v3491, %v3503
    %v3508 = vld [vmem:[#allocation4] sm:$0xff]
    %v3509 = vld [vmem:[#allocation4 + $0x8] sm:$0xff]
    %v3510 = vld [vmem:[#allocation4 + $0x10] sm:$0xff]
    %v3511 = vld [vmem:[#allocation4 + $0x18] sm:$0xff]
    %v3512 = vld [vmem:[#allocation4 + $0x20] sm:$0xff]
    %v3513 = vld [vmem:[#allocation4 + $0x28] sm:$0xff]
    %v3514 = vld [vmem:[#allocation4 + $0x30] sm:$0xff]
    %v3515 = vld [vmem:[#allocation4 + $0x38] sm:$0xff]
    %v3516 = vld [vmem:[#allocation4 + $0x40] sm:$0xff]
    %v3517 = vld [vmem:[#allocation4 + $0x48] sm:$0xff]
    %v3518 = vld [vmem:[#allocation4 + $0x50] sm:$0xff]
    %v3519 = vld [vmem:[#allocation4 + $0x58] sm:$0xff]
    %v3520 = vld [vmem:[#allocation4 + $0x60] sm:$0xff]
    %v3521 = vld [vmem:[#allocation4 + $0x68] sm:$0xff]
    %v3522 = vld [vmem:[#allocation4 + $0x70] sm:$0xff]
    %v3523 = vld [vmem:[#allocation4 + $0x78] sm:$0xff]
    %v3524 = vld [vmem:[#allocation4 + $0x80] sm:$0xff]
    %v3525 = vld [vmem:[#allocation4 + $0x88] sm:$0xff]
    %v3526 = vld [vmem:[#allocation4 + $0x90] sm:$0xff]
    %v3527 = vld [vmem:[#allocation4 + $0x98] sm:$0xff]
    %v3528 = vld [vmem:[#allocation4 + $0xa0] sm:$0xff]
    %v3529 = vld [vmem:[#allocation4 + $0xa8] sm:$0xff]
    %v3530 = vld [vmem:[#allocation4 + $0xb0] sm:$0xff]
    %v3531 = vld [vmem:[#allocation4 + $0xb8] sm:$0xff]
    %v3532 = vld [vmem:[#allocation4 + $0xc0] sm:$0xff]
    %v3533 = vld [vmem:[#allocation4 + $0xc8] sm:$0xff]
    %v3534 = vld [vmem:[#allocation4 + $0xd0] sm:$0xff]
    %v3535 = vld [vmem:[#allocation4 + $0xd8] sm:$0xff]
    %v3536 = vld [vmem:[#allocation4 + $0xe0] sm:$0xff]
    %v3537 = vld [vmem:[#allocation4 + $0xe8] sm:$0xff]
    %v3538 = vld [vmem:[#allocation4 + $0xf0] sm:$0xff]
    %v3539 = vld [vmem:[#allocation4 + $0xf8] sm:$0xff]
    %s3540 = scalar_lea.vmem [#allocation3], 4
    %v3541 = vld [vmem:[%s3540] sm:$0x3]
    %v3544 = vunpack.c.l.s4 1966171168
    %v3545 = vunpack.c.0.s8 %v3544
    %v3546 = vlaneseq
    %v3547 = vshrl.u32 %v3546, 7
    %v3548 = vsub.s32 %v3545, %v3547
    %v3549 = vrot.slane %v3541, %v3548
    %v3550 = vcombine.high %v3549, %v3549
    %v3552 = vunpack.c.l.s4 1966171168
    %v3553 = vunpack.c.0.s8 %v3552
    %v3554 = vlaneseq
    %v3555 = vshrl.u32 %v3554, 7
    %v3556 = vsub.s32 %v3553, %v3555
    %v3557 = vrot.slane %v3549, %v3556
    %v3559 = vunpack.c.l.s4 1966171168
    %v3560 = vunpack.c.0.s8 %v3559
    %v3561 = vlaneseq
    %v3562 = vshrl.u32 %v3561, 7
    %v3563 = vsub.s32 %v3560, %v3562
    %v3564 = vrot.slane %v3550, %v3563
    %3567 = vmatprep.subr.bf16.mxu0 %v3391
    %3568 = vmatpush1.bf16.msra.mxu0 %v3390
    %3569 = vmatprep.subr.bf16.mxu0 %v3393
    %3570 = vmatpush1.bf16.msra.mxu0 %v3392
    %3571 = vmatprep.subr.bf16.mxu0 %v3395
    %3572 = vmatpush1.bf16.msra.mxu0 %v3394
    %3573 = vmatprep.subr.bf16.mxu0 %v3397
    %3574 = vmatpush1.bf16.msra.mxu0 %v3396
    %3575 = vmatprep.subr.bf16.mxu0 %v3399
    %3576 = vmatpush1.bf16.msra.mxu0 %v3398
    %3577 = vmatprep.subr.bf16.mxu0 %v3401
    %3578 = vmatpush1.bf16.msra.mxu0 %v3400
    %3579 = vmatprep.subr.bf16.mxu0 %v3403
    %3580 = vmatpush1.bf16.msra.mxu0 %v3402
    %3581 = vmatprep.subr.bf16.mxu0 %v3405
    %3582 = vmatpush1.bf16.msra.mxu0 %v3404
    %3583 = vmatprep.subr.bf16.mxu0 %v3407
    %3584 = vmatpush1.bf16.msra.mxu0 %v3406
    %3585 = vmatprep.subr.bf16.mxu0 %v3409
    %3586 = vmatpush1.bf16.msra.mxu0 %v3408
    %3587 = vmatprep.subr.bf16.mxu0 %v3411
    %3588 = vmatpush1.bf16.msra.mxu0 %v3410
    %3589 = vmatprep.subr.bf16.mxu0 %v3413
    %3590 = vmatpush1.bf16.msra.mxu0 %v3412
    %3591 = vmatprep.subr.bf16.mxu0 %v3415
    %3592 = vmatpush1.bf16.msra.mxu0 %v3414
    %3593 = vmatprep.subr.bf16.mxu0 %v3417
    %3594 = vmatpush1.bf16.msra.mxu0 %v3416
    %3595 = vmatprep.subr.bf16.mxu0 %v3419
    %3596 = vmatpush1.bf16.msra.mxu0 %v3418
    %3597 = vmatprep.subr.bf16.mxu0 %v3421
    %3598 = vmatpush1.bf16.msra.mxu0 %v3420
    %3599 = vmatprep.mubr.bf16.mxu0 %v3564
    %3600 = vmatmul.mubr.bf16.gmra.mrb[0].mxu0 %v3557
    %v3601 = vpop.f32.mrb[0].mxu0
    %v3602 = vadd.f32 0.0, %v3601
    %v3603 = vpop.f32.mrb[0].mxu0
    %v3604 = vadd.f32 0.0, %v3603
    %v3605 = vpop.f32.mrb[0].mxu0
    %v3606 = vpop.f32.mrb[0].mxu0
    %3607 = vdwg.mxu0
    %v3640 = vunpack.c.l.b16 %v3508
    %v3641 = vunpack.c.h.b16 %v3508
    %v3642 = vunpack.c.l.b16 %v3509
    %v3643 = vunpack.c.h.b16 %v3509
    %v3644 = vunpack.c.l.b16 %v3510
    %v3645 = vunpack.c.h.b16 %v3510
    %v3646 = vunpack.c.l.b16 %v3511
    %v3647 = vunpack.c.h.b16 %v3511
    %v3648 = vunpack.c.l.b16 %v3512
    %v3649 = vunpack.c.h.b16 %v3512
    %v3650 = vunpack.c.l.b16 %v3513
    %v3651 = vunpack.c.h.b16 %v3513
    %v3652 = vunpack.c.l.b16 %v3514
    %v3653 = vunpack.c.h.b16 %v3514
    %v3654 = vunpack.c.l.b16 %v3515
    %v3655 = vunpack.c.h.b16 %v3515
    %v3656 = vunpack.c.l.b16 %v3516
    %v3657 = vunpack.c.h.b16 %v3516
    %v3658 = vunpack.c.l.b16 %v3517
    %v3659 = vunpack.c.h.b16 %v3517
    %v3660 = vunpack.c.l.b16 %v3518
    %v3661 = vunpack.c.h.b16 %v3518
    %v3662 = vunpack.c.l.b16 %v3519
    %v3663 = vunpack.c.h.b16 %v3519
    %v3664 = vunpack.c.l.b16 %v3520
    %v3665 = vunpack.c.h.b16 %v3520
    %v3666 = vunpack.c.l.b16 %v3521
    %v3667 = vunpack.c.h.b16 %v3521
    %v3668 = vunpack.c.l.b16 %v3522
    %v3669 = vunpack.c.h.b16 %v3522
    %v3670 = vunpack.c.l.b16 %v3523
    %v3671 = vunpack.c.h.b16 %v3523
    %v3672 = vunpack.c.l.b16 %v3524
    %v3673 = vunpack.c.h.b16 %v3524
    %v3674 = vunpack.c.l.b16 %v3525
    %v3675 = vunpack.c.h.b16 %v3525
    %v3676 = vunpack.c.l.b16 %v3526
    %v3677 = vunpack.c.h.b16 %v3526
    %v3678 = vunpack.c.l.b16 %v3527
    %v3679 = vunpack.c.h.b16 %v3527
    %v3680 = vunpack.c.l.b16 %v3528
    %v3681 = vunpack.c.h.b16 %v3528
    %v3682 = vunpack.c.l.b16 %v3529
    %v3683 = vunpack.c.h.b16 %v3529
    %v3684 = vunpack.c.l.b16 %v3530
    %v3685 = vunpack.c.h.b16 %v3530
    %v3686 = vunpack.c.l.b16 %v3531
    %v3687 = vunpack.c.h.b16 %v3531
    %v3688 = vunpack.c.l.b16 %v3532
    %v3689 = vunpack.c.h.b16 %v3532
    %v3690 = vunpack.c.l.b16 %v3533
    %v3691 = vunpack.c.h.b16 %v3533
    %v3692 = vunpack.c.l.b16 %v3534
    %v3693 = vunpack.c.h.b16 %v3534
    %v3694 = vunpack.c.l.b16 %v3535
    %v3695 = vunpack.c.h.b16 %v3535
    %v3696 = vunpack.c.l.b16 %v3536
    %v3697 = vunpack.c.h.b16 %v3536
    %v3698 = vunpack.c.l.b16 %v3537
    %v3699 = vunpack.c.h.b16 %v3537
    %v3700 = vunpack.c.l.b16 %v3538
    %v3701 = vunpack.c.h.b16 %v3538
    %v3702 = vunpack.c.l.b16 %v3539
    %v3703 = vunpack.c.h.b16 %v3539
    %v3704 = vpack.c.b16 %v3642, %v3640
    %v3705 = vpack.c.b16 %v3643, %v3641
    %v3706 = vpack.c.b16 %v3646, %v3644
    %v3707 = vpack.c.b16 %v3647, %v3645
    %v3708 = vpack.c.b16 %v3650, %v3648
    %v3709 = vpack.c.b16 %v3651, %v3649
    %v3710 = vpack.c.b16 %v3654, %v3652
    %v3711 = vpack.c.b16 %v3655, %v3653
    %v3712 = vpack.c.b16 %v3658, %v3656
    %v3713 = vpack.c.b16 %v3659, %v3657
    %v3714 = vpack.c.b16 %v3662, %v3660
    %v3715 = vpack.c.b16 %v3663, %v3661
    %v3716 = vpack.c.b16 %v3666, %v3664
    %v3717 = vpack.c.b16 %v3667, %v3665
    %v3718 = vpack.c.b16 %v3670, %v3668
    %v3719 = vpack.c.b16 %v3671, %v3669
    %v3720 = vpack.c.b16 %v3674, %v3672
    %v3721 = vpack.c.b16 %v3675, %v3673
    %v3722 = vpack.c.b16 %v3678, %v3676
    %v3723 = vpack.c.b16 %v3679, %v3677
    %v3724 = vpack.c.b16 %v3682, %v3680
    %v3725 = vpack.c.b16 %v3683, %v3681
    %v3726 = vpack.c.b16 %v3686, %v3684
    %v3727 = vpack.c.b16 %v3687, %v3685
    %v3728 = vpack.c.b16 %v3690, %v3688
    %v3729 = vpack.c.b16 %v3691, %v3689
    %v3730 = vpack.c.b16 %v3694, %v3692
    %v3731 = vpack.c.b16 %v3695, %v3693
    %v3732 = vpack.c.b16 %v3698, %v3696
    %v3733 = vpack.c.b16 %v3699, %v3697
    %v3734 = vpack.c.b16 %v3702, %v3700
    %v3735 = vpack.c.b16 %v3703, %v3701
    %3768 = vmatprep.subr.bf16.mxu0 %v3705
    %3769 = vmatpush1.bf16.msra.mxu0 %v3704
    %3770 = vmatprep.subr.bf16.mxu0 %v3707
    %3771 = vmatpush1.bf16.msra.mxu0 %v3706
    %3772 = vmatprep.subr.bf16.mxu0 %v3709
    %3773 = vmatpush1.bf16.msra.mxu0 %v3708
    %3774 = vmatprep.subr.bf16.mxu0 %v3711
    %3775 = vmatpush1.bf16.msra.mxu0 %v3710
    %3776 = vmatprep.subr.bf16.mxu0 %v3713
    %3777 = vmatpush1.bf16.msra.mxu0 %v3712
    %3778 = vmatprep.subr.bf16.mxu0 %v3715
    %3779 = vmatpush1.bf16.msra.mxu0 %v3714
    %3780 = vmatprep.subr.bf16.mxu0 %v3717
    %3781 = vmatpush1.bf16.msra.mxu0 %v3716
    %3782 = vmatprep.subr.bf16.mxu0 %v3719
    %3783 = vmatpush1.bf16.msra.mxu0 %v3718
    %3784 = vmatprep.subr.bf16.mxu0 %v3721
    %3785 = vmatpush1.bf16.msra.mxu0 %v3720
    %3786 = vmatprep.subr.bf16.mxu0 %v3723
    %3787 = vmatpush1.bf16.msra.mxu0 %v3722
    %3788 = vmatprep.subr.bf16.mxu0 %v3725
    %3789 = vmatpush1.bf16.msra.mxu0 %v3724
    %3790 = vmatprep.subr.bf16.mxu0 %v3727
    %3791 = vmatpush1.bf16.msra.mxu0 %v3726
    %3792 = vmatprep.subr.bf16.mxu0 %v3729
    %3793 = vmatpush1.bf16.msra.mxu0 %v3728
    %3794 = vmatprep.subr.bf16.mxu0 %v3731
    %3795 = vmatpush1.bf16.msra.mxu0 %v3730
    %3796 = vmatprep.subr.bf16.mxu0 %v3733
    %3797 = vmatpush1.bf16.msra.mxu0 %v3732
    %3798 = vmatprep.subr.bf16.mxu0 %v3735
    %3799 = vmatpush1.bf16.msra.mxu0 %v3734
    %3800 = vmatprep.mubr.bf16.mxu0 %v3065
    %3801 = vmatmul.mubr.bf16.gmra.mrb[0].mxu0 %v3058
    %v3802 = vpop.f32.mrb[0].mxu0
    %v3803 = vadd.f32 %v3602, %v3802
    %v3804 = vpop.f32.mrb[0].mxu0
    %v3805 = vadd.f32 %v3604, %v3804
    %v3806 = vpop.f32.mrb[0].mxu0
    %v3807 = vpop.f32.mrb[0].mxu0
    %3808 = vdwg.mxu0
    %s3809 = scalar_lea.vmem [#allocation3], 6
    %v3810 = vld [vmem:[%s3809] sm:$0x3]
    %v3813 = vunpack.c.l.s4 1966171168
    %v3814 = vunpack.c.0.s8 %v3813
    %v3815 = vlaneseq
    %v3816 = vshrl.u32 %v3815, 7
    %v3817 = vsub.s32 %v3814, %v3816
    %v3818 = vrot.slane %v3810, %v3817
    %v3819 = vcombine.high %v3818, %v3818
    %v3821 = vunpack.c.l.s4 1966171168
    %v3822 = vunpack.c.0.s8 %v3821
    %v3823 = vlaneseq
    %v3824 = vshrl.u32 %v3823, 7
    %v3825 = vsub.s32 %v3822, %v3824
    %v3826 = vrot.slane %v3818, %v3825
    %v3828 = vunpack.c.l.s4 1966171168
    %v3829 = vunpack.c.0.s8 %v3828
    %v3830 = vlaneseq
    %v3831 = vshrl.u32 %v3830, 7
    %v3832 = vsub.s32 %v3829, %v3831
    %v3833 = vrot.slane %v3819, %v3832
    %3836 = vmatprep.subr.bf16.mxu0 %v3165
    %3837 = vmatpush1.bf16.msra.mxu0 %v3164
    %3838 = vmatprep.subr.bf16.mxu0 %v3167
    %3839 = vmatpush1.bf16.msra.mxu0 %v3166
    %3840 = vmatprep.subr.bf16.mxu0 %v3169
    %3841 = vmatpush1.bf16.msra.mxu0 %v3168
    %3842 = vmatprep.subr.bf16.mxu0 %v3171
    %3843 = vmatpush1.bf16.msra.mxu0 %v3170
    %3844 = vmatprep.subr.bf16.mxu0 %v3173
    %3845 = vmatpush1.bf16.msra.mxu0 %v3172
    %3846 = vmatprep.subr.bf16.mxu0 %v3175
    %3847 = vmatpush1.bf16.msra.mxu0 %v3174
    %3848 = vmatprep.subr.bf16.mxu0 %v3177
    %3849 = vmatpush1.bf16.msra.mxu0 %v3176
    %3850 = vmatprep.subr.bf16.mxu0 %v3179
    %3851 = vmatpush1.bf16.msra.mxu0 %v3178
    %3852 = vmatprep.subr.bf16.mxu0 %v3181
    %3853 = vmatpush1.bf16.msra.mxu0 %v3180
    %3854 = vmatprep.subr.bf16.mxu0 %v3183
    %3855 = vmatpush1.bf16.msra.mxu0 %v3182
    %3856 = vmatprep.subr.bf16.mxu0 %v3185
    %3857 = vmatpush1.bf16.msra.mxu0 %v3184
    %3858 = vmatprep.subr.bf16.mxu0 %v3187
    %3859 = vmatpush1.bf16.msra.mxu0 %v3186
    %3860 = vmatprep.subr.bf16.mxu0 %v3189
    %3861 = vmatpush1.bf16.msra.mxu0 %v3188
    %3862 = vmatprep.subr.bf16.mxu0 %v3191
    %3863 = vmatpush1.bf16.msra.mxu0 %v3190
    %3864 = vmatprep.subr.bf16.mxu0 %v3193
    %3865 = vmatpush1.bf16.msra.mxu0 %v3192
    %3866 = vmatprep.subr.bf16.mxu0 %v3195
    %3867 = vmatpush1.bf16.msra.mxu0 %v3194
    %3868 = vmatprep.mubr.bf16.mxu0 %v3833
    %3869 = vmatmul.mubr.bf16.gmra.mrb[0].mxu0 %v3826
    %v3870 = vpop.f32.mrb[0].mxu0
    %v3871 = vadd.f32 0.0, %v3870
    %v3872 = vpop.f32.mrb[0].mxu0
    %v3873 = vadd.f32 0.0, %v3872
    %v3874 = vpop.f32.mrb[0].mxu0
    %v3875 = vpop.f32.mrb[0].mxu0
    %3876 = vdwg.mxu0
    %v3877 = vadd.f32 %v3803, %v3871
    %v3878 = vadd.f32 %v3805, %v3873
    %v3879 = vadd.f32 %v3877, %v3499
    %v3880 = vadd.f32 %v3878, %v3503
    %v3881 = vld [vmem:[%s10] sm:$0x3]
    %v3882 = vld [vmem:[%s10 + $0x2] sm:$0x3]
    %v3883 = vld [vmem:[%s11] sm:$0x3]
    %v3884 = vld [vmem:[%s11 + $0x2] sm:$0x3]
    %v3885 = vsel %vm814, %v3506, 0.0
    %v3886 = vsel %vm814, %v3507, 0.0
    %v3887 = vadd.f32 %v3885, %v3886
    %3888 = vadd.xlane.f32.xlu0 %v3887
    %v3889 = vpop.xlane.xlu0 %3888
    %v3890 = vsel %vm814, %v3879, 0.0
    %v3891 = vsel %vm814, %v3880, 0.0
    %v3892 = vadd.f32 %v3890, %v3891
    %3893 = vadd.xlane.f32.xlu0 %v3892
    %v3894 = vpop.xlane.xlu0 %3893
    %v3895 = vsel %vm814, %v3889, 0.0
    %v3896 = vsel %vm814, %v3894, 0.0
    %v3897 = vadd.f32 %v3895, %v3896
    %v3898 = vmul.f32 %v3897, 0.001953125
    %v3899 = vsub.f32 %v3506, %v3898
    %v3900 = vsub.f32 %v3507, %v3898
    %v3901 = vsub.f32 %v3879, %v3898
    %v3902 = vsub.f32 %v3880, %v3898
    %v3903 = vmul.f32 %v3899, %v3899
    %v3904 = vmul.f32 %v3900, %v3900
    %v3905 = vmul.f32 %v3901, %v3901
    %v3906 = vmul.f32 %v3902, %v3902
    %v3907 = vsel %vm814, %v3903, 0.0
    %v3908 = vsel %vm814, %v3904, 0.0
    %v3909 = vadd.f32 %v3907, %v3908
    %3910 = vadd.xlane.f32.xlu0 %v3909
    %v3911 = vpop.xlane.xlu0 %3910
    %v3912 = vsel %vm814, %v3905, 0.0
    %v3913 = vsel %vm814, %v3906, 0.0
    %v3914 = vadd.f32 %v3912, %v3913
    %3915 = vadd.xlane.f32.xlu0 %v3914
    %v3916 = vpop.xlane.xlu0 %3915
    %v3917 = vsel %vm814, %v3911, 0.0
    %v3918 = vsel %vm814, %v3916, 0.0
    %v3919 = vadd.f32 %v3917, %v3918
    %v3920 = vmul.f32 %v3919, 0.001953125
    %v3921 = vadd.f32 %v3920, 1e-05
    %v3922 = vrsqrt.pop %v3921
    %v3923 = vmul.f32 %v3899, %v3922
    %v3924 = vmul.f32 %v3900, %v3922
    %v3925 = vmul.f32 %v3901, %v3922
    %v3926 = vmul.f32 %v3902, %v3922
    %v3929 = vlaneseq
    %v3930 = vshrl.u32 %v3929, 7
    %v3931 = vsub.s32 0, %v3930
    %v3932 = vrot.slane %v3881, %v3931
    %v3933 = vlaneseq
    %v3934 = vshrl.u32 %v3933, 7
    %v3935 = vsub.s32 1, %v3934
    %v3936 = vrot.slane %v3881, %v3935
    %v3937 = vlaneseq
    %v3938 = vshrl.u32 %v3937, 7
    %v3939 = vsub.s32 0, %v3938
    %v3940 = vrot.slane %v3882, %v3939
    %v3941 = vlaneseq
    %v3942 = vshrl.u32 %v3941, 7
    %v3943 = vsub.s32 1, %v3942
    %v3944 = vrot.slane %v3882, %v3943
    %v3949 = vmul.f32 %v3923, %v3932
    %v3950 = vmul.f32 %v3924, %v3936
    %v3951 = vmul.f32 %v3925, %v3940
    %v3952 = vmul.f32 %v3926, %v3944
    %v3955 = vlaneseq
    %v3956 = vshrl.u32 %v3955, 7
    %v3957 = vsub.s32 0, %v3956
    %v3958 = vrot.slane %v3883, %v3957
    %v3959 = vlaneseq
    %v3960 = vshrl.u32 %v3959, 7
    %v3961 = vsub.s32 1, %v3960
    %v3962 = vrot.slane %v3883, %v3961
    %v3963 = vlaneseq
    %v3964 = vshrl.u32 %v3963, 7
    %v3965 = vsub.s32 0, %v3964
    %v3966 = vrot.slane %v3884, %v3965
    %v3967 = vlaneseq
    %v3968 = vshrl.u32 %v3967, 7
    %v3969 = vsub.s32 1, %v3968
    %v3970 = vrot.slane %v3884, %v3969
    %v3975 = vadd.f32 %v3949, %v3958
    %v3976 = vadd.f32 %v3950, %v3962
    %v3977 = vadd.f32 %v3951, %v3966
    %v3978 = vadd.f32 %v3952, %v3970
    %vm3979 = vcmp.ge.f32.partialorder %v3975, 0.0
    %vm3980 = vcmp.ge.f32.partialorder %v3976, 0.0
    %vm3981 = vcmp.ge.f32.partialorder %v3977, 0.0
    %vm3982 = vcmp.ge.f32.partialorder %v3978, 0.0
    %v3983 = vmul.f32 %v3975, 0.01
    %v3984 = vmul.f32 %v3976, 0.01
    %v3985 = vmul.f32 %v3977, 0.01
    %v3986 = vmul.f32 %v3978, 0.01
    %v3987 = vsel %vm3979, %v3975, %v3983
    %v3988 = vsel %vm3980, %v3976, %v3984
    %v3989 = vsel %vm3981, %v3977, %v3985
    %v3990 = vsel %vm3982, %v3978, %v3986
    %v3991 = vpack.c.bf16 %v3987, %v3987
    %v3992 = vpack.c.bf16 %v3988, %v3988
    %v3993 = vpack.c.bf16 %v3989, %v3989
    %v3994 = vpack.c.bf16 %v3990, %v3990
    %v3995 = vld [vmem:[%s12] sm:$0xf]
    %v3996 = vld [vmem:[%s12 + $0x4] sm:$0xf]
    %v3997 = vld [vmem:[%s12 + $0x8] sm:$0xf]
    %v3998 = vld [vmem:[%s12 + $0xc] sm:$0xf]
    %v3999 = vld [vmem:[%s12 + $0x10] sm:$0xf]
    %v4000 = vld [vmem:[%s12 + $0x14] sm:$0xf]
    %v4001 = vld [vmem:[%s12 + $0x18] sm:$0xf]
    %v4002 = vld [vmem:[%s12 + $0x1c] sm:$0xf]
    %v4003 = vld [vmem:[%s12 + $0x20] sm:$0xf]
    %v4004 = vld [vmem:[%s12 + $0x24] sm:$0xf]
    %v4005 = vld [vmem:[%s12 + $0x28] sm:$0xf]
    %v4006 = vld [vmem:[%s12 + $0x2c] sm:$0xf]
    %v4007 = vld [vmem:[%s12 + $0x30] sm:$0xf]
    %v4008 = vld [vmem:[%s12 + $0x34] sm:$0xf]
    %v4009 = vld [vmem:[%s12 + $0x38] sm:$0xf]
    %v4010 = vld [vmem:[%s12 + $0x3c] sm:$0xf]
    %v4011 = vld [vmem:[%s12 + $0x40] sm:$0xf]
    %v4012 = vld [vmem:[%s12 + $0x44] sm:$0xf]
    %v4013 = vld [vmem:[%s12 + $0x48] sm:$0xf]
    %v4014 = vld [vmem:[%s12 + $0x4c] sm:$0xf]
    %v4015 = vld [vmem:[%s12 + $0x50] sm:$0xf]
    %v4016 = vld [vmem:[%s12 + $0x54] sm:$0xf]
    %v4017 = vld [vmem:[%s12 + $0x58] sm:$0xf]
    %v4018 = vld [vmem:[%s12 + $0x5c] sm:$0xf]
    %v4019 = vld [vmem:[%s12 + $0x60] sm:$0xf]
    %v4020 = vld [vmem:[%s12 + $0x64] sm:$0xf]
    %v4021 = vld [vmem:[%s12 + $0x68] sm:$0xf]
    %v4022 = vld [vmem:[%s12 + $0x6c] sm:$0xf]
    %v4023 = vld [vmem:[%s12 + $0x70] sm:$0xf]
    %v4024 = vld [vmem:[%s12 + $0x74] sm:$0xf]
    %v4025 = vld [vmem:[%s12 + $0x78] sm:$0xf]
    %v4026 = vld [vmem:[%s12 + $0x7c] sm:$0xf]
    %v4027 = vld [vmem:[%s12 + $0x80] sm:$0xf]
    %v4028 = vld [vmem:[%s12 + $0x84] sm:$0xf]
    %v4029 = vld [vmem:[%s12 + $0x88] sm:$0xf]
    %v4030 = vld [vmem:[%s12 + $0x8c] sm:$0xf]
    %v4031 = vld [vmem:[%s12 + $0x90] sm:$0xf]
    %v4032 = vld [vmem:[%s12 + $0x94] sm:$0xf]
    %v4033 = vld [vmem:[%s12 + $0x98] sm:$0xf]
    %v4034 = vld [vmem:[%s12 + $0x9c] sm:$0xf]
    %v4035 = vld [vmem:[%s12 + $0xa0] sm:$0xf]
    %v4036 = vld [vmem:[%s12 + $0xa4] sm:$0xf]
    %v4037 = vld [vmem:[%s12 + $0xa8] sm:$0xf]
    %v4038 = vld [vmem:[%s12 + $0xac] sm:$0xf]
    %v4039 = vld [vmem:[%s12 + $0xb0] sm:$0xf]
    %v4040 = vld [vmem:[%s12 + $0xb4] sm:$0xf]
    %v4041 = vld [vmem:[%s12 + $0xb8] sm:$0xf]
    %v4042 = vld [vmem:[%s12 + $0xbc] sm:$0xf]
    %v4043 = vld [vmem:[%s12 + $0xc0] sm:$0xf]
    %v4044 = vld [vmem:[%s12 + $0xc4] sm:$0xf]
    %v4045 = vld [vmem:[%s12 + $0xc8] sm:$0xf]
    %v4046 = vld [vmem:[%s12 + $0xcc] sm:$0xf]
    %v4047 = vld [vmem:[%s12 + $0xd0] sm:$0xf]
    %v4048 = vld [vmem:[%s12 + $0xd4] sm:$0xf]
    %v4049 = vld [vmem:[%s12 + $0xd8] sm:$0xf]
    %v4050 = vld [vmem:[%s12 + $0xdc] sm:$0xf]
    %v4051 = vld [vmem:[%s12 + $0xe0] sm:$0xf]
    %v4052 = vld [vmem:[%s12 + $0xe4] sm:$0xf]
    %v4053 = vld [vmem:[%s12 + $0xe8] sm:$0xf]
    %v4054 = vld [vmem:[%s12 + $0xec] sm:$0xf]
    %v4055 = vld [vmem:[%s12 + $0xf0] sm:$0xf]
    %v4056 = vld [vmem:[%s12 + $0xf4] sm:$0xf]
    %v4057 = vld [vmem:[%s12 + $0xf8] sm:$0xf]
    %v4058 = vld [vmem:[%s12 + $0xfc] sm:$0xf]
    %v4091 = vunpack.c.l.b16 %v4027
    %v4092 = vunpack.c.l.b16 %v4028
    %v4093 = vunpack.c.l.b16 %v4029
    %v4094 = vunpack.c.l.b16 %v4030
    %v4095 = vunpack.c.l.b16 %v4031
    %v4096 = vunpack.c.l.b16 %v4032
    %v4097 = vunpack.c.l.b16 %v4033
    %v4098 = vunpack.c.l.b16 %v4034
    %v4099 = vunpack.c.l.b16 %v4035
    %v4100 = vunpack.c.l.b16 %v4036
    %v4101 = vunpack.c.l.b16 %v4037
    %v4102 = vunpack.c.l.b16 %v4038
    %v4103 = vunpack.c.l.b16 %v4039
    %v4104 = vunpack.c.l.b16 %v4040
    %v4105 = vunpack.c.l.b16 %v4041
    %v4106 = vunpack.c.l.b16 %v4042
    %v4107 = vunpack.c.l.b16 %v4043
    %v4108 = vunpack.c.l.b16 %v4044
    %v4109 = vunpack.c.l.b16 %v4045
    %v4110 = vunpack.c.l.b16 %v4046
    %v4111 = vunpack.c.l.b16 %v4047
    %v4112 = vunpack.c.l.b16 %v4048
    %v4113 = vunpack.c.l.b16 %v4049
    %v4114 = vunpack.c.l.b16 %v4050
    %v4115 = vunpack.c.l.b16 %v4051
    %v4116 = vunpack.c.l.b16 %v4052
    %v4117 = vunpack.c.l.b16 %v4053
    %v4118 = vunpack.c.l.b16 %v4054
    %v4119 = vunpack.c.l.b16 %v4055
    %v4120 = vunpack.c.l.b16 %v4056
    %v4121 = vunpack.c.l.b16 %v4057
    %v4122 = vunpack.c.l.b16 %v4058
    %v4123 = vpack.c.b16 %v4092, %v4091
    %v4124 = vpack.c.b16 %v4094, %v4093
    %v4125 = vpack.c.b16 %v4096, %v4095
    %v4126 = vpack.c.b16 %v4098, %v4097
    %v4127 = vpack.c.b16 %v4100, %v4099
    %v4128 = vpack.c.b16 %v4102, %v4101
    %v4129 = vpack.c.b16 %v4104, %v4103
    %v4130 = vpack.c.b16 %v4106, %v4105
    %v4131 = vpack.c.b16 %v4108, %v4107
    %v4132 = vpack.c.b16 %v4110, %v4109
    %v4133 = vpack.c.b16 %v4112, %v4111
    %v4134 = vpack.c.b16 %v4114, %v4113
    %v4135 = vpack.c.b16 %v4116, %v4115
    %v4136 = vpack.c.b16 %v4118, %v4117
    %v4137 = vpack.c.b16 %v4120, %v4119
    %v4138 = vpack.c.b16 %v4122, %v4121
    %4155 = vmatprep.subr.bf16.mxu0 0
    %4156 = vmatpush1.bf16.msra.mxu0 %v4123
    %4157 = vmatprep.subr.bf16.mxu0 0
    %4158 = vmatpush1.bf16.msra.mxu0 %v4124
    %4159 = vmatprep.subr.bf16.mxu0 0
    %4160 = vmatpush1.bf16.msra.mxu0 %v4125
    %4161 = vmatprep.subr.bf16.mxu0 0
    %4162 = vmatpush1.bf16.msra.mxu0 %v4126
    %4163 = vmatprep.subr.bf16.mxu0 0
    %4164 = vmatpush1.bf16.msra.mxu0 %v4127
    %4165 = vmatprep.subr.bf16.mxu0 0
    %4166 = vmatpush1.bf16.msra.mxu0 %v4128
    %4167 = vmatprep.subr.bf16.mxu0 0
    %4168 = vmatpush1.bf16.msra.mxu0 %v4129
    %4169 = vmatprep.subr.bf16.mxu0 0
    %4170 = vmatpush1.bf16.msra.mxu0 %v4130
    %4171 = vmatprep.subr.bf16.mxu0 0
    %4172 = vmatpush1.bf16.msra.mxu0 %v4131
    %4173 = vmatprep.subr.bf16.mxu0 0
    %4174 = vmatpush1.bf16.msra.mxu0 %v4132
    %4175 = vmatprep.subr.bf16.mxu0 0
    %4176 = vmatpush1.bf16.msra.mxu0 %v4133
    %4177 = vmatprep.subr.bf16.mxu0 0
    %4178 = vmatpush1.bf16.msra.mxu0 %v4134
    %4179 = vmatprep.subr.bf16.mxu0 0
    %4180 = vmatpush1.bf16.msra.mxu0 %v4135
    %4181 = vmatprep.subr.bf16.mxu0 0
    %4182 = vmatpush1.bf16.msra.mxu0 %v4136
    %4183 = vmatprep.subr.bf16.mxu0 0
    %4184 = vmatpush1.bf16.msra.mxu0 %v4137
    %4185 = vmatprep.subr.bf16.mxu0 0
    %4186 = vmatpush1.bf16.msra.mxu0 %v4138
    %4187 = vmatprep.mubr.bf16.mxu0 %v3994
    %4188 = vmatmul.mubr.bf16.gmra.mrb[0].mxu0 %v3993
    %v4189 = vpop.f32.mrb[0].mxu0
    %v4190 = vadd.f32 0.0, %v4189
    %v4191 = vpop.f32.mrb[0].mxu0
    %v4192 = vpop.f32.mrb[0].mxu0
    %v4193 = vpop.f32.mrb[0].mxu0
    %4194 = vdwg.mxu0
    %v4227 = vunpack.c.l.b16 %v3995
    %v4228 = vunpack.c.l.b16 %v3996
    %v4229 = vunpack.c.l.b16 %v3997
    %v4230 = vunpack.c.l.b16 %v3998
    %v4231 = vunpack.c.l.b16 %v3999
    %v4232 = vunpack.c.l.b16 %v4000
    %v4233 = vunpack.c.l.b16 %v4001
    %v4234 = vunpack.c.l.b16 %v4002
    %v4235 = vunpack.c.l.b16 %v4003
    %v4236 = vunpack.c.l.b16 %v4004
    %v4237 = vunpack.c.l.b16 %v4005
    %v4238 = vunpack.c.l.b16 %v4006
    %v4239 = vunpack.c.l.b16 %v4007
    %v4240 = vunpack.c.l.b16 %v4008
    %v4241 = vunpack.c.l.b16 %v4009
    %v4242 = vunpack.c.l.b16 %v4010
    %v4243 = vunpack.c.l.b16 %v4011
    %v4244 = vunpack.c.l.b16 %v4012
    %v4245 = vunpack.c.l.b16 %v4013
    %v4246 = vunpack.c.l.b16 %v4014
    %v4247 = vunpack.c.l.b16 %v4015
    %v4248 = vunpack.c.l.b16 %v4016
    %v4249 = vunpack.c.l.b16 %v4017
    %v4250 = vunpack.c.l.b16 %v4018
    %v4251 = vunpack.c.l.b16 %v4019
    %v4252 = vunpack.c.l.b16 %v4020
    %v4253 = vunpack.c.l.b16 %v4021
    %v4254 = vunpack.c.l.b16 %v4022
    %v4255 = vunpack.c.l.b16 %v4023
    %v4256 = vunpack.c.l.b16 %v4024
    %v4257 = vunpack.c.l.b16 %v4025
    %v4258 = vunpack.c.l.b16 %v4026
    %v4259 = vpack.c.b16 %v4228, %v4227
    %v4260 = vpack.c.b16 %v4230, %v4229
    %v4261 = vpack.c.b16 %v4232, %v4231
    %v4262 = vpack.c.b16 %v4234, %v4233
    %v4263 = vpack.c.b16 %v4236, %v4235
    %v4264 = vpack.c.b16 %v4238, %v4237
    %v4265 = vpack.c.b16 %v4240, %v4239
    %v4266 = vpack.c.b16 %v4242, %v4241
    %v4267 = vpack.c.b16 %v4244, %v4243
    %v4268 = vpack.c.b16 %v4246, %v4245
    %v4269 = vpack.c.b16 %v4248, %v4247
    %v4270 = vpack.c.b16 %v4250, %v4249
    %v4271 = vpack.c.b16 %v4252, %v4251
    %v4272 = vpack.c.b16 %v4254, %v4253
    %v4273 = vpack.c.b16 %v4256, %v4255
    %v4274 = vpack.c.b16 %v4258, %v4257
    %4291 = vmatprep.subr.bf16.mxu0 0
    %4292 = vmatpush1.bf16.msra.mxu0 %v4259
    %4293 = vmatprep.subr.bf16.mxu0 0
    %4294 = vmatpush1.bf16.msra.mxu0 %v4260
    %4295 = vmatprep.subr.bf16.mxu0 0
    %4296 = vmatpush1.bf16.msra.mxu0 %v4261
    %4297 = vmatprep.subr.bf16.mxu0 0
    %4298 = vmatpush1.bf16.msra.mxu0 %v4262
    %4299 = vmatprep.subr.bf16.mxu0 0
    %4300 = vmatpush1.bf16.msra.mxu0 %v4263
    %4301 = vmatprep.subr.bf16.mxu0 0
    %4302 = vmatpush1.bf16.msra.mxu0 %v4264
    %4303 = vmatprep.subr.bf16.mxu0 0
    %4304 = vmatpush1.bf16.msra.mxu0 %v4265
    %4305 = vmatprep.subr.bf16.mxu0 0
    %4306 = vmatpush1.bf16.msra.mxu0 %v4266
    %4307 = vmatprep.subr.bf16.mxu0 0
    %4308 = vmatpush1.bf16.msra.mxu0 %v4267
    %4309 = vmatprep.subr.bf16.mxu0 0
    %4310 = vmatpush1.bf16.msra.mxu0 %v4268
    %4311 = vmatprep.subr.bf16.mxu0 0
    %4312 = vmatpush1.bf16.msra.mxu0 %v4269
    %4313 = vmatprep.subr.bf16.mxu0 0
    %4314 = vmatpush1.bf16.msra.mxu0 %v4270
    %4315 = vmatprep.subr.bf16.mxu0 0
    %4316 = vmatpush1.bf16.msra.mxu0 %v4271
    %4317 = vmatprep.subr.bf16.mxu0 0
    %4318 = vmatpush1.bf16.msra.mxu0 %v4272
    %4319 = vmatprep.subr.bf16.mxu0 0
    %4320 = vmatpush1.bf16.msra.mxu0 %v4273
    %4321 = vmatprep.subr.bf16.mxu0 0
    %4322 = vmatpush1.bf16.msra.mxu0 %v4274
    %4323 = vmatprep.mubr.bf16.mxu0 %v3992
    %4324 = vmatmul.mubr.bf16.gmra.mrb[0].mxu0 %v3991
    %v4325 = vpop.f32.mrb[0].mxu0
    %v4326 = vadd.f32 %v4190, %v4325
    %v4327 = vpop.f32.mrb[0].mxu0
    %v4328 = vpop.f32.mrb[0].mxu0
    %v4329 = vpop.f32.mrb[0].mxu0
    %4330 = vdwg.mxu0
    %v4331 = vld [vmem:[%s13] sm:$0x1]
    %v4333 = vlaneseq
    %v4334 = vshrl.u32 %v4333, 7
    %v4335 = vsub.s32 0, %v4334
    %v4336 = vrot.slane %v4331, %v4335
    %v4338 = vadd.f32 %v4326, %v4336
    %v4339 = vlaneseq
    %v4340 = vand.u32 %v4339, 127
    %vm4341 = vcmp.lt.s32.totalorder %v4340, 8
    %v4342 = vmax.f32 %v4338, 0.0
    %vm4343 = vcmp.ne.f32.partialorder %v4338, %v4338
    %v4344 = vadd.f32 %v4338, 0.0
    %v4345 = vand.u32 2147483647, %v4338
    %v4346 = vsub.f32 0.0, %v4345
    %v4347 = vmul.f32 %v4346, 1.442695
    %v4348 = vpow.pop %v4347
    %v4349 = vadd.f32 %v4348, 1.0
    %v4350 = vlog2.pop %v4349
    %v4351 = vmul.f32 %v4350, 0.6931472
    %v4352 = vmul.f32 -0.5, %v4348
    %v4353 = vadd.f32 %v4352, 1.0
    %v4354 = vmul.f32 %v4353, %v4348
    %v4355 = vand.u32 2147483647, %v4348
    %vm4356 = vcmp.lt.f32.partialorder %v4355, 0.0004427343
    %v4357 = vsel %vm4356, %v4354, %v4351
    %v4358 = vadd.f32 %v4342, %v4357
    %v4359 = vsel %vm4343, %v4344, %v4358
    %v4360 = vsel %vm4341, %v4338, %v4359
    %4361 = vst [vmem:[%s14] sm:$0x3] %v4360
    // Predicated region
    $region62: #{image_encoder_forward.1} parent=1 // pred_check
      _
    $region63: #{image_encoder_forward.1} parent=1 // pred_check_branch
      %4363 = sbr.rel (0) target = $region65
    $region64: #{image_encoder_forward.1} parent=1 // pred_region
      _
    $region65: #{image_encoder_forward.1} parent=1 // pred_fallthru
      _
    // Predicated region
    $region66: #{image_encoder_forward.1} parent=1 // pred_check
      _
    $region67: #{image_encoder_forward.1} parent=1 // pred_check_branch
      %4365 = sbr.rel (0) target = $region69
    $region68: #{image_encoder_forward.1} parent=1 // pred_region
      _
    $region69: #{image_encoder_forward.1} parent=1 // pred_fallthru
      _
    %4366 = vsyncpa [#allocation5], 1

</llo_original>
